<compile_context>
chip_gen: v7x
topology: tpu7x:2x2x1
jax: 0.10.0
libtpu: 0.0.40
codegen_flags: <defaults>
</compile_context>

<pallas_src>
import jax
import jax.numpy as jnp
from jax.experimental import pallas as pl
from jax.experimental.pallas import tpu as pltpu

LANE = 128
SUBLANE = 8


def _round_up(x, m):
    return ((x + m - 1) // m) * m


def _pad2d(a, rows, cols):
    r, c = a.shape
    return jnp.pad(a, ((0, rows - r), (0, cols - c)))


def _num_tensorcores():
    """Best-effort TensorCore count of device 0 (1 on v5e/v6e, 2 on v7x)."""
    try:
        dev = jax.devices()[0]
        return max(1, int(getattr(dev, "num_cores", 1)))
    except Exception:
        return 1


# ----------------------------------------------------------------------------
# Fused kernel: all MFVI layers in one body (weights resident in VMEM)
# ----------------------------------------------------------------------------
def _make_fused_kernel(num_layers, relu_flags):
    def kernel(*refs):
        x_ref = refs[0]
        layer_refs = refs[1: 1 + 4 * num_layers]
        eps_refs = refs[1 + 4 * num_layers: 1 + 5 * num_layers]
        out_ref = refs[1 + 5 * num_layers]

        h = x_ref[...].astype(jnp.float32)              # (block_m, in_pad)
        for l in range(num_layers):
            wm_ref, wv_ref, bm_ref, bv_ref = layer_refs[4 * l: 4 * l + 4]
            cdt = wm_ref.dtype                           # bf16 hot path / f32 verify
            # Mean path: x @ W_m + b_m     (MXU, f32 accumulate)
            act_mu = jnp.dot(h.astype(cdt), wm_ref[...],
                             preferred_element_type=jnp.float32) + bm_ref[...]
            # Variance path: (x*x) @ exp(W_logv) + (exp(b_logv) + 1e-16)
            # exp() is precomputed outside the kernel; 1e-16 folded into b_var.
            act_var = jnp.dot((h * h).astype(cdt), wv_ref[...],
                              preferred_element_type=jnp.float32) + bv_ref[...]
            act = act_mu + jnp.sqrt(act_var) * eps_refs[l][...]
            if relu_flags[l]:
                act = jnp.maximum(act, jnp.float32(0.0))
            h = act
        out_ref[...] = h.astype(out_ref.dtype)

    return kernel


# ----------------------------------------------------------------------------
# Parameter prep: hoist exp() out of the hot path, pad to 128 lanes, cast to bf16
# ----------------------------------------------------------------------------
def prepare_fused_params(layers, compute_dtype=jnp.bfloat16):
    """layers: list of dicts {W_m (in,out), W_logv, b_m (1,out), b_logv (1,out)}.

    Returns padded params with W_var = exp(W_logv), b_var = exp(b_logv) + 1e-16
    (computed once in f32). W_m / W_var are stored in `compute_dtype` (bf16 by
    default -> native MXU input, half the VMEM). Biases stay f32 (added after the
    f32 accumulate). Zero padding keeps the math exact.
    """
    padded = []
    for p in layers:
        in_f, out_f = p["W_m"].shape
        in_p, out_p = _round_up(in_f, LANE), _round_up(out_f, LANE)
        W_m = _pad2d(p["W_m"].astype(jnp.float32), in_p, out_p).astype(compute_dtype)
        W_var = _pad2d(jnp.exp(p["W_logv"].astype(jnp.float32)),
                       in_p, out_p).astype(compute_dtype)
        b_m = _pad2d(p["b_m"].astype(jnp.float32).reshape(1, -1), 1, out_p)
        b_var = _pad2d(jnp.exp(p["b_logv"].astype(jnp.float32)).reshape(1, -1)
                       + jnp.float32(1e-16), 1, out_p)
        padded.append({"W_m": W_m, "W_var": W_var, "b_m": b_m, "b_var": b_var,
                       "in_features": in_f, "out_features": out_f})
    return padded


# ----------------------------------------------------------------------------
# Fused forward (single pallas_call for the whole network)
# ----------------------------------------------------------------------------
def mfvi_fused_forward(padded_layers, x, eps_list, *, block_m=None,
                       num_row_blocks=None):
    """x: (M, in_features); eps_list: one (M, out_l) N(0,1) array per layer."""
    M, _ = x.shape
    num_layers = len(padded_layers)
    assert len(eps_list) == num_layers
    in_p = padded_layers[0]["W_m"].shape[0]
    out_p_last = padded_layers[-1]["W_m"].shape[1]
    out_f_last = padded_layers[-1]["out_features"]

    # One grid block per TensorCore (grid is a sequential loop on one TC, so
    # extra blocks are pure per-step overhead on v5e/v6e; 2 parallel blocks on
    # dual-TC chips). Cap block_m so huge M still fits VMEM.
    M_su = _round_up(M, SUBLANE)
    if block_m is None:
        nb = num_row_blocks if num_row_blocks is not None else _num_tensorcores()
        block_m = min(_round_up(pl.cdiv(M_su, nb), SUBLANE), 1024)
    block_m = _round_up(min(block_m, M_su), SUBLANE)
    M_p = _round_up(M_su, block_m)
    grid = (M_p // block_m,)

    x_p = _pad2d(x.astype(jnp.float32), M_p, in_p)

    relu_flags = tuple([True] * (num_layers - 1) + [False])
    kernel = _make_fused_kernel(num_layers, relu_flags)

    row_map = lambda i: (i, 0)
    const_map = lambda i: (0, 0)   # constant block -> weights stay resident

    in_specs = [pl.BlockSpec((block_m, in_p), row_map)]
    inputs = [x_p]
    for p in padded_layers:
        ip, op = p["W_m"].shape
        # TODO(synk): for large layer widths add pipeline_mode=pl.Buffered(1) on
        # these constant-index specs (single-buffer resident weights) and/or stream
        # weights over a layer grid axis to stay inside v7x's 64 MiB VMEM.
        in_specs += [
            pl.BlockSpec((ip, op), const_map),   # W_m
            pl.BlockSpec((ip, op), const_map),   # W_var = exp(W_logv)
            pl.BlockSpec((1, op), const_map),    # b_m
            pl.BlockSpec((1, op), const_map),    # b_var = exp(b_logv) + 1e-16
        ]
        inputs += [p["W_m"], p["W_var"], p["b_m"], p["b_var"]]
    for l, p in enumerate(padded_layers):
        op = p["W_m"].shape[1]
        in_specs.append(pl.BlockSpec((block_m, op), row_map))
        inputs.append(_pad2d(eps_list[l].astype(jnp.float32), M_p, op))

    out = pl.pallas_call(
        kernel,
        grid=grid,
        in_specs=in_specs,
        out_specs=pl.BlockSpec((block_m, out_p_last), row_map),
        out_shape=jax.ShapeDtypeStruct((M_p, out_p_last), jnp.float32),
        compiler_params=pltpu.CompilerParams(
            dimension_semantics=("parallel",)),
    )(*inputs)
    return out[:M, :out_f_last]


def mfvi_nn_forward_mc(padded_layers, x, *, key, num_samples, **kwargs):
    """MC sampling: stack samples into the M dimension -> one kernel call."""
    B = x.shape[0]
    M = num_samples * B
    # TODO(synk): x replication could be done in-kernel (constant x block +
    # sublane broadcast) to avoid the tile's HBM traffic at large input dims.
    x_rep = jnp.tile(x, (num_samples, 1))                       # (M, in)
    keys = jax.random.split(key, len(padded_layers))
    eps_list = [jax.random.normal(keys[l], (M, p["out_features"]), jnp.float32)
                for l, p in enumerate(padded_layers)]
    out = mfvi_fused_forward(padded_layers, x_rep, eps_list, **kwargs)
    return out.reshape(num_samples, B, -1)


# ----------------------------------------------------------------------------
# Parameter init (mirrors MFVI_Layer.reset_parameters; weights stored (in,out))
# ----------------------------------------------------------------------------
def init_mfvi_layer(key, in_features, out_features):
    k_w, k_b = jax.random.split(key)
    W_m = 0.1 * jax.random.normal(k_w, (in_features, out_features), jnp.float32)
    b_m = 0.1 * jax.random.normal(k_b, (1, out_features), jnp.float32)
    W_logv = jnp.full((in_features, out_features), -6.0, jnp.float32)
    b_logv = jnp.full((1, out_features), -6.0, jnp.float32)
    return {"W_m": W_m, "b_m": b_m, "W_logv": W_logv, "b_logv": b_logv}


def init_mfvi_nn(key, input_size, hidden_sizes, output_size, num_tasks=1,
                 single_head=False):
    sizes = [input_size] + list(hidden_sizes)
    n_heads = 1 if single_head else num_tasks
    keys = jax.random.split(key, len(sizes) - 1 + n_heads)
    shared = [init_mfvi_layer(keys[i], sizes[i], sizes[i + 1])
              for i in range(len(sizes) - 1)]
    heads = [init_mfvi_layer(keys[len(sizes) - 1 + t], sizes[-1], output_size)
             for t in range(n_heads)]
    return {"shared": shared, "heads": heads, "single_head": single_head}


# ----------------------------------------------------------------------------
# Pure-JAX reference (unpadded, same eps) for verification
# ----------------------------------------------------------------------------
def mfvi_nn_reference(layers, x, eps_list):
    h = x
    L = len(layers)
    for l, p in enumerate(layers):
        act_mu = h @ p["W_m"] + p["b_m"]
        act_var = 1e-16 + (h * h) @ jnp.exp(p["W_logv"]) + jnp.exp(p["b_logv"])
        act = act_mu + jnp.sqrt(act_var) * eps_list[l]
        h = jnp.maximum(act, 0.0) if l < L - 1 else act
    return h


if __name__ == "__main__":
    key = jax.random.PRNGKey(0)
    k_params, k_x, k_eps = jax.random.split(key, 3)

    # Logical net: 32 -> [64, 64] -> 16, two task heads; 32 MC samples x batch 8
    # stacked into M=256 rows.
    input_size, hidden_sizes, output_size = 32, [64, 64], 16
    batch, num_samples, task_id = 8, 32, 1
    params = init_mfvi_nn(k_params, input_size, hidden_sizes, output_size,
                          num_tasks=2, single_head=False)
    head = params["heads"][0 if params["single_head"] else task_id]
    layers = params["shared"] + [head]

    x = jax.random.normal(k_x, (batch, input_size), jnp.float32)
    x_rep = jnp.tile(x, (num_samples, 1))                        # (256, 32)
    M = x_rep.shape[0]

    # Shared eps draws (host-side, deterministic) used by both kernel and reference.
    eps_keys = jax.random.split(k_eps, len(layers))
    eps_list = [jax.random.normal(eps_keys[l], (M, layers[l]["W_m"].shape[1]),
                                  jnp.float32)
                for l in range(len(layers))]
    ref = mfvi_nn_reference(layers, x_rep, eps_list)

    # --- exact correctness check: f32 parameters ---
    padded_f32 = prepare_fused_params(layers, compute_dtype=jnp.float32)
    out_f32 = jax.block_until_ready(
        mfvi_fused_forward(padded_f32, x_rep, eps_list))
    assert out_f32.shape == (M, output_size)
    assert jnp.allclose(out_f32, ref, atol=1e-4, rtol=1e-4), "f32 mismatch vs ref"

    # Multi-block grid path (e.g. v7x dual-TC split) must give the same answer.
    out_2blk = jax.block_until_ready(
        mfvi_fused_forward(padded_f32, x_rep, eps_list, num_row_blocks=2))
    assert jnp.allclose(out_2blk, out_f32, atol=1e-5, rtol=1e-5), "grid-split mismatch"

    # --- hot path: bf16 weights on the MXU (looser tolerance) ---
    padded_bf16 = prepare_fused_params(layers)   # bf16 W_m / W_var
    out_bf16 = jax.block_until_ready(
        mfvi_fused_forward(padded_bf16, x_rep, eps_list))
    assert out_bf16.shape == (M, output_size)
    assert bool(jnp.all(jnp.isfinite(out_bf16)))
    assert jnp.allclose(out_bf16, ref, atol=6e-2, rtol=6e-2), "bf16 path off vs ref"

    # --- MC sampling wrapper (deterministic per key) ---
    mc0 = jax.block_until_ready(
        mfvi_nn_forward_mc(padded_bf16, x, key=jax.random.PRNGKey(123),
                           num_samples=num_samples))
    mc1 = jax.block_until_ready(
        mfvi_nn_forward_mc(padded_bf16, x, key=jax.random.PRNGKey(123),
                           num_samples=num_samples))
    mc2 = jax.block_until_ready(
        mfvi_nn_forward_mc(padded_bf16, x, key=jax.random.PRNGKey(777),
                           num_samples=num_samples))
    assert mc0.shape == (num_samples, batch, output_size)
    assert bool(jnp.all(jnp.isfinite(mc0)))
    assert jnp.array_equal(mc0, mc1), "same key should give identical samples"
    assert not jnp.allclose(mc0, mc2), "different keys gave identical samples"

    # TODO(synk): kl_divergence / set_priors are training-time host-side utilities
    # (not part of the forward hot path) and are left as plain JAX if needed.
    # TODO(synk): 256-wide packed mean+var GEMM (block-diagonal weights) is a
    # v6e/v7x-only micro-opt; not applied to keep the kernel uniform across chips.
    print("KERNEL_OK")
</pallas_src>

<mosaic_0001>
module attributes {stable_mosaic.version = 11 : i64} {
  func.func @kernel(%arg0: i32, %arg1: memref<256x128xf32, #tpu.memory_space<vmem>>, %arg2: memref<128x128xf32, #tpu.memory_space<vmem>>, %arg3: memref<128x128xf32, #tpu.memory_space<vmem>>, %arg4: memref<1x128xf32, #tpu.memory_space<vmem>>, %arg5: memref<1x128xf32, #tpu.memory_space<vmem>>, %arg6: memref<128x128xf32, #tpu.memory_space<vmem>>, %arg7: memref<128x128xf32, #tpu.memory_space<vmem>>, %arg8: memref<1x128xf32, #tpu.memory_space<vmem>>, %arg9: memref<1x128xf32, #tpu.memory_space<vmem>>, %arg10: memref<128x128xf32, #tpu.memory_space<vmem>>, %arg11: memref<128x128xf32, #tpu.memory_space<vmem>>, %arg12: memref<1x128xf32, #tpu.memory_space<vmem>>, %arg13: memref<1x128xf32, #tpu.memory_space<vmem>>, %arg14: memref<256x128xf32, #tpu.memory_space<vmem>>, %arg15: memref<256x128xf32, #tpu.memory_space<vmem>>, %arg16: memref<256x128xf32, #tpu.memory_space<vmem>>, %arg17: memref<256x128xf32, #tpu.memory_space<vmem>>) attributes {dimension_semantics = [#tpu.dimension_semantics<parallel>], iteration_bounds = array<i64: 1>, scalar_prefetch = 0 : i64, scratch_operands = 0 : i64, tpu.core_type = #tpu.core_type<tc>, window_params = [{transform_indices = @transform_0, window_bounds = array<i64: 256, 128>}, {pipeline_mode = #tpu.pipeline_mode<synchronous>, transform_indices = @transform_1, window_bounds = array<i64: 128, 128>}, {pipeline_mode = #tpu.pipeline_mode<synchronous>, transform_indices = @transform_2, window_bounds = array<i64: 128, 128>}, {pipeline_mode = #tpu.pipeline_mode<synchronous>, transform_indices = @transform_3, window_bounds = array<i64: 1, 128>}, {pipeline_mode = #tpu.pipeline_mode<synchronous>, transform_indices = @transform_4, window_bounds = array<i64: 1, 128>}, {pipeline_mode = #tpu.pipeline_mode<synchronous>, transform_indices = @transform_5, window_bounds = array<i64: 128, 128>}, {pipeline_mode = #tpu.pipeline_mode<synchronous>, transform_indices = @transform_6, window_bounds = array<i64: 128, 128>}, {pipeline_mode = #tpu.pipeline_mode<synchronous>, transform_indices = @transform_7, window_bounds = array<i64: 1, 128>}, {pipeline_mode = #tpu.pipeline_mode<synchronous>, transform_indices = @transform_8, window_bounds = array<i64: 1, 128>}, {pipeline_mode = #tpu.pipeline_mode<synchronous>, transform_indices = @transform_9, window_bounds = array<i64: 128, 128>}, {pipeline_mode = #tpu.pipeline_mode<synchronous>, transform_indices = @transform_10, window_bounds = array<i64: 128, 128>}, {pipeline_mode = #tpu.pipeline_mode<synchronous>, transform_indices = @transform_11, window_bounds = array<i64: 1, 128>}, {pipeline_mode = #tpu.pipeline_mode<synchronous>, transform_indices = @transform_12, window_bounds = array<i64: 1, 128>}, {transform_indices = @transform_13, window_bounds = array<i64: 256, 128>}, {transform_indices = @transform_14, window_bounds = array<i64: 256, 128>}, {transform_indices = @transform_15, window_bounds = array<i64: 256, 128>}, {transform_indices = @transform_16, window_bounds = array<i64: 256, 128>}]} {
    %c0 = arith.constant 0 : index
    %c0_0 = arith.constant 0 : index
    %0 = vector.load %arg1[%c0, %c0_0] : memref<256x128xf32, #tpu.memory_space<vmem>>, vector<256x128xf32>
    %c0_1 = arith.constant 0 : index
    %c0_2 = arith.constant 0 : index
    %1 = vector.load %arg2[%c0_1, %c0_2] : memref<128x128xf32, #tpu.memory_space<vmem>>, vector<128x128xf32>
    %cst = arith.constant dense<0.000000e+00> : vector<256x128xf32>
    %2 = tpu.matmul %0, %1, %cst {dimension_numbers = #tpu.dot_dimension_numbers<[1], [0], [0], [1], [0, 0, 1, 1], [], []>} : vector<256x128xf32>, vector<128x128xf32>, vector<256x128xf32> -> vector<256x128xf32>
    %c0_3 = arith.constant 0 : index
    %c0_4 = arith.constant 0 : index
    %3 = vector.load %arg4[%c0_3, %c0_4] : memref<1x128xf32, #tpu.memory_space<vmem>>, vector<1x128xf32>
    %4 = vector.broadcast %3 : vector<1x128xf32> to vector<256x128xf32>
    %5 = arith.addf %2, %4 : vector<256x128xf32>
    %6 = arith.mulf %0, %0 : vector<256x128xf32>
    %c0_5 = arith.constant 0 : index
    %c0_6 = arith.constant 0 : index
    %7 = vector.load %arg3[%c0_5, %c0_6] : memref<128x128xf32, #tpu.memory_space<vmem>>, vector<128x128xf32>
    %cst_7 = arith.constant dense<0.000000e+00> : vector<256x128xf32>
    %8 = tpu.matmul %6, %7, %cst_7 {dimension_numbers = #tpu.dot_dimension_numbers<[1], [0], [0], [1], [0, 0, 1, 1], [], []>} : vector<256x128xf32>, vector<128x128xf32>, vector<256x128xf32> -> vector<256x128xf32>
    %c0_8 = arith.constant 0 : index
    %c0_9 = arith.constant 0 : index
    %9 = vector.load %arg5[%c0_8, %c0_9] : memref<1x128xf32, #tpu.memory_space<vmem>>, vector<1x128xf32>
    %10 = vector.broadcast %9 : vector<1x128xf32> to vector<256x128xf32>
    %11 = arith.addf %8, %10 : vector<256x128xf32>
    %12 = math.sqrt %11 : vector<256x128xf32>
    %c0_10 = arith.constant 0 : index
    %c0_11 = arith.constant 0 : index
    %13 = vector.load %arg14[%c0_10, %c0_11] : memref<256x128xf32, #tpu.memory_space<vmem>>, vector<256x128xf32>
    %14 = arith.mulf %12, %13 : vector<256x128xf32>
    %15 = arith.addf %5, %14 : vector<256x128xf32>
    %cst_12 = arith.constant 0.000000e+00 : f32
    %16 = vector.broadcast %cst_12 : f32 to vector<256x128xf32>
    %17 = arith.maximumf %15, %16 : vector<256x128xf32>
    %c0_13 = arith.constant 0 : index
    %c0_14 = arith.constant 0 : index
    %18 = vector.load %arg6[%c0_13, %c0_14] : memref<128x128xf32, #tpu.memory_space<vmem>>, vector<128x128xf32>
    %cst_15 = arith.constant dense<0.000000e+00> : vector<256x128xf32>
    %19 = tpu.matmul %17, %18, %cst_15 {dimension_numbers = #tpu.dot_dimension_numbers<[1], [0], [0], [1], [0, 0, 1, 1], [], []>} : vector<256x128xf32>, vector<128x128xf32>, vector<256x128xf32> -> vector<256x128xf32>
    %c0_16 = arith.constant 0 : index
    %c0_17 = arith.constant 0 : index
    %20 = vector.load %arg8[%c0_16, %c0_17] : memref<1x128xf32, #tpu.memory_space<vmem>>, vector<1x128xf32>
    %21 = vector.broadcast %20 : vector<1x128xf32> to vector<256x128xf32>
    %22 = arith.addf %19, %21 : vector<256x128xf32>
    %23 = arith.mulf %17, %17 : vector<256x128xf32>
    %c0_18 = arith.constant 0 : index
    %c0_19 = arith.constant 0 : index
    %24 = vector.load %arg7[%c0_18, %c0_19] : memref<128x128xf32, #tpu.memory_space<vmem>>, vector<128x128xf32>
    %cst_20 = arith.constant dense<0.000000e+00> : vector<256x128xf32>
    %25 = tpu.matmul %23, %24, %cst_20 {dimension_numbers = #tpu.dot_dimension_numbers<[1], [0], [0], [1], [0, 0, 1, 1], [], []>} : vector<256x128xf32>, vector<128x128xf32>, vector<256x128xf32> -> vector<256x128xf32>
    %c0_21 = arith.constant 0 : index
    %c0_22 = arith.constant 0 : index
    %26 = vector.load %arg9[%c0_21, %c0_22] : memref<1x128xf32, #tpu.memory_space<vmem>>, vector<1x128xf32>
    %27 = vector.broadcast %26 : vector<1x128xf32> to vector<256x128xf32>
    %28 = arith.addf %25, %27 : vector<256x128xf32>
    %29 = math.sqrt %28 : vector<256x128xf32>
    %c0_23 = arith.constant 0 : index
    %c0_24 = arith.constant 0 : index
    %30 = vector.load %arg15[%c0_23, %c0_24] : memref<256x128xf32, #tpu.memory_space<vmem>>, vector<256x128xf32>
    %31 = arith.mulf %29, %30 : vector<256x128xf32>
    %32 = arith.addf %22, %31 : vector<256x128xf32>
    %cst_25 = arith.constant 0.000000e+00 : f32
    %33 = vector.broadcast %cst_25 : f32 to vector<256x128xf32>
    %34 = arith.maximumf %32, %33 : vector<256x128xf32>
    %c0_26 = arith.constant 0 : index
    %c0_27 = arith.constant 0 : index
    %35 = vector.load %arg10[%c0_26, %c0_27] : memref<128x128xf32, #tpu.memory_space<vmem>>, vector<128x128xf32>
    %cst_28 = arith.constant dense<0.000000e+00> : vector<256x128xf32>
    %36 = tpu.matmul %34, %35, %cst_28 {dimension_numbers = #tpu.dot_dimension_numbers<[1], [0], [0], [1], [0, 0, 1, 1], [], []>} : vector<256x128xf32>, vector<128x128xf32>, vector<256x128xf32> -> vector<256x128xf32>
    %c0_29 = arith.constant 0 : index
    %c0_30 = arith.constant 0 : index
    %37 = vector.load %arg12[%c0_29, %c0_30] : memref<1x128xf32, #tpu.memory_space<vmem>>, vector<1x128xf32>
    %38 = vector.broadcast %37 : vector<1x128xf32> to vector<256x128xf32>
    %39 = arith.addf %36, %38 : vector<256x128xf32>
    %40 = arith.mulf %34, %34 : vector<256x128xf32>
    %c0_31 = arith.constant 0 : index
    %c0_32 = arith.constant 0 : index
    %41 = vector.load %arg11[%c0_31, %c0_32] : memref<128x128xf32, #tpu.memory_space<vmem>>, vector<128x128xf32>
    %cst_33 = arith.constant dense<0.000000e+00> : vector<256x128xf32>
    %42 = tpu.matmul %40, %41, %cst_33 {dimension_numbers = #tpu.dot_dimension_numbers<[1], [0], [0], [1], [0, 0, 1, 1], [], []>} : vector<256x128xf32>, vector<128x128xf32>, vector<256x128xf32> -> vector<256x128xf32>
    %c0_34 = arith.constant 0 : index
    %c0_35 = arith.constant 0 : index
    %43 = vector.load %arg13[%c0_34, %c0_35] : memref<1x128xf32, #tpu.memory_space<vmem>>, vector<1x128xf32>
    %44 = vector.broadcast %43 : vector<1x128xf32> to vector<256x128xf32>
    %45 = arith.addf %42, %44 : vector<256x128xf32>
    %46 = math.sqrt %45 : vector<256x128xf32>
    %c0_36 = arith.constant 0 : index
    %c0_37 = arith.constant 0 : index
    %47 = vector.load %arg16[%c0_36, %c0_37] : memref<256x128xf32, #tpu.memory_space<vmem>>, vector<256x128xf32>
    %48 = arith.mulf %46, %47 : vector<256x128xf32>
    %49 = arith.addf %39, %48 : vector<256x128xf32>
    %c0_38 = arith.constant 0 : index
    %c0_39 = arith.constant 0 : index
    %50 = vector.load %arg17[%c0_38, %c0_39] : memref<256x128xf32, #tpu.memory_space<vmem>>, vector<256x128xf32>
    tpu.vector_store %arg17[%c0_38, %c0_39], %49 {strides = array<i32>} : memref<256x128xf32, #tpu.memory_space<vmem>>, vector<256x128xf32>,
    return
  }
  func.func @transform_0(%arg0: i32) -> (i32, i32) {
    %c0_i32 = arith.constant 0 : i32
    %c0_i32_0 = arith.constant 0 : i32
    return %arg0, %c0_i32 : i32, i32
  }
  func.func @transform_1(%arg0: i32) -> (i32, i32) {
    %c0_i32 = arith.constant 0 : i32
    %c0_i32_0 = arith.constant 0 : i32
    %c0_i32_1 = arith.constant 0 : i32
    return %c0_i32, %c0_i32_0 : i32, i32
  }
  func.func @transform_2(%arg0: i32) -> (i32, i32) {
    %c0_i32 = arith.constant 0 : i32
    %c0_i32_0 = arith.constant 0 : i32
    %c0_i32_1 = arith.constant 0 : i32
    return %c0_i32, %c0_i32_0 : i32, i32
  }
  func.func @transform_3(%arg0: i32) -> (i32, i32) {
    %c0_i32 = arith.constant 0 : i32
    %c0_i32_0 = arith.constant 0 : i32
    %c0_i32_1 = arith.constant 0 : i32
    return %c0_i32, %c0_i32_0 : i32, i32
  }
  func.func @transform_4(%arg0: i32) -> (i32, i32) {
    %c0_i32 = arith.constant 0 : i32
    %c0_i32_0 = arith.constant 0 : i32
    %c0_i32_1 = arith.constant 0 : i32
    return %c0_i32, %c0_i32_0 : i32, i32
  }
  func.func @transform_5(%arg0: i32) -> (i32, i32) {
    %c0_i32 = arith.constant 0 : i32
    %c0_i32_0 = arith.constant 0 : i32
    %c0_i32_1 = arith.constant 0 : i32
    return %c0_i32, %c0_i32_0 : i32, i32
  }
  func.func @transform_6(%arg0: i32) -> (i32, i32) {
    %c0_i32 = arith.constant 0 : i32
    %c0_i32_0 = arith.constant 0 : i32
    %c0_i32_1 = arith.constant 0 : i32
    return %c0_i32, %c0_i32_0 : i32, i32
  }
  func.func @transform_7(%arg0: i32) -> (i32, i32) {
    %c0_i32 = arith.constant 0 : i32
    %c0_i32_0 = arith.constant 0 : i32
    %c0_i32_1 = arith.constant 0 : i32
    return %c0_i32, %c0_i32_0 : i32, i32
  }
  func.func @transform_8(%arg0: i32) -> (i32, i32) {
    %c0_i32 = arith.constant 0 : i32
    %c0_i32_0 = arith.constant 0 : i32
    %c0_i32_1 = arith.constant 0 : i32
    return %c0_i32, %c0_i32_0 : i32, i32
  }
  func.func @transform_9(%arg0: i32) -> (i32, i32) {
    %c0_i32 = arith.constant 0 : i32
    %c0_i32_0 = arith.constant 0 : i32
    %c0_i32_1 = arith.constant 0 : i32
    return %c0_i32, %c0_i32_0 : i32, i32
  }
  func.func @transform_10(%arg0: i32) -> (i32, i32) {
    %c0_i32 = arith.constant 0 : i32
    %c0_i32_0 = arith.constant 0 : i32
    %c0_i32_1 = arith.constant 0 : i32
    return %c0_i32, %c0_i32_0 : i32, i32
  }
  func.func @transform_11(%arg0: i32) -> (i32, i32) {
    %c0_i32 = arith.constant 0 : i32
    %c0_i32_0 = arith.constant 0 : i32
    %c0_i32_1 = arith.constant 0 : i32
    return %c0_i32, %c0_i32_0 : i32, i32
  }
  func.func @transform_12(%arg0: i32) -> (i32, i32) {
    %c0_i32 = arith.constant 0 : i32
    %c0_i32_0 = arith.constant 0 : i32
    %c0_i32_1 = arith.constant 0 : i32
    return %c0_i32, %c0_i32_0 : i32, i32
  }
  func.func @transform_13(%arg0: i32) -> (i32, i32) {
    %c0_i32 = arith.constant 0 : i32
    %c0_i32_0 = arith.constant 0 : i32
    return %arg0, %c0_i32 : i32, i32
  }
  func.func @transform_14(%arg0: i32) -> (i32, i32) {
    %c0_i32 = arith.constant 0 : i32
    %c0_i32_0 = arith.constant 0 : i32
    return %arg0, %c0_i32 : i32, i32
  }
  func.func @transform_15(%arg0: i32) -> (i32, i32) {
    %c0_i32 = arith.constant 0 : i32
    %c0_i32_0 = arith.constant 0 : i32
    return %arg0, %c0_i32 : i32, i32
  }
  func.func @transform_16(%arg0: i32) -> (i32, i32) {
    %c0_i32 = arith.constant 0 : i32
    %c0_i32_0 = arith.constant 0 : i32
    return %arg0, %c0_i32 : i32, i32
  }
}

</mosaic_0001>

<llo_original>
// kernel: tpu_custom_call.1
$region0: #{tpu_custom_call.1}
  #allocation0 [shape = 'u32[]', space=smem, size = 0x4, offset = 0x4, fixed_abs, tag = 'smem constant byte address 0x4 - core index']
  #allocation1 [shape = 'u32[144,128]{1,0:T(1,128)}', space=vmem, size = 0x12000, scoped, tag = 'internal scratch']
  %s0 = inlined_call_operand.hbm [shape: f32[256,128], index: 0, kind: input, shape index: {}]
  %s1 = inlined_call_operand.hbm [shape: f32[128,128], index: 1, kind: input, shape index: {}]
  %s2 = inlined_call_operand.hbm [shape: f32[128,128], index: 2, kind: input, shape index: {}]
  %s3 = inlined_call_operand.vmem [shape: f32[1,128], index: 3, kind: input, shape index: {}]
  %s4 = inlined_call_operand.vmem [shape: f32[1,128], index: 4, kind: input, shape index: {}]
  %s5 = inlined_call_operand.hbm [shape: f32[128,128], index: 5, kind: input, shape index: {}]
  %s6 = inlined_call_operand.hbm [shape: f32[128,128], index: 6, kind: input, shape index: {}]
  %s7 = inlined_call_operand.vmem [shape: f32[1,128], index: 7, kind: input, shape index: {}]
  %s8 = inlined_call_operand.vmem [shape: f32[1,128], index: 8, kind: input, shape index: {}]
  %s9 = inlined_call_operand.hbm [shape: f32[128,128], index: 9, kind: input, shape index: {}]
  %s10 = inlined_call_operand.hbm [shape: f32[128,128], index: 10, kind: input, shape index: {}]
  %s11 = inlined_call_operand.vmem [shape: f32[1,128], index: 11, kind: input, shape index: {}]
  %s12 = inlined_call_operand.vmem [shape: f32[1,128], index: 12, kind: input, shape index: {}]
  %s13 = inlined_call_operand.hbm [shape: f32[256,128], index: 13, kind: input, shape index: {}]
  %s14 = inlined_call_operand.hbm [shape: f32[256,128], index: 14, kind: input, shape index: {}]
  %s15 = inlined_call_operand.hbm [shape: f32[256,128], index: 15, kind: input, shape index: {}]
  %s16 = inlined_call_operand.hbm [shape: f32[256,128], index: 16, kind: output, shape index: {}]
  %s17 = sld [smem:[#allocation0]]
  $region114: #{tpu_custom_call.1} parent=0
    _
  %s19 = ssub.s32 1, %s17
  %s20 = scalar_select 0, %s19, %s17
  $region1: #{tpu_custom_call.1} parent=0
    #allocation2 [shape = 'u8[131072]{0}', space=vmem, size = 0x20000, scoped, tag = 'input window, operand 0, single buffered']
    #allocation3 [shape = 's32[1]{0}', space=sflag, size = 0x4, scoped, tag = 'scoped memory for tpu_custom_call.1']
    #allocation4 [shape = 's32[1]{0}', space=sflag, size = 0x4, scoped, tag = 'scoped memory for tpu_custom_call.1']
    #allocation5 [shape = 'u8[65536]{0}', space=vmem, size = 0x10000, scoped, tag = 'input window, operand 1, single buffered']
    #allocation6 [shape = 's32[1]{0}', space=sflag, size = 0x4, scoped, tag = 'scoped memory for tpu_custom_call.1']
    #allocation7 [shape = 'u8[65536]{0}', space=vmem, size = 0x10000, scoped, tag = 'input window, operand 2, single buffered']
    #allocation8 [shape = 'u8[65536]{0}', space=vmem, size = 0x10000, scoped, tag = 'input window, operand 5, single buffered']
    #allocation9 [shape = 's32[1]{0}', space=sflag, size = 0x4, scoped, tag = 'scoped memory for tpu_custom_call.1']
    #allocation10 [shape = 'u8[65536]{0}', space=vmem, size = 0x10000, scoped, tag = 'input window, operand 6, single buffered']
    #allocation11 [shape = 'u8[65536]{0}', space=vmem, size = 0x10000, scoped, tag = 'input window, operand 9, single buffered']
    #allocation12 [shape = 's32[1]{0}', space=sflag, size = 0x4, scoped, tag = 'scoped memory for tpu_custom_call.1']
    #allocation13 [shape = 'u8[65536]{0}', space=vmem, size = 0x10000, scoped, tag = 'input window, operand 10, single buffered']
    #allocation14 [shape = 'u8[131072]{0}', space=vmem, size = 0x20000, scoped, tag = 'input window, operand 13, single buffered']
    #allocation15 [shape = 's32[1]{0}', space=sflag, size = 0x4, scoped, tag = 'scoped memory for tpu_custom_call.1']
    #allocation16 [shape = 'u8[131072]{0}', space=vmem, size = 0x20000, scoped, tag = 'input window, operand 14, single buffered']
    #allocation17 [shape = 'u8[131072]{0}', space=vmem, size = 0x20000, scoped, tag = 'input window, operand 15, single buffered']
    #allocation18 [shape = 's32[1]{0}', space=sflag, size = 0x4, scoped, tag = 'scoped memory for tpu_custom_call.1']
    #allocation19 [shape = 'u8[131072]{0}', space=vmem, size = 0x20000, scoped, tag = 'output window, operand 0, single buffered']
    %21 = vsyncpa [#allocation3], 0
    %22 = vsyncpa [#allocation6], 0
    %23 = vsyncpa [#allocation9], 0
    %24 = vsyncpa [#allocation12], 0
    %25 = vsyncpa [#allocation15], 0
    %26 = vsyncpa [#allocation18], 0
    %27 = vsyncpa [#allocation4], 0
    // Predicated region
    $region2: #{tpu_custom_call.1} parent=1 // pred_check
      _
    $region3: #{tpu_custom_call.1} parent=1 // pred_check_branch
      %29 = sbr.rel (0) target = $region5
    $region4: #{tpu_custom_call.1} parent=1 // pred_region
      %s31 = ssub.s32 4096, 4096
      %32 = vsyncadd [#allocation3], %s31
      %s33 = sshll.u32 [#allocation2], 4
      %s34 = int_to_ptr.vmem [resolvable:$true] %s33
      %39 = dma.hbm_to_vmem [thread:$0]  %s0, 4096, %s34, [#allocation3], 128, 128, 8
    $region5: #{tpu_custom_call.1} parent=1 // pred_fallthru
      _
    // Predicated region
    $region6: #{tpu_custom_call.1} parent=1 // pred_check
      _
    $region7: #{tpu_custom_call.1} parent=1 // pred_check_branch
      %41 = sbr.rel (0) target = $region9
    $region8: #{tpu_custom_call.1} parent=1 // pred_region
      %s43 = ssub.s32 2048, 2048
      %44 = vsyncadd [#allocation6], %s43
      %s45 = sshll.u32 [#allocation5], 4
      %s46 = int_to_ptr.vmem [resolvable:$true] %s45
      %51 = dma.hbm_to_vmem [thread:$0]  %s1, 2048, %s46, [#allocation6], 128, 128, 8
    $region9: #{tpu_custom_call.1} parent=1 // pred_fallthru
      _
    // Predicated region
    $region10: #{tpu_custom_call.1} parent=1 // pred_check
      _
    $region11: #{tpu_custom_call.1} parent=1 // pred_check_branch
      %53 = sbr.rel (0) target = $region13
    $region12: #{tpu_custom_call.1} parent=1 // pred_region
      %s55 = ssub.s32 2048, 2048
      %56 = vsyncadd [#allocation6], %s55
      %s57 = sshll.u32 [#allocation7], 4
      %s58 = int_to_ptr.vmem [resolvable:$true] %s57
      %63 = dma.hbm_to_vmem [thread:$0]  %s2, 2048, %s58, [#allocation6], 128, 128, 8
    $region13: #{tpu_custom_call.1} parent=1 // pred_fallthru
      _
    // Predicated region
    $region14: #{tpu_custom_call.1} parent=1 // pred_check
      _
    $region15: #{tpu_custom_call.1} parent=1 // pred_check_branch
      %65 = sbr.rel (0) target = $region17
    $region16: #{tpu_custom_call.1} parent=1 // pred_region
      _
    $region17: #{tpu_custom_call.1} parent=1 // pred_fallthru
      _
    // Predicated region
    $region18: #{tpu_custom_call.1} parent=1 // pred_check
      _
    $region19: #{tpu_custom_call.1} parent=1 // pred_check_branch
      %67 = sbr.rel (0) target = $region21
    $region20: #{tpu_custom_call.1} parent=1 // pred_region
      _
    $region21: #{tpu_custom_call.1} parent=1 // pred_fallthru
      _
    // Predicated region
    $region22: #{tpu_custom_call.1} parent=1 // pred_check
      _
    $region23: #{tpu_custom_call.1} parent=1 // pred_check_branch
      %69 = sbr.rel (0) target = $region25
    $region24: #{tpu_custom_call.1} parent=1 // pred_region
      %s71 = ssub.s32 2048, 2048
      %72 = vsyncadd [#allocation9], %s71
      %s73 = sshll.u32 [#allocation8], 4
      %s74 = int_to_ptr.vmem [resolvable:$true] %s73
      %79 = dma.hbm_to_vmem [thread:$0]  %s5, 2048, %s74, [#allocation9], 128, 128, 8
    $region25: #{tpu_custom_call.1} parent=1 // pred_fallthru
      _
    // Predicated region
    $region26: #{tpu_custom_call.1} parent=1 // pred_check
      _
    $region27: #{tpu_custom_call.1} parent=1 // pred_check_branch
      %81 = sbr.rel (0) target = $region29
    $region28: #{tpu_custom_call.1} parent=1 // pred_region
      %s83 = ssub.s32 2048, 2048
      %84 = vsyncadd [#allocation9], %s83
      %s85 = sshll.u32 [#allocation10], 4
      %s86 = int_to_ptr.vmem [resolvable:$true] %s85
      %91 = dma.hbm_to_vmem [thread:$0]  %s6, 2048, %s86, [#allocation9], 128, 128, 8
    $region29: #{tpu_custom_call.1} parent=1 // pred_fallthru
      _
    // Predicated region
    $region30: #{tpu_custom_call.1} parent=1 // pred_check
      _
    $region31: #{tpu_custom_call.1} parent=1 // pred_check_branch
      %93 = sbr.rel (0) target = $region33
    $region32: #{tpu_custom_call.1} parent=1 // pred_region
      _
    $region33: #{tpu_custom_call.1} parent=1 // pred_fallthru
      _
    // Predicated region
    $region34: #{tpu_custom_call.1} parent=1 // pred_check
      _
    $region35: #{tpu_custom_call.1} parent=1 // pred_check_branch
      %95 = sbr.rel (0) target = $region37
    $region36: #{tpu_custom_call.1} parent=1 // pred_region
      _
    $region37: #{tpu_custom_call.1} parent=1 // pred_fallthru
      _
    // Predicated region
    $region38: #{tpu_custom_call.1} parent=1 // pred_check
      _
    $region39: #{tpu_custom_call.1} parent=1 // pred_check_branch
      %97 = sbr.rel (0) target = $region41
    $region40: #{tpu_custom_call.1} parent=1 // pred_region
      %s99 = ssub.s32 2048, 2048
      %100 = vsyncadd [#allocation12], %s99
      %s101 = sshll.u32 [#allocation11], 4
      %s102 = int_to_ptr.vmem [resolvable:$true] %s101
      %107 = dma.hbm_to_vmem [thread:$0]  %s9, 2048, %s102, [#allocation12], 128, 128, 8
    $region41: #{tpu_custom_call.1} parent=1 // pred_fallthru
      _
    // Predicated region
    $region42: #{tpu_custom_call.1} parent=1 // pred_check
      _
    $region43: #{tpu_custom_call.1} parent=1 // pred_check_branch
      %109 = sbr.rel (0) target = $region45
    $region44: #{tpu_custom_call.1} parent=1 // pred_region
      %s111 = ssub.s32 2048, 2048
      %112 = vsyncadd [#allocation12], %s111
      %s113 = sshll.u32 [#allocation13], 4
      %s114 = int_to_ptr.vmem [resolvable:$true] %s113
      %119 = dma.hbm_to_vmem [thread:$0]  %s10, 2048, %s114, [#allocation12], 128, 128, 8
    $region45: #{tpu_custom_call.1} parent=1 // pred_fallthru
      _
    // Predicated region
    $region46: #{tpu_custom_call.1} parent=1 // pred_check
      _
    $region47: #{tpu_custom_call.1} parent=1 // pred_check_branch
      %121 = sbr.rel (0) target = $region49
    $region48: #{tpu_custom_call.1} parent=1 // pred_region
      _
    $region49: #{tpu_custom_call.1} parent=1 // pred_fallthru
      _
    // Predicated region
    $region50: #{tpu_custom_call.1} parent=1 // pred_check
      _
    $region51: #{tpu_custom_call.1} parent=1 // pred_check_branch
      %123 = sbr.rel (0) target = $region53
    $region52: #{tpu_custom_call.1} parent=1 // pred_region
      _
    $region53: #{tpu_custom_call.1} parent=1 // pred_fallthru
      _
    // Predicated region
    $region54: #{tpu_custom_call.1} parent=1 // pred_check
      _
    $region55: #{tpu_custom_call.1} parent=1 // pred_check_branch
      %125 = sbr.rel (0) target = $region57
    $region56: #{tpu_custom_call.1} parent=1 // pred_region
      %s127 = ssub.s32 4096, 4096
      %128 = vsyncadd [#allocation15], %s127
      %s129 = sshll.u32 [#allocation14], 4
      %s130 = int_to_ptr.vmem [resolvable:$true] %s129
      %135 = dma.hbm_to_vmem [thread:$0]  %s13, 4096, %s130, [#allocation15], 128, 128, 8
    $region57: #{tpu_custom_call.1} parent=1 // pred_fallthru
      _
    // Predicated region
    $region58: #{tpu_custom_call.1} parent=1 // pred_check
      _
    $region59: #{tpu_custom_call.1} parent=1 // pred_check_branch
      %137 = sbr.rel (0) target = $region61
    $region60: #{tpu_custom_call.1} parent=1 // pred_region
      %s139 = ssub.s32 4096, 4096
      %140 = vsyncadd [#allocation15], %s139
      %s141 = sshll.u32 [#allocation16], 4
      %s142 = int_to_ptr.vmem [resolvable:$true] %s141
      %147 = dma.hbm_to_vmem [thread:$0]  %s14, 4096, %s142, [#allocation15], 128, 128, 8
    $region61: #{tpu_custom_call.1} parent=1 // pred_fallthru
      _
    // Predicated region
    $region62: #{tpu_custom_call.1} parent=1 // pred_check
      _
    $region63: #{tpu_custom_call.1} parent=1 // pred_check_branch
      %149 = sbr.rel (0) target = $region65
    $region64: #{tpu_custom_call.1} parent=1 // pred_region
      %s151 = ssub.s32 4096, 4096
      %152 = vsyncadd [#allocation18], %s151
      %s153 = sshll.u32 [#allocation17], 4
      %s154 = int_to_ptr.vmem [resolvable:$true] %s153
      %159 = dma.hbm_to_vmem [thread:$0]  %s15, 4096, %s154, [#allocation18], 128, 128, 8
    $region65: #{tpu_custom_call.1} parent=1 // pred_fallthru
      _
    // Predicated region
    $region66: #{tpu_custom_call.1} parent=1 // pred_check
      _
    $region67: #{tpu_custom_call.1} parent=1 // pred_check_branch
      %161 = sbr.rel (0) target = $region69
    $region68: #{tpu_custom_call.1} parent=1 // pred_region
      %162 = dma.done [#allocation3], 4096
    $region69: #{tpu_custom_call.1} parent=1 // pred_fallthru
      _
    // Predicated region
    $region70: #{tpu_custom_call.1} parent=1 // pred_check
      _
    $region71: #{tpu_custom_call.1} parent=1 // pred_check_branch
      %164 = sbr.rel (0) target = $region73
    $region72: #{tpu_custom_call.1} parent=1 // pred_region
      %165 = dma.done [#allocation6], 2048
    $region73: #{tpu_custom_call.1} parent=1 // pred_fallthru
      _
    // Predicated region
    $region74: #{tpu_custom_call.1} parent=1 // pred_check
      _
    $region75: #{tpu_custom_call.1} parent=1 // pred_check_branch
      %167 = sbr.rel (0) target = $region77
    $region76: #{tpu_custom_call.1} parent=1 // pred_region
      %168 = dma.done [#allocation6], 2048
    $region77: #{tpu_custom_call.1} parent=1 // pred_fallthru
      _
    // Predicated region
    $region78: #{tpu_custom_call.1} parent=1 // pred_check
      _
    $region79: #{tpu_custom_call.1} parent=1 // pred_check_branch
      %170 = sbr.rel (0) target = $region81
    $region80: #{tpu_custom_call.1} parent=1 // pred_region
      %171 = dma.done [#allocation9], 2048
    $region81: #{tpu_custom_call.1} parent=1 // pred_fallthru
      _
    // Predicated region
    $region82: #{tpu_custom_call.1} parent=1 // pred_check
      _
    $region83: #{tpu_custom_call.1} parent=1 // pred_check_branch
      %173 = sbr.rel (0) target = $region85
    $region84: #{tpu_custom_call.1} parent=1 // pred_region
      %174 = dma.done [#allocation9], 2048
    $region85: #{tpu_custom_call.1} parent=1 // pred_fallthru
      _
    // Predicated region
    $region86: #{tpu_custom_call.1} parent=1 // pred_check
      _
    $region87: #{tpu_custom_call.1} parent=1 // pred_check_branch
      %176 = sbr.rel (0) target = $region89
    $region88: #{tpu_custom_call.1} parent=1 // pred_region
      %177 = dma.done [#allocation12], 2048
    $region89: #{tpu_custom_call.1} parent=1 // pred_fallthru
      _
    // Predicated region
    $region90: #{tpu_custom_call.1} parent=1 // pred_check
      _
    $region91: #{tpu_custom_call.1} parent=1 // pred_check_branch
      %179 = sbr.rel (0) target = $region93
    $region92: #{tpu_custom_call.1} parent=1 // pred_region
      %180 = dma.done [#allocation12], 2048
    $region93: #{tpu_custom_call.1} parent=1 // pred_fallthru
      _
    // Predicated region
    $region94: #{tpu_custom_call.1} parent=1 // pred_check
      _
    $region95: #{tpu_custom_call.1} parent=1 // pred_check_branch
      %182 = sbr.rel (0) target = $region97
    $region96: #{tpu_custom_call.1} parent=1 // pred_region
      %183 = dma.done [#allocation15], 4096
    $region97: #{tpu_custom_call.1} parent=1 // pred_fallthru
      _
    // Predicated region
    $region98: #{tpu_custom_call.1} parent=1 // pred_check
      _
    $region99: #{tpu_custom_call.1} parent=1 // pred_check_branch
      %185 = sbr.rel (0) target = $region101
    $region100: #{tpu_custom_call.1} parent=1 // pred_region
      %186 = dma.done [#allocation15], 4096
    $region101: #{tpu_custom_call.1} parent=1 // pred_fallthru
      _
    // Predicated region
    $region102: #{tpu_custom_call.1} parent=1 // pred_check
      _
    $region103: #{tpu_custom_call.1} parent=1 // pred_check_branch
      %188 = sbr.rel (0) target = $region105
    $region104: #{tpu_custom_call.1} parent=1 // pred_region
      %189 = dma.done [#allocation18], 4096
    $region105: #{tpu_custom_call.1} parent=1 // pred_fallthru
      _
    %v190 = vld [vmem:[#allocation2] sm:$0xff]
    %v191 = vld [vmem:[#allocation2 + $0x8] sm:$0xff]
    %v192 = vld [vmem:[#allocation2 + $0x10] sm:$0xff]
    %v193 = vld [vmem:[#allocation2 + $0x18] sm:$0xff]
    %v194 = vld [vmem:[#allocation2 + $0x20] sm:$0xff]
    %v195 = vld [vmem:[#allocation2 + $0x28] sm:$0xff]
    %v196 = vld [vmem:[#allocation2 + $0x30] sm:$0xff]
    %v197 = vld [vmem:[#allocation2 + $0x38] sm:$0xff]
    %v198 = vld [vmem:[#allocation2 + $0x40] sm:$0xff]
    %v199 = vld [vmem:[#allocation2 + $0x48] sm:$0xff]
    %v200 = vld [vmem:[#allocation2 + $0x50] sm:$0xff]
    %v201 = vld [vmem:[#allocation2 + $0x58] sm:$0xff]
    %v202 = vld [vmem:[#allocation2 + $0x60] sm:$0xff]
    %v203 = vld [vmem:[#allocation2 + $0x68] sm:$0xff]
    %v204 = vld [vmem:[#allocation2 + $0x70] sm:$0xff]
    %v205 = vld [vmem:[#allocation2 + $0x78] sm:$0xff]
    %v206 = vld [vmem:[#allocation2 + $0x80] sm:$0xff]
    %v207 = vld [vmem:[#allocation2 + $0x88] sm:$0xff]
    %v208 = vld [vmem:[#allocation2 + $0x90] sm:$0xff]
    %v209 = vld [vmem:[#allocation2 + $0x98] sm:$0xff]
    %v210 = vld [vmem:[#allocation2 + $0xa0] sm:$0xff]
    %v211 = vld [vmem:[#allocation2 + $0xa8] sm:$0xff]
    %v212 = vld [vmem:[#allocation2 + $0xb0] sm:$0xff]
    %v213 = vld [vmem:[#allocation2 + $0xb8] sm:$0xff]
    %v214 = vld [vmem:[#allocation2 + $0xc0] sm:$0xff]
    %v215 = vld [vmem:[#allocation2 + $0xc8] sm:$0xff]
    %v216 = vld [vmem:[#allocation2 + $0xd0] sm:$0xff]
    %v217 = vld [vmem:[#allocation2 + $0xd8] sm:$0xff]
    %v218 = vld [vmem:[#allocation2 + $0xe0] sm:$0xff]
    %v219 = vld [vmem:[#allocation2 + $0xe8] sm:$0xff]
    %v220 = vld [vmem:[#allocation2 + $0xf0] sm:$0xff]
    %v221 = vld [vmem:[#allocation2 + $0xf8] sm:$0xff]
    %v222 = vld [vmem:[#allocation5] sm:$0xff]
    %v223 = vld [vmem:[#allocation5 + $0x8] sm:$0xff]
    %v224 = vld [vmem:[#allocation5 + $0x10] sm:$0xff]
    %v225 = vld [vmem:[#allocation5 + $0x18] sm:$0xff]
    %v226 = vld [vmem:[#allocation5 + $0x20] sm:$0xff]
    %v227 = vld [vmem:[#allocation5 + $0x28] sm:$0xff]
    %v228 = vld [vmem:[#allocation5 + $0x30] sm:$0xff]
    %v229 = vld [vmem:[#allocation5 + $0x38] sm:$0xff]
    %v230 = vld [vmem:[#allocation5 + $0x40] sm:$0xff]
    %v231 = vld [vmem:[#allocation5 + $0x48] sm:$0xff]
    %v232 = vld [vmem:[#allocation5 + $0x50] sm:$0xff]
    %v233 = vld [vmem:[#allocation5 + $0x58] sm:$0xff]
    %v234 = vld [vmem:[#allocation5 + $0x60] sm:$0xff]
    %v235 = vld [vmem:[#allocation5 + $0x68] sm:$0xff]
    %v236 = vld [vmem:[#allocation5 + $0x70] sm:$0xff]
    %v237 = vld [vmem:[#allocation5 + $0x78] sm:$0xff]
    %v238 = vld [vmem:[%s3] sm:$0x1]
    %v240 = vlaneseq
    %v241 = vshrl.u32 %v240, 7
    %v242 = vsub.s32 0, %v241
    %v243 = vrot.slane %v238, %v242
    %245 = vmatprep.subr.mxu0 0.0
    %246 = vmatpush1.msra.mxu0 %v222
    %247 = vmatprep.subr.mxu0 0.0
    %248 = vmatpush1.msra.mxu0 %v223
    %249 = vmatprep.subr.mxu0 0.0
    %250 = vmatpush1.msra.mxu0 %v224
    %251 = vmatprep.subr.mxu0 0.0
    %252 = vmatpush1.msra.mxu0 %v225
    %253 = vmatprep.subr.mxu0 0.0
    %254 = vmatpush1.msra.mxu0 %v226
    %255 = vmatprep.subr.mxu0 0.0
    %256 = vmatpush1.msra.mxu0 %v227
    %257 = vmatprep.subr.mxu0 0.0
    %258 = vmatpush1.msra.mxu0 %v228
    %259 = vmatprep.subr.mxu0 0.0
    %260 = vmatpush1.msra.mxu0 %v229
    %261 = vmatprep.subr.mxu0 0.0
    %262 = vmatpush1.msra.mxu0 %v230
    %263 = vmatprep.subr.mxu0 0.0
    %264 = vmatpush1.msra.mxu0 %v231
    %265 = vmatprep.subr.mxu0 0.0
    %266 = vmatpush1.msra.mxu0 %v232
    %267 = vmatprep.subr.mxu0 0.0
    %268 = vmatpush1.msra.mxu0 %v233
    %269 = vmatprep.subr.mxu0 0.0
    %270 = vmatpush1.msra.mxu0 %v234
    %271 = vmatprep.subr.mxu0 0.0
    %272 = vmatpush1.msra.mxu0 %v235
    %273 = vmatprep.subr.mxu0 0.0
    %274 = vmatpush1.msra.mxu0 %v236
    %275 = vmatprep.subr.mxu0 0.0
    %276 = vmatpush1.msra.mxu0 %v237
    %277 = vmatprep.subr.mxu0 0.0
    %278 = vmatpush1.msra.mxu0 0.0
    %279 = vmatprep.subr.mxu0 0.0
    %280 = vmatpush1.msra.mxu0 0.0
    %281 = vmatprep.subr.mxu0 0.0
    %282 = vmatpush1.msra.mxu0 0.0
    %283 = vmatprep.subr.mxu0 0.0
    %284 = vmatpush1.msra.mxu0 0.0
    %285 = vmatprep.subr.mxu0 0.0
    %286 = vmatpush1.msra.mxu0 0.0
    %287 = vmatprep.subr.mxu0 0.0
    %288 = vmatpush1.msra.mxu0 0.0
    %289 = vmatprep.subr.mxu0 0.0
    %290 = vmatpush1.msra.mxu0 0.0
    %291 = vmatprep.subr.mxu0 0.0
    %292 = vmatpush1.msra.mxu0 0.0
    %293 = vmatprep.subr.mxu0 0.0
    %294 = vmatpush1.msra.mxu0 0.0
    %295 = vmatprep.subr.mxu0 0.0
    %296 = vmatpush1.msra.mxu0 0.0
    %297 = vmatprep.subr.mxu0 0.0
    %298 = vmatpush1.msra.mxu0 0.0
    %299 = vmatprep.subr.mxu0 0.0
    %300 = vmatpush1.msra.mxu0 0.0
    %301 = vmatprep.subr.mxu0 0.0
    %302 = vmatpush1.msra.mxu0 0.0
    %303 = vmatprep.subr.mxu0 0.0
    %304 = vmatpush1.msra.mxu0 0.0
    %305 = vmatprep.subr.mxu0 0.0
    %306 = vmatpush1.msra.mxu0 0.0
    %307 = vmatprep.subr.mxu0 0.0
    %308 = vmatpush1.msra.mxu0 0.0
    %309 = vmatprep.mubr.f32.mxu0 0.0
    %310 = vmatmul.mubr.f32.gmra.mrb[0].mxu0 %v190
    %v311 = vpop.f32.mrb[0].mxu0
    %v312 = vadd.f32 %v243, %v311
    %v313 = vpop.f32.mrb[0].mxu0
    %314 = vmatprep.mubr.f32.mxu0 0.0
    %315 = vmatmul.mubr.f32.gmra.mrb[0].mxu0 %v191
    %v316 = vpop.f32.mrb[0].mxu0
    %v317 = vadd.f32 %v243, %v316
    %v318 = vpop.f32.mrb[0].mxu0
    %319 = vmatprep.mubr.f32.mxu0 0.0
    %320 = vmatmul.mubr.f32.gmra.mrb[0].mxu0 %v192
    %v321 = vpop.f32.mrb[0].mxu0
    %v322 = vadd.f32 %v243, %v321
    %v323 = vpop.f32.mrb[0].mxu0
    %324 = vmatprep.mubr.f32.mxu0 0.0
    %325 = vmatmul.mubr.f32.gmra.mrb[0].mxu0 %v193
    %v326 = vpop.f32.mrb[0].mxu0
    %v327 = vadd.f32 %v243, %v326
    %v328 = vpop.f32.mrb[0].mxu0
    %329 = vmatprep.mubr.f32.mxu0 0.0
    %330 = vmatmul.mubr.f32.gmra.mrb[0].mxu0 %v194
    %v331 = vpop.f32.mrb[0].mxu0
    %v332 = vadd.f32 %v243, %v331
    %v333 = vpop.f32.mrb[0].mxu0
    %334 = vmatprep.mubr.f32.mxu0 0.0
    %335 = vmatmul.mubr.f32.gmra.mrb[0].mxu0 %v195
    %v336 = vpop.f32.mrb[0].mxu0
    %v337 = vadd.f32 %v243, %v336
    %v338 = vpop.f32.mrb[0].mxu0
    %339 = vmatprep.mubr.f32.mxu0 0.0
    %340 = vmatmul.mubr.f32.gmra.mrb[0].mxu0 %v196
    %v341 = vpop.f32.mrb[0].mxu0
    %v342 = vadd.f32 %v243, %v341
    %v343 = vpop.f32.mrb[0].mxu0
    %344 = vmatprep.mubr.f32.mxu0 0.0
    %345 = vmatmul.mubr.f32.gmra.mrb[0].mxu0 %v197
    %v346 = vpop.f32.mrb[0].mxu0
    %v347 = vadd.f32 %v243, %v346
    %v348 = vpop.f32.mrb[0].mxu0
    %349 = vmatprep.mubr.f32.mxu0 0.0
    %350 = vmatmul.mubr.f32.gmra.mrb[0].mxu0 %v198
    %v351 = vpop.f32.mrb[0].mxu0
    %v352 = vadd.f32 %v243, %v351
    %v353 = vpop.f32.mrb[0].mxu0
    %354 = vmatprep.mubr.f32.mxu0 0.0
    %355 = vmatmul.mubr.f32.gmra.mrb[0].mxu0 %v199
    %v356 = vpop.f32.mrb[0].mxu0
    %v357 = vadd.f32 %v243, %v356
    %v358 = vpop.f32.mrb[0].mxu0
    %359 = vmatprep.mubr.f32.mxu0 0.0
    %360 = vmatmul.mubr.f32.gmra.mrb[0].mxu0 %v200
    %v361 = vpop.f32.mrb[0].mxu0
    %v362 = vadd.f32 %v243, %v361
    %v363 = vpop.f32.mrb[0].mxu0
    %364 = vmatprep.mubr.f32.mxu0 0.0
    %365 = vmatmul.mubr.f32.gmra.mrb[0].mxu0 %v201
    %v366 = vpop.f32.mrb[0].mxu0
    %v367 = vadd.f32 %v243, %v366
    %v368 = vpop.f32.mrb[0].mxu0
    %369 = vmatprep.mubr.f32.mxu0 0.0
    %370 = vmatmul.mubr.f32.gmra.mrb[0].mxu0 %v202
    %v371 = vpop.f32.mrb[0].mxu0
    %v372 = vadd.f32 %v243, %v371
    %v373 = vpop.f32.mrb[0].mxu0
    %374 = vmatprep.mubr.f32.mxu0 0.0
    %375 = vmatmul.mubr.f32.gmra.mrb[0].mxu0 %v203
    %v376 = vpop.f32.mrb[0].mxu0
    %v377 = vadd.f32 %v243, %v376
    %v378 = vpop.f32.mrb[0].mxu0
    %379 = vmatprep.mubr.f32.mxu0 0.0
    %380 = vmatmul.mubr.f32.gmra.mrb[0].mxu0 %v204
    %v381 = vpop.f32.mrb[0].mxu0
    %v382 = vadd.f32 %v243, %v381
    %v383 = vpop.f32.mrb[0].mxu0
    %384 = vmatprep.mubr.f32.mxu0 0.0
    %385 = vmatmul.mubr.f32.gmra.mrb[0].mxu0 %v205
    %v386 = vpop.f32.mrb[0].mxu0
    %v387 = vadd.f32 %v243, %v386
    %v388 = vpop.f32.mrb[0].mxu0
    %389 = vmatprep.mubr.f32.mxu0 0.0
    %390 = vmatmul.mubr.f32.gmra.mrb[0].mxu0 %v206
    %v391 = vpop.f32.mrb[0].mxu0
    %v392 = vadd.f32 %v243, %v391
    %v393 = vpop.f32.mrb[0].mxu0
    %394 = vmatprep.mubr.f32.mxu0 0.0
    %395 = vmatmul.mubr.f32.gmra.mrb[0].mxu0 %v207
    %v396 = vpop.f32.mrb[0].mxu0
    %v397 = vadd.f32 %v243, %v396
    %v398 = vpop.f32.mrb[0].mxu0
    %399 = vmatprep.mubr.f32.mxu0 0.0
    %400 = vmatmul.mubr.f32.gmra.mrb[0].mxu0 %v208
    %v401 = vpop.f32.mrb[0].mxu0
    %v402 = vadd.f32 %v243, %v401
    %v403 = vpop.f32.mrb[0].mxu0
    %404 = vmatprep.mubr.f32.mxu0 0.0
    %405 = vmatmul.mubr.f32.gmra.mrb[0].mxu0 %v209
    %v406 = vpop.f32.mrb[0].mxu0
    %v407 = vadd.f32 %v243, %v406
    %v408 = vpop.f32.mrb[0].mxu0
    %409 = vmatprep.mubr.f32.mxu0 0.0
    %410 = vmatmul.mubr.f32.gmra.mrb[0].mxu0 %v210
    %v411 = vpop.f32.mrb[0].mxu0
    %v412 = vadd.f32 %v243, %v411
    %v413 = vpop.f32.mrb[0].mxu0
    %414 = vmatprep.mubr.f32.mxu0 0.0
    %415 = vmatmul.mubr.f32.gmra.mrb[0].mxu0 %v211
    %v416 = vpop.f32.mrb[0].mxu0
    %v417 = vadd.f32 %v243, %v416
    %v418 = vpop.f32.mrb[0].mxu0
    %419 = vmatprep.mubr.f32.mxu0 0.0
    %420 = vmatmul.mubr.f32.gmra.mrb[0].mxu0 %v212
    %v421 = vpop.f32.mrb[0].mxu0
    %v422 = vadd.f32 %v243, %v421
    %v423 = vpop.f32.mrb[0].mxu0
    %424 = vmatprep.mubr.f32.mxu0 0.0
    %425 = vmatmul.mubr.f32.gmra.mrb[0].mxu0 %v213
    %v426 = vpop.f32.mrb[0].mxu0
    %v427 = vadd.f32 %v243, %v426
    %v428 = vpop.f32.mrb[0].mxu0
    %429 = vmatprep.mubr.f32.mxu0 0.0
    %430 = vmatmul.mubr.f32.gmra.mrb[0].mxu0 %v214
    %v431 = vpop.f32.mrb[0].mxu0
    %v432 = vadd.f32 %v243, %v431
    %v433 = vpop.f32.mrb[0].mxu0
    %434 = vmatprep.mubr.f32.mxu0 0.0
    %435 = vmatmul.mubr.f32.gmra.mrb[0].mxu0 %v215
    %v436 = vpop.f32.mrb[0].mxu0
    %v437 = vadd.f32 %v243, %v436
    %v438 = vpop.f32.mrb[0].mxu0
    %439 = vmatprep.mubr.f32.mxu0 0.0
    %440 = vmatmul.mubr.f32.gmra.mrb[0].mxu0 %v216
    %v441 = vpop.f32.mrb[0].mxu0
    %v442 = vadd.f32 %v243, %v441
    %v443 = vpop.f32.mrb[0].mxu0
    %444 = vmatprep.mubr.f32.mxu0 0.0
    %445 = vmatmul.mubr.f32.gmra.mrb[0].mxu0 %v217
    %v446 = vpop.f32.mrb[0].mxu0
    %v447 = vadd.f32 %v243, %v446
    %v448 = vpop.f32.mrb[0].mxu0
    %449 = vmatprep.mubr.f32.mxu0 0.0
    %450 = vmatmul.mubr.f32.gmra.mrb[0].mxu0 %v218
    %v451 = vpop.f32.mrb[0].mxu0
    %v452 = vadd.f32 %v243, %v451
    %v453 = vpop.f32.mrb[0].mxu0
    %454 = vmatprep.mubr.f32.mxu0 0.0
    %455 = vmatmul.mubr.f32.gmra.mrb[0].mxu0 %v219
    %v456 = vpop.f32.mrb[0].mxu0
    %v457 = vadd.f32 %v243, %v456
    %v458 = vpop.f32.mrb[0].mxu0
    %459 = vmatprep.mubr.f32.mxu0 0.0
    %460 = vmatmul.mubr.f32.gmra.mrb[0].mxu0 %v220
    %v461 = vpop.f32.mrb[0].mxu0
    %v462 = vadd.f32 %v243, %v461
    %v463 = vpop.f32.mrb[0].mxu0
    %464 = vmatprep.mubr.f32.mxu0 0.0
    %465 = vmatmul.mubr.f32.gmra.mrb[0].mxu0 %v221
    %v466 = vpop.f32.mrb[0].mxu0
    %v467 = vadd.f32 %v243, %v466
    %v468 = vpop.f32.mrb[0].mxu0
    %469 = vdwg.mxu0
    %v470 = vmul.f32 %v190, %v190
    %v471 = vmul.f32 %v191, %v191
    %v472 = vmul.f32 %v192, %v192
    %v473 = vmul.f32 %v193, %v193
    %v474 = vmul.f32 %v194, %v194
    %v475 = vmul.f32 %v195, %v195
    %v476 = vmul.f32 %v196, %v196
    %v477 = vmul.f32 %v197, %v197
    %v478 = vmul.f32 %v198, %v198
    %v479 = vmul.f32 %v199, %v199
    %v480 = vmul.f32 %v200, %v200
    %v481 = vmul.f32 %v201, %v201
    %v482 = vmul.f32 %v202, %v202
    %v483 = vmul.f32 %v203, %v203
    %v484 = vmul.f32 %v204, %v204
    %v485 = vmul.f32 %v205, %v205
    %v486 = vmul.f32 %v206, %v206
    %v487 = vmul.f32 %v207, %v207
    %v488 = vmul.f32 %v208, %v208
    %v489 = vmul.f32 %v209, %v209
    %v490 = vmul.f32 %v210, %v210
    %v491 = vmul.f32 %v211, %v211
    %v492 = vmul.f32 %v212, %v212
    %v493 = vmul.f32 %v213, %v213
    %v494 = vmul.f32 %v214, %v214
    %v495 = vmul.f32 %v215, %v215
    %v496 = vmul.f32 %v216, %v216
    %v497 = vmul.f32 %v217, %v217
    %v498 = vmul.f32 %v218, %v218
    %v499 = vmul.f32 %v219, %v219
    %v500 = vmul.f32 %v220, %v220
    %v501 = vmul.f32 %v221, %v221
    %v502 = vld [vmem:[#allocation7] sm:$0xff]
    %v503 = vld [vmem:[#allocation7 + $0x8] sm:$0xff]
    %v504 = vld [vmem:[#allocation7 + $0x10] sm:$0xff]
    %v505 = vld [vmem:[#allocation7 + $0x18] sm:$0xff]
    %v506 = vld [vmem:[#allocation7 + $0x20] sm:$0xff]
    %v507 = vld [vmem:[#allocation7 + $0x28] sm:$0xff]
    %v508 = vld [vmem:[#allocation7 + $0x30] sm:$0xff]
    %v509 = vld [vmem:[#allocation7 + $0x38] sm:$0xff]
    %v510 = vld [vmem:[#allocation7 + $0x40] sm:$0xff]
    %v511 = vld [vmem:[#allocation7 + $0x48] sm:$0xff]
    %v512 = vld [vmem:[#allocation7 + $0x50] sm:$0xff]
    %v513 = vld [vmem:[#allocation7 + $0x58] sm:$0xff]
    %v514 = vld [vmem:[#allocation7 + $0x60] sm:$0xff]
    %v515 = vld [vmem:[#allocation7 + $0x68] sm:$0xff]
    %v516 = vld [vmem:[#allocation7 + $0x70] sm:$0xff]
    %v517 = vld [vmem:[#allocation7 + $0x78] sm:$0xff]
    %v518 = vld [vmem:[%s4] sm:$0x1]
    %v520 = vlaneseq
    %v521 = vshrl.u32 %v520, 7
    %v522 = vsub.s32 0, %v521
    %v523 = vrot.slane %v518, %v522
    %525 = vmatprep.subr.mxu0 0.0
    %526 = vmatpush1.msra.mxu0 %v502
    %527 = vmatprep.subr.mxu0 0.0
    %528 = vmatpush1.msra.mxu0 %v503
    %529 = vmatprep.subr.mxu0 0.0
    %530 = vmatpush1.msra.mxu0 %v504
    %531 = vmatprep.subr.mxu0 0.0
    %532 = vmatpush1.msra.mxu0 %v505
    %533 = vmatprep.subr.mxu0 0.0
    %534 = vmatpush1.msra.mxu0 %v506
    %535 = vmatprep.subr.mxu0 0.0
    %536 = vmatpush1.msra.mxu0 %v507
    %537 = vmatprep.subr.mxu0 0.0
    %538 = vmatpush1.msra.mxu0 %v508
    %539 = vmatprep.subr.mxu0 0.0
    %540 = vmatpush1.msra.mxu0 %v509
    %541 = vmatprep.subr.mxu0 0.0
    %542 = vmatpush1.msra.mxu0 %v510
    %543 = vmatprep.subr.mxu0 0.0
    %544 = vmatpush1.msra.mxu0 %v511
    %545 = vmatprep.subr.mxu0 0.0
    %546 = vmatpush1.msra.mxu0 %v512
    %547 = vmatprep.subr.mxu0 0.0
    %548 = vmatpush1.msra.mxu0 %v513
    %549 = vmatprep.subr.mxu0 0.0
    %550 = vmatpush1.msra.mxu0 %v514
    %551 = vmatprep.subr.mxu0 0.0
    %552 = vmatpush1.msra.mxu0 %v515
    %553 = vmatprep.subr.mxu0 0.0
    %554 = vmatpush1.msra.mxu0 %v516
    %555 = vmatprep.subr.mxu0 0.0
    %556 = vmatpush1.msra.mxu0 %v517
    %557 = vmatprep.subr.mxu0 0.0
    %558 = vmatpush1.msra.mxu0 0.0
    %559 = vmatprep.subr.mxu0 0.0
    %560 = vmatpush1.msra.mxu0 0.0
    %561 = vmatprep.subr.mxu0 0.0
    %562 = vmatpush1.msra.mxu0 0.0
    %563 = vmatprep.subr.mxu0 0.0
    %564 = vmatpush1.msra.mxu0 0.0
    %565 = vmatprep.subr.mxu0 0.0
    %566 = vmatpush1.msra.mxu0 0.0
    %567 = vmatprep.subr.mxu0 0.0
    %568 = vmatpush1.msra.mxu0 0.0
    %569 = vmatprep.subr.mxu0 0.0
    %570 = vmatpush1.msra.mxu0 0.0
    %571 = vmatprep.subr.mxu0 0.0
    %572 = vmatpush1.msra.mxu0 0.0
    %573 = vmatprep.subr.mxu0 0.0
    %574 = vmatpush1.msra.mxu0 0.0
    %575 = vmatprep.subr.mxu0 0.0
    %576 = vmatpush1.msra.mxu0 0.0
    %577 = vmatprep.subr.mxu0 0.0
    %578 = vmatpush1.msra.mxu0 0.0
    %579 = vmatprep.subr.mxu0 0.0
    %580 = vmatpush1.msra.mxu0 0.0
    %581 = vmatprep.subr.mxu0 0.0
    %582 = vmatpush1.msra.mxu0 0.0
    %583 = vmatprep.subr.mxu0 0.0
    %584 = vmatpush1.msra.mxu0 0.0
    %585 = vmatprep.subr.mxu0 0.0
    %586 = vmatpush1.msra.mxu0 0.0
    %587 = vmatprep.subr.mxu0 0.0
    %588 = vmatpush1.msra.mxu0 0.0
    %589 = vmatprep.mubr.f32.mxu0 0.0
    %590 = vmatmul.mubr.f32.gmra.mrb[0].mxu0 %v470
    %v591 = vpop.f32.mrb[0].mxu0
    %v592 = vadd.f32 %v523, %v591
    %v593 = vpop.f32.mrb[0].mxu0
    %594 = vmatprep.mubr.f32.mxu0 0.0
    %595 = vmatmul.mubr.f32.gmra.mrb[0].mxu0 %v471
    %v596 = vpop.f32.mrb[0].mxu0
    %v597 = vadd.f32 %v523, %v596
    %v598 = vpop.f32.mrb[0].mxu0
    %599 = vmatprep.mubr.f32.mxu0 0.0
    %600 = vmatmul.mubr.f32.gmra.mrb[0].mxu0 %v472
    %v601 = vpop.f32.mrb[0].mxu0
    %v602 = vadd.f32 %v523, %v601
    %v603 = vpop.f32.mrb[0].mxu0
    %604 = vmatprep.mubr.f32.mxu0 0.0
    %605 = vmatmul.mubr.f32.gmra.mrb[0].mxu0 %v473
    %v606 = vpop.f32.mrb[0].mxu0
    %v607 = vadd.f32 %v523, %v606
    %v608 = vpop.f32.mrb[0].mxu0
    %609 = vmatprep.mubr.f32.mxu0 0.0
    %610 = vmatmul.mubr.f32.gmra.mrb[0].mxu0 %v474
    %v611 = vpop.f32.mrb[0].mxu0
    %v612 = vadd.f32 %v523, %v611
    %v613 = vpop.f32.mrb[0].mxu0
    %614 = vmatprep.mubr.f32.mxu0 0.0
    %615 = vmatmul.mubr.f32.gmra.mrb[0].mxu0 %v475
    %v616 = vpop.f32.mrb[0].mxu0
    %v617 = vadd.f32 %v523, %v616
    %v618 = vpop.f32.mrb[0].mxu0
    %619 = vmatprep.mubr.f32.mxu0 0.0
    %620 = vmatmul.mubr.f32.gmra.mrb[0].mxu0 %v476
    %v621 = vpop.f32.mrb[0].mxu0
    %v622 = vadd.f32 %v523, %v621
    %v623 = vpop.f32.mrb[0].mxu0
    %624 = vmatprep.mubr.f32.mxu0 0.0
    %625 = vmatmul.mubr.f32.gmra.mrb[0].mxu0 %v477
    %v626 = vpop.f32.mrb[0].mxu0
    %v627 = vadd.f32 %v523, %v626
    %v628 = vpop.f32.mrb[0].mxu0
    %629 = vmatprep.mubr.f32.mxu0 0.0
    %630 = vmatmul.mubr.f32.gmra.mrb[0].mxu0 %v478
    %v631 = vpop.f32.mrb[0].mxu0
    %v632 = vadd.f32 %v523, %v631
    %v633 = vpop.f32.mrb[0].mxu0
    %634 = vmatprep.mubr.f32.mxu0 0.0
    %635 = vmatmul.mubr.f32.gmra.mrb[0].mxu0 %v479
    %v636 = vpop.f32.mrb[0].mxu0
    %v637 = vadd.f32 %v523, %v636
    %v638 = vpop.f32.mrb[0].mxu0
    %639 = vmatprep.mubr.f32.mxu0 0.0
    %640 = vmatmul.mubr.f32.gmra.mrb[0].mxu0 %v480
    %v641 = vpop.f32.mrb[0].mxu0
    %v642 = vadd.f32 %v523, %v641
    %v643 = vpop.f32.mrb[0].mxu0
    %644 = vmatprep.mubr.f32.mxu0 0.0
    %645 = vmatmul.mubr.f32.gmra.mrb[0].mxu0 %v481
    %v646 = vpop.f32.mrb[0].mxu0
    %v647 = vadd.f32 %v523, %v646
    %v648 = vpop.f32.mrb[0].mxu0
    %649 = vmatprep.mubr.f32.mxu0 0.0
    %650 = vmatmul.mubr.f32.gmra.mrb[0].mxu0 %v482
    %v651 = vpop.f32.mrb[0].mxu0
    %v652 = vadd.f32 %v523, %v651
    %v653 = vpop.f32.mrb[0].mxu0
    %654 = vmatprep.mubr.f32.mxu0 0.0
    %655 = vmatmul.mubr.f32.gmra.mrb[0].mxu0 %v483
    %v656 = vpop.f32.mrb[0].mxu0
    %v657 = vadd.f32 %v523, %v656
    %v658 = vpop.f32.mrb[0].mxu0
    %659 = vmatprep.mubr.f32.mxu0 0.0
    %660 = vmatmul.mubr.f32.gmra.mrb[0].mxu0 %v484
    %v661 = vpop.f32.mrb[0].mxu0
    %v662 = vadd.f32 %v523, %v661
    %v663 = vpop.f32.mrb[0].mxu0
    %664 = vmatprep.mubr.f32.mxu0 0.0
    %665 = vmatmul.mubr.f32.gmra.mrb[0].mxu0 %v485
    %v666 = vpop.f32.mrb[0].mxu0
    %v667 = vadd.f32 %v523, %v666
    %v668 = vpop.f32.mrb[0].mxu0
    %669 = vmatprep.mubr.f32.mxu0 0.0
    %670 = vmatmul.mubr.f32.gmra.mrb[0].mxu0 %v486
    %v671 = vpop.f32.mrb[0].mxu0
    %v672 = vadd.f32 %v523, %v671
    %v673 = vpop.f32.mrb[0].mxu0
    %674 = vmatprep.mubr.f32.mxu0 0.0
    %675 = vmatmul.mubr.f32.gmra.mrb[0].mxu0 %v487
    %v676 = vpop.f32.mrb[0].mxu0
    %v677 = vadd.f32 %v523, %v676
    %v678 = vpop.f32.mrb[0].mxu0
    %679 = vmatprep.mubr.f32.mxu0 0.0
    %680 = vmatmul.mubr.f32.gmra.mrb[0].mxu0 %v488
    %v681 = vpop.f32.mrb[0].mxu0
    %v682 = vadd.f32 %v523, %v681
    %v683 = vpop.f32.mrb[0].mxu0
    %684 = vmatprep.mubr.f32.mxu0 0.0
    %685 = vmatmul.mubr.f32.gmra.mrb[0].mxu0 %v489
    %v686 = vpop.f32.mrb[0].mxu0
    %v687 = vadd.f32 %v523, %v686
    %v688 = vpop.f32.mrb[0].mxu0
    %689 = vmatprep.mubr.f32.mxu0 0.0
    %690 = vmatmul.mubr.f32.gmra.mrb[0].mxu0 %v490
    %v691 = vpop.f32.mrb[0].mxu0
    %v692 = vadd.f32 %v523, %v691
    %v693 = vpop.f32.mrb[0].mxu0
    %694 = vmatprep.mubr.f32.mxu0 0.0
    %695 = vmatmul.mubr.f32.gmra.mrb[0].mxu0 %v491
    %v696 = vpop.f32.mrb[0].mxu0
    %v697 = vadd.f32 %v523, %v696
    %v698 = vpop.f32.mrb[0].mxu0
    %699 = vmatprep.mubr.f32.mxu0 0.0
    %700 = vmatmul.mubr.f32.gmra.mrb[0].mxu0 %v492
    %v701 = vpop.f32.mrb[0].mxu0
    %v702 = vadd.f32 %v523, %v701
    %v703 = vpop.f32.mrb[0].mxu0
    %704 = vmatprep.mubr.f32.mxu0 0.0
    %705 = vmatmul.mubr.f32.gmra.mrb[0].mxu0 %v493
    %v706 = vpop.f32.mrb[0].mxu0
    %v707 = vadd.f32 %v523, %v706
    %v708 = vpop.f32.mrb[0].mxu0
    %709 = vmatprep.mubr.f32.mxu0 0.0
    %710 = vmatmul.mubr.f32.gmra.mrb[0].mxu0 %v494
    %v711 = vpop.f32.mrb[0].mxu0
    %v712 = vadd.f32 %v523, %v711
    %v713 = vpop.f32.mrb[0].mxu0
    %714 = vmatprep.mubr.f32.mxu0 0.0
    %715 = vmatmul.mubr.f32.gmra.mrb[0].mxu0 %v495
    %v716 = vpop.f32.mrb[0].mxu0
    %v717 = vadd.f32 %v523, %v716
    %v718 = vpop.f32.mrb[0].mxu0
    %719 = vmatprep.mubr.f32.mxu0 0.0
    %720 = vmatmul.mubr.f32.gmra.mrb[0].mxu0 %v496
    %v721 = vpop.f32.mrb[0].mxu0
    %v722 = vadd.f32 %v523, %v721
    %v723 = vpop.f32.mrb[0].mxu0
    %724 = vmatprep.mubr.f32.mxu0 0.0
    %725 = vmatmul.mubr.f32.gmra.mrb[0].mxu0 %v497
    %v726 = vpop.f32.mrb[0].mxu0
    %v727 = vadd.f32 %v523, %v726
    %v728 = vpop.f32.mrb[0].mxu0
    %729 = vmatprep.mubr.f32.mxu0 0.0
    %730 = vmatmul.mubr.f32.gmra.mrb[0].mxu0 %v498
    %v731 = vpop.f32.mrb[0].mxu0
    %v732 = vadd.f32 %v523, %v731
    %v733 = vpop.f32.mrb[0].mxu0
    %734 = vmatprep.mubr.f32.mxu0 0.0
    %735 = vmatmul.mubr.f32.gmra.mrb[0].mxu0 %v499
    %v736 = vpop.f32.mrb[0].mxu0
    %v737 = vadd.f32 %v523, %v736
    %v738 = vpop.f32.mrb[0].mxu0
    %739 = vmatprep.mubr.f32.mxu0 0.0
    %740 = vmatmul.mubr.f32.gmra.mrb[0].mxu0 %v500
    %v741 = vpop.f32.mrb[0].mxu0
    %v742 = vadd.f32 %v523, %v741
    %v743 = vpop.f32.mrb[0].mxu0
    %744 = vmatprep.mubr.f32.mxu0 0.0
    %745 = vmatmul.mubr.f32.gmra.mrb[0].mxu0 %v501
    %v746 = vpop.f32.mrb[0].mxu0
    %v747 = vadd.f32 %v523, %v746
    %v748 = vpop.f32.mrb[0].mxu0
    %749 = vdwg.mxu0
    %v750 = vrsqrt.pop %v592
    %v751 = vmul.f32 %v592, %v750
    %vm752 = vcmp.eq.f32.partialorder %v592, inf
    %v753 = vsel %vm752, %v592, %v751
    %vm754 = vcmp.eq.f32.partialorder %v592, 0.0
    %v755 = vand.u32 %v592, 2147483648
    %v756 = vsel %vm754, %v755, %v753
    %v757 = vrsqrt.pop %v597
    %v758 = vmul.f32 %v597, %v757
    %vm759 = vcmp.eq.f32.partialorder %v597, inf
    %v760 = vsel %vm759, %v597, %v758
    %vm761 = vcmp.eq.f32.partialorder %v597, 0.0
    %v762 = vand.u32 %v597, 2147483648
    %v763 = vsel %vm761, %v762, %v760
    %v764 = vrsqrt.pop %v602
    %v765 = vmul.f32 %v602, %v764
    %vm766 = vcmp.eq.f32.partialorder %v602, inf
    %v767 = vsel %vm766, %v602, %v765
    %vm768 = vcmp.eq.f32.partialorder %v602, 0.0
    %v769 = vand.u32 %v602, 2147483648
    %v770 = vsel %vm768, %v769, %v767
    %v771 = vrsqrt.pop %v607
    %v772 = vmul.f32 %v607, %v771
    %vm773 = vcmp.eq.f32.partialorder %v607, inf
    %v774 = vsel %vm773, %v607, %v772
    %vm775 = vcmp.eq.f32.partialorder %v607, 0.0
    %v776 = vand.u32 %v607, 2147483648
    %v777 = vsel %vm775, %v776, %v774
    %v778 = vrsqrt.pop %v612
    %v779 = vmul.f32 %v612, %v778
    %vm780 = vcmp.eq.f32.partialorder %v612, inf
    %v781 = vsel %vm780, %v612, %v779
    %vm782 = vcmp.eq.f32.partialorder %v612, 0.0
    %v783 = vand.u32 %v612, 2147483648
    %v784 = vsel %vm782, %v783, %v781
    %v785 = vrsqrt.pop %v617
    %v786 = vmul.f32 %v617, %v785
    %vm787 = vcmp.eq.f32.partialorder %v617, inf
    %v788 = vsel %vm787, %v617, %v786
    %vm789 = vcmp.eq.f32.partialorder %v617, 0.0
    %v790 = vand.u32 %v617, 2147483648
    %v791 = vsel %vm789, %v790, %v788
    %v792 = vrsqrt.pop %v622
    %v793 = vmul.f32 %v622, %v792
    %vm794 = vcmp.eq.f32.partialorder %v622, inf
    %v795 = vsel %vm794, %v622, %v793
    %vm796 = vcmp.eq.f32.partialorder %v622, 0.0
    %v797 = vand.u32 %v622, 2147483648
    %v798 = vsel %vm796, %v797, %v795
    %v799 = vrsqrt.pop %v627
    %v800 = vmul.f32 %v627, %v799
    %vm801 = vcmp.eq.f32.partialorder %v627, inf
    %v802 = vsel %vm801, %v627, %v800
    %vm803 = vcmp.eq.f32.partialorder %v627, 0.0
    %v804 = vand.u32 %v627, 2147483648
    %v805 = vsel %vm803, %v804, %v802
    %v806 = vrsqrt.pop %v632
    %v807 = vmul.f32 %v632, %v806
    %vm808 = vcmp.eq.f32.partialorder %v632, inf
    %v809 = vsel %vm808, %v632, %v807
    %vm810 = vcmp.eq.f32.partialorder %v632, 0.0
    %v811 = vand.u32 %v632, 2147483648
    %v812 = vsel %vm810, %v811, %v809
    %v813 = vrsqrt.pop %v637
    %v814 = vmul.f32 %v637, %v813
    %vm815 = vcmp.eq.f32.partialorder %v637, inf
    %v816 = vsel %vm815, %v637, %v814
    %vm817 = vcmp.eq.f32.partialorder %v637, 0.0
    %v818 = vand.u32 %v637, 2147483648
    %v819 = vsel %vm817, %v818, %v816
    %v820 = vrsqrt.pop %v642
    %v821 = vmul.f32 %v642, %v820
    %vm822 = vcmp.eq.f32.partialorder %v642, inf
    %v823 = vsel %vm822, %v642, %v821
    %vm824 = vcmp.eq.f32.partialorder %v642, 0.0
    %v825 = vand.u32 %v642, 2147483648
    %v826 = vsel %vm824, %v825, %v823
    %v827 = vrsqrt.pop %v647
    %v828 = vmul.f32 %v647, %v827
    %vm829 = vcmp.eq.f32.partialorder %v647, inf
    %v830 = vsel %vm829, %v647, %v828
    %vm831 = vcmp.eq.f32.partialorder %v647, 0.0
    %v832 = vand.u32 %v647, 2147483648
    %v833 = vsel %vm831, %v832, %v830
    %v834 = vrsqrt.pop %v652
    %v835 = vmul.f32 %v652, %v834
    %vm836 = vcmp.eq.f32.partialorder %v652, inf
    %v837 = vsel %vm836, %v652, %v835
    %vm838 = vcmp.eq.f32.partialorder %v652, 0.0
    %v839 = vand.u32 %v652, 2147483648
    %v840 = vsel %vm838, %v839, %v837
    %v841 = vrsqrt.pop %v657
    %v842 = vmul.f32 %v657, %v841
    %vm843 = vcmp.eq.f32.partialorder %v657, inf
    %v844 = vsel %vm843, %v657, %v842
    %vm845 = vcmp.eq.f32.partialorder %v657, 0.0
    %v846 = vand.u32 %v657, 2147483648
    %v847 = vsel %vm845, %v846, %v844
    %v848 = vrsqrt.pop %v662
    %v849 = vmul.f32 %v662, %v848
    %vm850 = vcmp.eq.f32.partialorder %v662, inf
    %v851 = vsel %vm850, %v662, %v849
    %vm852 = vcmp.eq.f32.partialorder %v662, 0.0
    %v853 = vand.u32 %v662, 2147483648
    %v854 = vsel %vm852, %v853, %v851
    %v855 = vrsqrt.pop %v667
    %v856 = vmul.f32 %v667, %v855
    %vm857 = vcmp.eq.f32.partialorder %v667, inf
    %v858 = vsel %vm857, %v667, %v856
    %vm859 = vcmp.eq.f32.partialorder %v667, 0.0
    %v860 = vand.u32 %v667, 2147483648
    %v861 = vsel %vm859, %v860, %v858
    %v862 = vrsqrt.pop %v672
    %v863 = vmul.f32 %v672, %v862
    %vm864 = vcmp.eq.f32.partialorder %v672, inf
    %v865 = vsel %vm864, %v672, %v863
    %vm866 = vcmp.eq.f32.partialorder %v672, 0.0
    %v867 = vand.u32 %v672, 2147483648
    %v868 = vsel %vm866, %v867, %v865
    %v869 = vrsqrt.pop %v677
    %v870 = vmul.f32 %v677, %v869
    %vm871 = vcmp.eq.f32.partialorder %v677, inf
    %v872 = vsel %vm871, %v677, %v870
    %vm873 = vcmp.eq.f32.partialorder %v677, 0.0
    %v874 = vand.u32 %v677, 2147483648
    %v875 = vsel %vm873, %v874, %v872
    %v876 = vrsqrt.pop %v682
    %v877 = vmul.f32 %v682, %v876
    %vm878 = vcmp.eq.f32.partialorder %v682, inf
    %v879 = vsel %vm878, %v682, %v877
    %vm880 = vcmp.eq.f32.partialorder %v682, 0.0
    %v881 = vand.u32 %v682, 2147483648
    %v882 = vsel %vm880, %v881, %v879
    %v883 = vrsqrt.pop %v687
    %v884 = vmul.f32 %v687, %v883
    %vm885 = vcmp.eq.f32.partialorder %v687, inf
    %v886 = vsel %vm885, %v687, %v884
    %vm887 = vcmp.eq.f32.partialorder %v687, 0.0
    %v888 = vand.u32 %v687, 2147483648
    %v889 = vsel %vm887, %v888, %v886
    %v890 = vrsqrt.pop %v692
    %v891 = vmul.f32 %v692, %v890
    %vm892 = vcmp.eq.f32.partialorder %v692, inf
    %v893 = vsel %vm892, %v692, %v891
    %vm894 = vcmp.eq.f32.partialorder %v692, 0.0
    %v895 = vand.u32 %v692, 2147483648
    %v896 = vsel %vm894, %v895, %v893
    %v897 = vrsqrt.pop %v697
    %v898 = vmul.f32 %v697, %v897
    %vm899 = vcmp.eq.f32.partialorder %v697, inf
    %v900 = vsel %vm899, %v697, %v898
    %vm901 = vcmp.eq.f32.partialorder %v697, 0.0
    %v902 = vand.u32 %v697, 2147483648
    %v903 = vsel %vm901, %v902, %v900
    %v904 = vrsqrt.pop %v702
    %v905 = vmul.f32 %v702, %v904
    %vm906 = vcmp.eq.f32.partialorder %v702, inf
    %v907 = vsel %vm906, %v702, %v905
    %vm908 = vcmp.eq.f32.partialorder %v702, 0.0
    %v909 = vand.u32 %v702, 2147483648
    %v910 = vsel %vm908, %v909, %v907
    %v911 = vrsqrt.pop %v707
    %v912 = vmul.f32 %v707, %v911
    %vm913 = vcmp.eq.f32.partialorder %v707, inf
    %v914 = vsel %vm913, %v707, %v912
    %vm915 = vcmp.eq.f32.partialorder %v707, 0.0
    %v916 = vand.u32 %v707, 2147483648
    %v917 = vsel %vm915, %v916, %v914
    %v918 = vrsqrt.pop %v712
    %v919 = vmul.f32 %v712, %v918
    %vm920 = vcmp.eq.f32.partialorder %v712, inf
    %v921 = vsel %vm920, %v712, %v919
    %vm922 = vcmp.eq.f32.partialorder %v712, 0.0
    %v923 = vand.u32 %v712, 2147483648
    %v924 = vsel %vm922, %v923, %v921
    %v925 = vrsqrt.pop %v717
    %v926 = vmul.f32 %v717, %v925
    %vm927 = vcmp.eq.f32.partialorder %v717, inf
    %v928 = vsel %vm927, %v717, %v926
    %vm929 = vcmp.eq.f32.partialorder %v717, 0.0
    %v930 = vand.u32 %v717, 2147483648
    %v931 = vsel %vm929, %v930, %v928
    %v932 = vrsqrt.pop %v722
    %v933 = vmul.f32 %v722, %v932
    %vm934 = vcmp.eq.f32.partialorder %v722, inf
    %v935 = vsel %vm934, %v722, %v933
    %vm936 = vcmp.eq.f32.partialorder %v722, 0.0
    %v937 = vand.u32 %v722, 2147483648
    %v938 = vsel %vm936, %v937, %v935
    %v939 = vrsqrt.pop %v727
    %v940 = vmul.f32 %v727, %v939
    %vm941 = vcmp.eq.f32.partialorder %v727, inf
    %v942 = vsel %vm941, %v727, %v940
    %vm943 = vcmp.eq.f32.partialorder %v727, 0.0
    %v944 = vand.u32 %v727, 2147483648
    %v945 = vsel %vm943, %v944, %v942
    %v946 = vrsqrt.pop %v732
    %v947 = vmul.f32 %v732, %v946
    %vm948 = vcmp.eq.f32.partialorder %v732, inf
    %v949 = vsel %vm948, %v732, %v947
    %vm950 = vcmp.eq.f32.partialorder %v732, 0.0
    %v951 = vand.u32 %v732, 2147483648
    %v952 = vsel %vm950, %v951, %v949
    %v953 = vrsqrt.pop %v737
    %v954 = vmul.f32 %v737, %v953
    %vm955 = vcmp.eq.f32.partialorder %v737, inf
    %v956 = vsel %vm955, %v737, %v954
    %vm957 = vcmp.eq.f32.partialorder %v737, 0.0
    %v958 = vand.u32 %v737, 2147483648
    %v959 = vsel %vm957, %v958, %v956
    %v960 = vrsqrt.pop %v742
    %v961 = vmul.f32 %v742, %v960
    %vm962 = vcmp.eq.f32.partialorder %v742, inf
    %v963 = vsel %vm962, %v742, %v961
    %vm964 = vcmp.eq.f32.partialorder %v742, 0.0
    %v965 = vand.u32 %v742, 2147483648
    %v966 = vsel %vm964, %v965, %v963
    %v967 = vrsqrt.pop %v747
    %v968 = vmul.f32 %v747, %v967
    %vm969 = vcmp.eq.f32.partialorder %v747, inf
    %v970 = vsel %vm969, %v747, %v968
    %vm971 = vcmp.eq.f32.partialorder %v747, 0.0
    %v972 = vand.u32 %v747, 2147483648
    %v973 = vsel %vm971, %v972, %v970
    %v974 = vld [vmem:[#allocation14] sm:$0xff]
    %v975 = vld [vmem:[#allocation14 + $0x8] sm:$0xff]
    %v976 = vld [vmem:[#allocation14 + $0x10] sm:$0xff]
    %v977 = vld [vmem:[#allocation14 + $0x18] sm:$0xff]
    %v978 = vld [vmem:[#allocation14 + $0x20] sm:$0xff]
    %v979 = vld [vmem:[#allocation14 + $0x28] sm:$0xff]
    %v980 = vld [vmem:[#allocation14 + $0x30] sm:$0xff]
    %v981 = vld [vmem:[#allocation14 + $0x38] sm:$0xff]
    %v982 = vld [vmem:[#allocation14 + $0x40] sm:$0xff]
    %v983 = vld [vmem:[#allocation14 + $0x48] sm:$0xff]
    %v984 = vld [vmem:[#allocation14 + $0x50] sm:$0xff]
    %v985 = vld [vmem:[#allocation14 + $0x58] sm:$0xff]
    %v986 = vld [vmem:[#allocation14 + $0x60] sm:$0xff]
    %v987 = vld [vmem:[#allocation14 + $0x68] sm:$0xff]
    %v988 = vld [vmem:[#allocation14 + $0x70] sm:$0xff]
    %v989 = vld [vmem:[#allocation14 + $0x78] sm:$0xff]
    %v990 = vld [vmem:[#allocation14 + $0x80] sm:$0xff]
    %v991 = vld [vmem:[#allocation14 + $0x88] sm:$0xff]
    %v992 = vld [vmem:[#allocation14 + $0x90] sm:$0xff]
    %v993 = vld [vmem:[#allocation14 + $0x98] sm:$0xff]
    %v994 = vld [vmem:[#allocation14 + $0xa0] sm:$0xff]
    %v995 = vld [vmem:[#allocation14 + $0xa8] sm:$0xff]
    %v996 = vld [vmem:[#allocation14 + $0xb0] sm:$0xff]
    %v997 = vld [vmem:[#allocation14 + $0xb8] sm:$0xff]
    %v998 = vld [vmem:[#allocation14 + $0xc0] sm:$0xff]
    %v999 = vld [vmem:[#allocation14 + $0xc8] sm:$0xff]
    %v1000 = vld [vmem:[#allocation14 + $0xd0] sm:$0xff]
    %v1001 = vld [vmem:[#allocation14 + $0xd8] sm:$0xff]
    %v1002 = vld [vmem:[#allocation14 + $0xe0] sm:$0xff]
    %v1003 = vld [vmem:[#allocation14 + $0xe8] sm:$0xff]
    %v1004 = vld [vmem:[#allocation14 + $0xf0] sm:$0xff]
    %v1005 = vld [vmem:[#allocation14 + $0xf8] sm:$0xff]
    %v1006 = vmul.f32 %v756, %v974
    %v1007 = vmul.f32 %v763, %v975
    %v1008 = vmul.f32 %v770, %v976
    %v1009 = vmul.f32 %v777, %v977
    %v1010 = vmul.f32 %v784, %v978
    %v1011 = vmul.f32 %v791, %v979
    %v1012 = vmul.f32 %v798, %v980
    %v1013 = vmul.f32 %v805, %v981
    %v1014 = vmul.f32 %v812, %v982
    %v1015 = vmul.f32 %v819, %v983
    %v1016 = vmul.f32 %v826, %v984
    %v1017 = vmul.f32 %v833, %v985
    %v1018 = vmul.f32 %v840, %v986
    %v1019 = vmul.f32 %v847, %v987
    %v1020 = vmul.f32 %v854, %v988
    %v1021 = vmul.f32 %v861, %v989
    %v1022 = vmul.f32 %v868, %v990
    %v1023 = vmul.f32 %v875, %v991
    %v1024 = vmul.f32 %v882, %v992
    %v1025 = vmul.f32 %v889, %v993
    %v1026 = vmul.f32 %v896, %v994
    %v1027 = vmul.f32 %v903, %v995
    %v1028 = vmul.f32 %v910, %v996
    %v1029 = vmul.f32 %v917, %v997
    %v1030 = vmul.f32 %v924, %v998
    %v1031 = vmul.f32 %v931, %v999
    %v1032 = vmul.f32 %v938, %v1000
    %v1033 = vmul.f32 %v945, %v1001
    %v1034 = vmul.f32 %v952, %v1002
    %v1035 = vmul.f32 %v959, %v1003
    %v1036 = vmul.f32 %v966, %v1004
    %v1037 = vmul.f32 %v973, %v1005
    %v1038 = vadd.f32 %v312, %v1006
    %v1039 = vadd.f32 %v317, %v1007
    %v1040 = vadd.f32 %v322, %v1008
    %v1041 = vadd.f32 %v327, %v1009
    %v1042 = vadd.f32 %v332, %v1010
    %v1043 = vadd.f32 %v337, %v1011
    %v1044 = vadd.f32 %v342, %v1012
    %v1045 = vadd.f32 %v347, %v1013
    %v1046 = vadd.f32 %v352, %v1014
    %v1047 = vadd.f32 %v357, %v1015
    %v1048 = vadd.f32 %v362, %v1016
    %v1049 = vadd.f32 %v367, %v1017
    %v1050 = vadd.f32 %v372, %v1018
    %v1051 = vadd.f32 %v377, %v1019
    %v1052 = vadd.f32 %v382, %v1020
    %v1053 = vadd.f32 %v387, %v1021
    %v1054 = vadd.f32 %v392, %v1022
    %v1055 = vadd.f32 %v397, %v1023
    %v1056 = vadd.f32 %v402, %v1024
    %v1057 = vadd.f32 %v407, %v1025
    %v1058 = vadd.f32 %v412, %v1026
    %v1059 = vadd.f32 %v417, %v1027
    %v1060 = vadd.f32 %v422, %v1028
    %v1061 = vadd.f32 %v427, %v1029
    %v1062 = vadd.f32 %v432, %v1030
    %v1063 = vadd.f32 %v437, %v1031
    %v1064 = vadd.f32 %v442, %v1032
    %v1065 = vadd.f32 %v447, %v1033
    %v1066 = vadd.f32 %v452, %v1034
    %v1067 = vadd.f32 %v457, %v1035
    %v1068 = vadd.f32 %v462, %v1036
    %v1069 = vadd.f32 %v467, %v1037
    %v1070 = vmax.f32 %v1038, 0.0
    %v1071 = vmax.f32 %v1039, 0.0
    %v1072 = vmax.f32 %v1040, 0.0
    %v1073 = vmax.f32 %v1041, 0.0
    %v1074 = vmax.f32 %v1042, 0.0
    %v1075 = vmax.f32 %v1043, 0.0
    %v1076 = vmax.f32 %v1044, 0.0
    %v1077 = vmax.f32 %v1045, 0.0
    %v1078 = vmax.f32 %v1046, 0.0
    %v1079 = vmax.f32 %v1047, 0.0
    %v1080 = vmax.f32 %v1048, 0.0
    %v1081 = vmax.f32 %v1049, 0.0
    %v1082 = vmax.f32 %v1050, 0.0
    %v1083 = vmax.f32 %v1051, 0.0
    %v1084 = vmax.f32 %v1052, 0.0
    %v1085 = vmax.f32 %v1053, 0.0
    %v1086 = vmax.f32 %v1054, 0.0
    %v1087 = vmax.f32 %v1055, 0.0
    %v1088 = vmax.f32 %v1056, 0.0
    %v1089 = vmax.f32 %v1057, 0.0
    %v1090 = vmax.f32 %v1058, 0.0
    %v1091 = vmax.f32 %v1059, 0.0
    %v1092 = vmax.f32 %v1060, 0.0
    %v1093 = vmax.f32 %v1061, 0.0
    %v1094 = vmax.f32 %v1062, 0.0
    %v1095 = vmax.f32 %v1063, 0.0
    %v1096 = vmax.f32 %v1064, 0.0
    %v1097 = vmax.f32 %v1065, 0.0
    %v1098 = vmax.f32 %v1066, 0.0
    %v1099 = vmax.f32 %v1067, 0.0
    %v1100 = vmax.f32 %v1068, 0.0
    %v1101 = vmax.f32 %v1069, 0.0
    %v1102 = vld [vmem:[#allocation8] sm:$0xff]
    %v1103 = vld [vmem:[#allocation8 + $0x8] sm:$0xff]
    %v1104 = vld [vmem:[#allocation8 + $0x10] sm:$0xff]
    %v1105 = vld [vmem:[#allocation8 + $0x18] sm:$0xff]
    %v1106 = vld [vmem:[#allocation8 + $0x20] sm:$0xff]
    %v1107 = vld [vmem:[#allocation8 + $0x28] sm:$0xff]
    %v1108 = vld [vmem:[#allocation8 + $0x30] sm:$0xff]
    %v1109 = vld [vmem:[#allocation8 + $0x38] sm:$0xff]
    %v1110 = vld [vmem:[#allocation8 + $0x40] sm:$0xff]
    %v1111 = vld [vmem:[#allocation8 + $0x48] sm:$0xff]
    %v1112 = vld [vmem:[#allocation8 + $0x50] sm:$0xff]
    %v1113 = vld [vmem:[#allocation8 + $0x58] sm:$0xff]
    %v1114 = vld [vmem:[#allocation8 + $0x60] sm:$0xff]
    %v1115 = vld [vmem:[#allocation8 + $0x68] sm:$0xff]
    %v1116 = vld [vmem:[#allocation8 + $0x70] sm:$0xff]
    %v1117 = vld [vmem:[#allocation8 + $0x78] sm:$0xff]
    %v1118 = vld [vmem:[%s7] sm:$0x1]
    %v1120 = vlaneseq
    %v1121 = vshrl.u32 %v1120, 7
    %v1122 = vsub.s32 0, %v1121
    %v1123 = vrot.slane %v1118, %v1122
    %1125 = vmatprep.subr.mxu0 0.0
    %1126 = vmatpush1.msra.mxu0 %v1102
    %1127 = vmatprep.subr.mxu0 0.0
    %1128 = vmatpush1.msra.mxu0 %v1103
    %1129 = vmatprep.subr.mxu0 0.0
    %1130 = vmatpush1.msra.mxu0 %v1104
    %1131 = vmatprep.subr.mxu0 0.0
    %1132 = vmatpush1.msra.mxu0 %v1105
    %1133 = vmatprep.subr.mxu0 0.0
    %1134 = vmatpush1.msra.mxu0 %v1106
    %1135 = vmatprep.subr.mxu0 0.0
    %1136 = vmatpush1.msra.mxu0 %v1107
    %1137 = vmatprep.subr.mxu0 0.0
    %1138 = vmatpush1.msra.mxu0 %v1108
    %1139 = vmatprep.subr.mxu0 0.0
    %1140 = vmatpush1.msra.mxu0 %v1109
    %1141 = vmatprep.subr.mxu0 0.0
    %1142 = vmatpush1.msra.mxu0 %v1110
    %1143 = vmatprep.subr.mxu0 0.0
    %1144 = vmatpush1.msra.mxu0 %v1111
    %1145 = vmatprep.subr.mxu0 0.0
    %1146 = vmatpush1.msra.mxu0 %v1112
    %1147 = vmatprep.subr.mxu0 0.0
    %1148 = vmatpush1.msra.mxu0 %v1113
    %1149 = vmatprep.subr.mxu0 0.0
    %1150 = vmatpush1.msra.mxu0 %v1114
    %1151 = vmatprep.subr.mxu0 0.0
    %1152 = vmatpush1.msra.mxu0 %v1115
    %1153 = vmatprep.subr.mxu0 0.0
    %1154 = vmatpush1.msra.mxu0 %v1116
    %1155 = vmatprep.subr.mxu0 0.0
    %1156 = vmatpush1.msra.mxu0 %v1117
    %1157 = vmatprep.subr.mxu0 0.0
    %1158 = vmatpush1.msra.mxu0 0.0
    %1159 = vmatprep.subr.mxu0 0.0
    %1160 = vmatpush1.msra.mxu0 0.0
    %1161 = vmatprep.subr.mxu0 0.0
    %1162 = vmatpush1.msra.mxu0 0.0
    %1163 = vmatprep.subr.mxu0 0.0
    %1164 = vmatpush1.msra.mxu0 0.0
    %1165 = vmatprep.subr.mxu0 0.0
    %1166 = vmatpush1.msra.mxu0 0.0
    %1167 = vmatprep.subr.mxu0 0.0
    %1168 = vmatpush1.msra.mxu0 0.0
    %1169 = vmatprep.subr.mxu0 0.0
    %1170 = vmatpush1.msra.mxu0 0.0
    %1171 = vmatprep.subr.mxu0 0.0
    %1172 = vmatpush1.msra.mxu0 0.0
    %1173 = vmatprep.subr.mxu0 0.0
    %1174 = vmatpush1.msra.mxu0 0.0
    %1175 = vmatprep.subr.mxu0 0.0
    %1176 = vmatpush1.msra.mxu0 0.0
    %1177 = vmatprep.subr.mxu0 0.0
    %1178 = vmatpush1.msra.mxu0 0.0
    %1179 = vmatprep.subr.mxu0 0.0
    %1180 = vmatpush1.msra.mxu0 0.0
    %1181 = vmatprep.subr.mxu0 0.0
    %1182 = vmatpush1.msra.mxu0 0.0
    %1183 = vmatprep.subr.mxu0 0.0
    %1184 = vmatpush1.msra.mxu0 0.0
    %1185 = vmatprep.subr.mxu0 0.0
    %1186 = vmatpush1.msra.mxu0 0.0
    %1187 = vmatprep.subr.mxu0 0.0
    %1188 = vmatpush1.msra.mxu0 0.0
    %1189 = vmatprep.mubr.f32.mxu0 0.0
    %1190 = vmatmul.mubr.f32.gmra.mrb[0].mxu0 %v1070
    %v1191 = vpop.f32.mrb[0].mxu0
    %v1192 = vadd.f32 %v1123, %v1191
    %v1193 = vpop.f32.mrb[0].mxu0
    %1194 = vmatprep.mubr.f32.mxu0 0.0
    %1195 = vmatmul.mubr.f32.gmra.mrb[0].mxu0 %v1071
    %v1196 = vpop.f32.mrb[0].mxu0
    %v1197 = vadd.f32 %v1123, %v1196
    %v1198 = vpop.f32.mrb[0].mxu0
    %1199 = vmatprep.mubr.f32.mxu0 0.0
    %1200 = vmatmul.mubr.f32.gmra.mrb[0].mxu0 %v1072
    %v1201 = vpop.f32.mrb[0].mxu0
    %v1202 = vadd.f32 %v1123, %v1201
    %v1203 = vpop.f32.mrb[0].mxu0
    %1204 = vmatprep.mubr.f32.mxu0 0.0
    %1205 = vmatmul.mubr.f32.gmra.mrb[0].mxu0 %v1073
    %v1206 = vpop.f32.mrb[0].mxu0
    %v1207 = vadd.f32 %v1123, %v1206
    %v1208 = vpop.f32.mrb[0].mxu0
    %1209 = vmatprep.mubr.f32.mxu0 0.0
    %1210 = vmatmul.mubr.f32.gmra.mrb[0].mxu0 %v1074
    %v1211 = vpop.f32.mrb[0].mxu0
    %v1212 = vadd.f32 %v1123, %v1211
    %v1213 = vpop.f32.mrb[0].mxu0
    %1214 = vmatprep.mubr.f32.mxu0 0.0
    %1215 = vmatmul.mubr.f32.gmra.mrb[0].mxu0 %v1075
    %v1216 = vpop.f32.mrb[0].mxu0
    %v1217 = vadd.f32 %v1123, %v1216
    %v1218 = vpop.f32.mrb[0].mxu0
    %1219 = vmatprep.mubr.f32.mxu0 0.0
    %1220 = vmatmul.mubr.f32.gmra.mrb[0].mxu0 %v1076
    %v1221 = vpop.f32.mrb[0].mxu0
    %v1222 = vadd.f32 %v1123, %v1221
    %v1223 = vpop.f32.mrb[0].mxu0
    %1224 = vmatprep.mubr.f32.mxu0 0.0
    %1225 = vmatmul.mubr.f32.gmra.mrb[0].mxu0 %v1077
    %v1226 = vpop.f32.mrb[0].mxu0
    %v1227 = vadd.f32 %v1123, %v1226
    %v1228 = vpop.f32.mrb[0].mxu0
    %1229 = vmatprep.mubr.f32.mxu0 0.0
    %1230 = vmatmul.mubr.f32.gmra.mrb[0].mxu0 %v1078
    %v1231 = vpop.f32.mrb[0].mxu0
    %v1232 = vadd.f32 %v1123, %v1231
    %v1233 = vpop.f32.mrb[0].mxu0
    %1234 = vmatprep.mubr.f32.mxu0 0.0
    %1235 = vmatmul.mubr.f32.gmra.mrb[0].mxu0 %v1079
    %v1236 = vpop.f32.mrb[0].mxu0
    %v1237 = vadd.f32 %v1123, %v1236
    %v1238 = vpop.f32.mrb[0].mxu0
    %1239 = vmatprep.mubr.f32.mxu0 0.0
    %1240 = vmatmul.mubr.f32.gmra.mrb[0].mxu0 %v1080
    %v1241 = vpop.f32.mrb[0].mxu0
    %v1242 = vadd.f32 %v1123, %v1241
    %v1243 = vpop.f32.mrb[0].mxu0
    %1244 = vmatprep.mubr.f32.mxu0 0.0
    %1245 = vmatmul.mubr.f32.gmra.mrb[0].mxu0 %v1081
    %v1246 = vpop.f32.mrb[0].mxu0
    %v1247 = vadd.f32 %v1123, %v1246
    %v1248 = vpop.f32.mrb[0].mxu0
    %1249 = vmatprep.mubr.f32.mxu0 0.0
    %1250 = vmatmul.mubr.f32.gmra.mrb[0].mxu0 %v1082
    %v1251 = vpop.f32.mrb[0].mxu0
    %v1252 = vadd.f32 %v1123, %v1251
    %v1253 = vpop.f32.mrb[0].mxu0
    %1254 = vmatprep.mubr.f32.mxu0 0.0
    %1255 = vmatmul.mubr.f32.gmra.mrb[0].mxu0 %v1083
    %v1256 = vpop.f32.mrb[0].mxu0
    %v1257 = vadd.f32 %v1123, %v1256
    %v1258 = vpop.f32.mrb[0].mxu0
    %1259 = vmatprep.mubr.f32.mxu0 0.0
    %1260 = vmatmul.mubr.f32.gmra.mrb[0].mxu0 %v1084
    %v1261 = vpop.f32.mrb[0].mxu0
    %v1262 = vadd.f32 %v1123, %v1261
    %v1263 = vpop.f32.mrb[0].mxu0
    %1264 = vmatprep.mubr.f32.mxu0 0.0
    %1265 = vmatmul.mubr.f32.gmra.mrb[0].mxu0 %v1085
    %v1266 = vpop.f32.mrb[0].mxu0
    %v1267 = vadd.f32 %v1123, %v1266
    %v1268 = vpop.f32.mrb[0].mxu0
    %1269 = vmatprep.mubr.f32.mxu0 0.0
    %1270 = vmatmul.mubr.f32.gmra.mrb[0].mxu0 %v1086
    %v1271 = vpop.f32.mrb[0].mxu0
    %v1272 = vadd.f32 %v1123, %v1271
    %v1273 = vpop.f32.mrb[0].mxu0
    %1274 = vmatprep.mubr.f32.mxu0 0.0
    %1275 = vmatmul.mubr.f32.gmra.mrb[0].mxu0 %v1087
    %v1276 = vpop.f32.mrb[0].mxu0
    %v1277 = vadd.f32 %v1123, %v1276
    %v1278 = vpop.f32.mrb[0].mxu0
    %1279 = vmatprep.mubr.f32.mxu0 0.0
    %1280 = vmatmul.mubr.f32.gmra.mrb[0].mxu0 %v1088
    %v1281 = vpop.f32.mrb[0].mxu0
    %v1282 = vadd.f32 %v1123, %v1281
    %v1283 = vpop.f32.mrb[0].mxu0
    %1284 = vmatprep.mubr.f32.mxu0 0.0
    %1285 = vmatmul.mubr.f32.gmra.mrb[0].mxu0 %v1089
    %v1286 = vpop.f32.mrb[0].mxu0
    %v1287 = vadd.f32 %v1123, %v1286
    %v1288 = vpop.f32.mrb[0].mxu0
    %1289 = vmatprep.mubr.f32.mxu0 0.0
    %1290 = vmatmul.mubr.f32.gmra.mrb[0].mxu0 %v1090
    %v1291 = vpop.f32.mrb[0].mxu0
    %v1292 = vadd.f32 %v1123, %v1291
    %v1293 = vpop.f32.mrb[0].mxu0
    %1294 = vmatprep.mubr.f32.mxu0 0.0
    %1295 = vmatmul.mubr.f32.gmra.mrb[0].mxu0 %v1091
    %v1296 = vpop.f32.mrb[0].mxu0
    %v1297 = vadd.f32 %v1123, %v1296
    %v1298 = vpop.f32.mrb[0].mxu0
    %1299 = vmatprep.mubr.f32.mxu0 0.0
    %1300 = vmatmul.mubr.f32.gmra.mrb[0].mxu0 %v1092
    %v1301 = vpop.f32.mrb[0].mxu0
    %v1302 = vadd.f32 %v1123, %v1301
    %v1303 = vpop.f32.mrb[0].mxu0
    %1304 = vmatprep.mubr.f32.mxu0 0.0
    %1305 = vmatmul.mubr.f32.gmra.mrb[0].mxu0 %v1093
    %v1306 = vpop.f32.mrb[0].mxu0
    %v1307 = vadd.f32 %v1123, %v1306
    %v1308 = vpop.f32.mrb[0].mxu0
    %1309 = vmatprep.mubr.f32.mxu0 0.0
    %1310 = vmatmul.mubr.f32.gmra.mrb[0].mxu0 %v1094
    %v1311 = vpop.f32.mrb[0].mxu0
    %v1312 = vadd.f32 %v1123, %v1311
    %v1313 = vpop.f32.mrb[0].mxu0
    %1314 = vmatprep.mubr.f32.mxu0 0.0
    %1315 = vmatmul.mubr.f32.gmra.mrb[0].mxu0 %v1095
    %v1316 = vpop.f32.mrb[0].mxu0
    %v1317 = vadd.f32 %v1123, %v1316
    %v1318 = vpop.f32.mrb[0].mxu0
    %1319 = vmatprep.mubr.f32.mxu0 0.0
    %1320 = vmatmul.mubr.f32.gmra.mrb[0].mxu0 %v1096
    %v1321 = vpop.f32.mrb[0].mxu0
    %v1322 = vadd.f32 %v1123, %v1321
    %v1323 = vpop.f32.mrb[0].mxu0
    %1324 = vmatprep.mubr.f32.mxu0 0.0
    %1325 = vmatmul.mubr.f32.gmra.mrb[0].mxu0 %v1097
    %v1326 = vpop.f32.mrb[0].mxu0
    %v1327 = vadd.f32 %v1123, %v1326
    %v1328 = vpop.f32.mrb[0].mxu0
    %1329 = vmatprep.mubr.f32.mxu0 0.0
    %1330 = vmatmul.mubr.f32.gmra.mrb[0].mxu0 %v1098
    %v1331 = vpop.f32.mrb[0].mxu0
    %v1332 = vadd.f32 %v1123, %v1331
    %v1333 = vpop.f32.mrb[0].mxu0
    %1334 = vmatprep.mubr.f32.mxu0 0.0
    %1335 = vmatmul.mubr.f32.gmra.mrb[0].mxu0 %v1099
    %v1336 = vpop.f32.mrb[0].mxu0
    %v1337 = vadd.f32 %v1123, %v1336
    %v1338 = vpop.f32.mrb[0].mxu0
    %1339 = vmatprep.mubr.f32.mxu0 0.0
    %1340 = vmatmul.mubr.f32.gmra.mrb[0].mxu0 %v1100
    %v1341 = vpop.f32.mrb[0].mxu0
    %v1342 = vadd.f32 %v1123, %v1341
    %v1343 = vpop.f32.mrb[0].mxu0
    %1344 = vmatprep.mubr.f32.mxu0 0.0
    %1345 = vmatmul.mubr.f32.gmra.mrb[0].mxu0 %v1101
    %v1346 = vpop.f32.mrb[0].mxu0
    %v1347 = vadd.f32 %v1123, %v1346
    %v1348 = vpop.f32.mrb[0].mxu0
    %1349 = vdwg.mxu0
    %v1350 = vmul.f32 %v1070, %v1070
    %v1351 = vmul.f32 %v1071, %v1071
    %v1352 = vmul.f32 %v1072, %v1072
    %v1353 = vmul.f32 %v1073, %v1073
    %v1354 = vmul.f32 %v1074, %v1074
    %v1355 = vmul.f32 %v1075, %v1075
    %v1356 = vmul.f32 %v1076, %v1076
    %v1357 = vmul.f32 %v1077, %v1077
    %v1358 = vmul.f32 %v1078, %v1078
    %v1359 = vmul.f32 %v1079, %v1079
    %v1360 = vmul.f32 %v1080, %v1080
    %v1361 = vmul.f32 %v1081, %v1081
    %v1362 = vmul.f32 %v1082, %v1082
    %v1363 = vmul.f32 %v1083, %v1083
    %v1364 = vmul.f32 %v1084, %v1084
    %v1365 = vmul.f32 %v1085, %v1085
    %v1366 = vmul.f32 %v1086, %v1086
    %v1367 = vmul.f32 %v1087, %v1087
    %v1368 = vmul.f32 %v1088, %v1088
    %v1369 = vmul.f32 %v1089, %v1089
    %v1370 = vmul.f32 %v1090, %v1090
    %v1371 = vmul.f32 %v1091, %v1091
    %v1372 = vmul.f32 %v1092, %v1092
    %v1373 = vmul.f32 %v1093, %v1093
    %v1374 = vmul.f32 %v1094, %v1094
    %v1375 = vmul.f32 %v1095, %v1095
    %v1376 = vmul.f32 %v1096, %v1096
    %v1377 = vmul.f32 %v1097, %v1097
    %v1378 = vmul.f32 %v1098, %v1098
    %v1379 = vmul.f32 %v1099, %v1099
    %v1380 = vmul.f32 %v1100, %v1100
    %v1381 = vmul.f32 %v1101, %v1101
    %v1382 = vld [vmem:[#allocation10] sm:$0xff]
    %v1383 = vld [vmem:[#allocation10 + $0x8] sm:$0xff]
    %v1384 = vld [vmem:[#allocation10 + $0x10] sm:$0xff]
    %v1385 = vld [vmem:[#allocation10 + $0x18] sm:$0xff]
    %v1386 = vld [vmem:[#allocation10 + $0x20] sm:$0xff]
    %v1387 = vld [vmem:[#allocation10 + $0x28] sm:$0xff]
    %v1388 = vld [vmem:[#allocation10 + $0x30] sm:$0xff]
    %v1389 = vld [vmem:[#allocation10 + $0x38] sm:$0xff]
    %v1390 = vld [vmem:[#allocation10 + $0x40] sm:$0xff]
    %v1391 = vld [vmem:[#allocation10 + $0x48] sm:$0xff]
    %v1392 = vld [vmem:[#allocation10 + $0x50] sm:$0xff]
    %v1393 = vld [vmem:[#allocation10 + $0x58] sm:$0xff]
    %v1394 = vld [vmem:[#allocation10 + $0x60] sm:$0xff]
    %v1395 = vld [vmem:[#allocation10 + $0x68] sm:$0xff]
    %v1396 = vld [vmem:[#allocation10 + $0x70] sm:$0xff]
    %v1397 = vld [vmem:[#allocation10 + $0x78] sm:$0xff]
    %v1398 = vld [vmem:[%s8] sm:$0x1]
    %v1400 = vlaneseq
    %v1401 = vshrl.u32 %v1400, 7
    %v1402 = vsub.s32 0, %v1401
    %v1403 = vrot.slane %v1398, %v1402
    %1405 = vmatprep.subr.mxu0 0.0
    %1406 = vmatpush1.msra.mxu0 %v1382
    %1407 = vmatprep.subr.mxu0 0.0
    %1408 = vmatpush1.msra.mxu0 %v1383
    %1409 = vmatprep.subr.mxu0 0.0
    %1410 = vmatpush1.msra.mxu0 %v1384
    %1411 = vmatprep.subr.mxu0 0.0
    %1412 = vmatpush1.msra.mxu0 %v1385
    %1413 = vmatprep.subr.mxu0 0.0
    %1414 = vmatpush1.msra.mxu0 %v1386
    %1415 = vmatprep.subr.mxu0 0.0
    %1416 = vmatpush1.msra.mxu0 %v1387
    %1417 = vmatprep.subr.mxu0 0.0
    %1418 = vmatpush1.msra.mxu0 %v1388
    %1419 = vmatprep.subr.mxu0 0.0
    %1420 = vmatpush1.msra.mxu0 %v1389
    %1421 = vmatprep.subr.mxu0 0.0
    %1422 = vmatpush1.msra.mxu0 %v1390
    %1423 = vmatprep.subr.mxu0 0.0
    %1424 = vmatpush1.msra.mxu0 %v1391
    %1425 = vmatprep.subr.mxu0 0.0
    %1426 = vmatpush1.msra.mxu0 %v1392
    %1427 = vmatprep.subr.mxu0 0.0
    %1428 = vmatpush1.msra.mxu0 %v1393
    %1429 = vmatprep.subr.mxu0 0.0
    %1430 = vmatpush1.msra.mxu0 %v1394
    %1431 = vmatprep.subr.mxu0 0.0
    %1432 = vmatpush1.msra.mxu0 %v1395
    %1433 = vmatprep.subr.mxu0 0.0
    %1434 = vmatpush1.msra.mxu0 %v1396
    %1435 = vmatprep.subr.mxu0 0.0
    %1436 = vmatpush1.msra.mxu0 %v1397
    %1437 = vmatprep.subr.mxu0 0.0
    %1438 = vmatpush1.msra.mxu0 0.0
    %1439 = vmatprep.subr.mxu0 0.0
    %1440 = vmatpush1.msra.mxu0 0.0
    %1441 = vmatprep.subr.mxu0 0.0
    %1442 = vmatpush1.msra.mxu0 0.0
    %1443 = vmatprep.subr.mxu0 0.0
    %1444 = vmatpush1.msra.mxu0 0.0
    %1445 = vmatprep.subr.mxu0 0.0
    %1446 = vmatpush1.msra.mxu0 0.0
    %1447 = vmatprep.subr.mxu0 0.0
    %1448 = vmatpush1.msra.mxu0 0.0
    %1449 = vmatprep.subr.mxu0 0.0
    %1450 = vmatpush1.msra.mxu0 0.0
    %1451 = vmatprep.subr.mxu0 0.0
    %1452 = vmatpush1.msra.mxu0 0.0
    %1453 = vmatprep.subr.mxu0 0.0
    %1454 = vmatpush1.msra.mxu0 0.0
    %1455 = vmatprep.subr.mxu0 0.0
    %1456 = vmatpush1.msra.mxu0 0.0
    %1457 = vmatprep.subr.mxu0 0.0
    %1458 = vmatpush1.msra.mxu0 0.0
    %1459 = vmatprep.subr.mxu0 0.0
    %1460 = vmatpush1.msra.mxu0 0.0
    %1461 = vmatprep.subr.mxu0 0.0
    %1462 = vmatpush1.msra.mxu0 0.0
    %1463 = vmatprep.subr.mxu0 0.0
    %1464 = vmatpush1.msra.mxu0 0.0
    %1465 = vmatprep.subr.mxu0 0.0
    %1466 = vmatpush1.msra.mxu0 0.0
    %1467 = vmatprep.subr.mxu0 0.0
    %1468 = vmatpush1.msra.mxu0 0.0
    %1469 = vmatprep.mubr.f32.mxu0 0.0
    %1470 = vmatmul.mubr.f32.gmra.mrb[0].mxu0 %v1350
    %v1471 = vpop.f32.mrb[0].mxu0
    %v1472 = vadd.f32 %v1403, %v1471
    %v1473 = vpop.f32.mrb[0].mxu0
    %1474 = vmatprep.mubr.f32.mxu0 0.0
    %1475 = vmatmul.mubr.f32.gmra.mrb[0].mxu0 %v1351
    %v1476 = vpop.f32.mrb[0].mxu0
    %v1477 = vadd.f32 %v1403, %v1476
    %v1478 = vpop.f32.mrb[0].mxu0
    %1479 = vmatprep.mubr.f32.mxu0 0.0
    %1480 = vmatmul.mubr.f32.gmra.mrb[0].mxu0 %v1352
    %v1481 = vpop.f32.mrb[0].mxu0
    %v1482 = vadd.f32 %v1403, %v1481
    %v1483 = vpop.f32.mrb[0].mxu0
    %1484 = vmatprep.mubr.f32.mxu0 0.0
    %1485 = vmatmul.mubr.f32.gmra.mrb[0].mxu0 %v1353
    %v1486 = vpop.f32.mrb[0].mxu0
    %v1487 = vadd.f32 %v1403, %v1486
    %v1488 = vpop.f32.mrb[0].mxu0
    %1489 = vmatprep.mubr.f32.mxu0 0.0
    %1490 = vmatmul.mubr.f32.gmra.mrb[0].mxu0 %v1354
    %v1491 = vpop.f32.mrb[0].mxu0
    %v1492 = vadd.f32 %v1403, %v1491
    %v1493 = vpop.f32.mrb[0].mxu0
    %1494 = vmatprep.mubr.f32.mxu0 0.0
    %1495 = vmatmul.mubr.f32.gmra.mrb[0].mxu0 %v1355
    %v1496 = vpop.f32.mrb[0].mxu0
    %v1497 = vadd.f32 %v1403, %v1496
    %v1498 = vpop.f32.mrb[0].mxu0
    %1499 = vmatprep.mubr.f32.mxu0 0.0
    %1500 = vmatmul.mubr.f32.gmra.mrb[0].mxu0 %v1356
    %v1501 = vpop.f32.mrb[0].mxu0
    %v1502 = vadd.f32 %v1403, %v1501
    %v1503 = vpop.f32.mrb[0].mxu0
    %1504 = vmatprep.mubr.f32.mxu0 0.0
    %1505 = vmatmul.mubr.f32.gmra.mrb[0].mxu0 %v1357
    %v1506 = vpop.f32.mrb[0].mxu0
    %v1507 = vadd.f32 %v1403, %v1506
    %v1508 = vpop.f32.mrb[0].mxu0
    %1509 = vmatprep.mubr.f32.mxu0 0.0
    %1510 = vmatmul.mubr.f32.gmra.mrb[0].mxu0 %v1358
    %v1511 = vpop.f32.mrb[0].mxu0
    %v1512 = vadd.f32 %v1403, %v1511
    %v1513 = vpop.f32.mrb[0].mxu0
    %1514 = vmatprep.mubr.f32.mxu0 0.0
    %1515 = vmatmul.mubr.f32.gmra.mrb[0].mxu0 %v1359
    %v1516 = vpop.f32.mrb[0].mxu0
    %v1517 = vadd.f32 %v1403, %v1516
    %v1518 = vpop.f32.mrb[0].mxu0
    %1519 = vmatprep.mubr.f32.mxu0 0.0
    %1520 = vmatmul.mubr.f32.gmra.mrb[0].mxu0 %v1360
    %v1521 = vpop.f32.mrb[0].mxu0
    %v1522 = vadd.f32 %v1403, %v1521
    %v1523 = vpop.f32.mrb[0].mxu0
    %1524 = vmatprep.mubr.f32.mxu0 0.0
    %1525 = vmatmul.mubr.f32.gmra.mrb[0].mxu0 %v1361
    %v1526 = vpop.f32.mrb[0].mxu0
    %v1527 = vadd.f32 %v1403, %v1526
    %v1528 = vpop.f32.mrb[0].mxu0
    %1529 = vmatprep.mubr.f32.mxu0 0.0
    %1530 = vmatmul.mubr.f32.gmra.mrb[0].mxu0 %v1362
    %v1531 = vpop.f32.mrb[0].mxu0
    %v1532 = vadd.f32 %v1403, %v1531
    %v1533 = vpop.f32.mrb[0].mxu0
    %1534 = vmatprep.mubr.f32.mxu0 0.0
    %1535 = vmatmul.mubr.f32.gmra.mrb[0].mxu0 %v1363
    %v1536 = vpop.f32.mrb[0].mxu0
    %v1537 = vadd.f32 %v1403, %v1536
    %v1538 = vpop.f32.mrb[0].mxu0
    %1539 = vmatprep.mubr.f32.mxu0 0.0
    %1540 = vmatmul.mubr.f32.gmra.mrb[0].mxu0 %v1364
    %v1541 = vpop.f32.mrb[0].mxu0
    %v1542 = vadd.f32 %v1403, %v1541
    %v1543 = vpop.f32.mrb[0].mxu0
    %1544 = vmatprep.mubr.f32.mxu0 0.0
    %1545 = vmatmul.mubr.f32.gmra.mrb[0].mxu0 %v1365
    %v1546 = vpop.f32.mrb[0].mxu0
    %v1547 = vadd.f32 %v1403, %v1546
    %v1548 = vpop.f32.mrb[0].mxu0
    %1549 = vmatprep.mubr.f32.mxu0 0.0
    %1550 = vmatmul.mubr.f32.gmra.mrb[0].mxu0 %v1366
    %v1551 = vpop.f32.mrb[0].mxu0
    %v1552 = vadd.f32 %v1403, %v1551
    %v1553 = vpop.f32.mrb[0].mxu0
    %1554 = vmatprep.mubr.f32.mxu0 0.0
    %1555 = vmatmul.mubr.f32.gmra.mrb[0].mxu0 %v1367
    %v1556 = vpop.f32.mrb[0].mxu0
    %v1557 = vadd.f32 %v1403, %v1556
    %v1558 = vpop.f32.mrb[0].mxu0
    %1559 = vmatprep.mubr.f32.mxu0 0.0
    %1560 = vmatmul.mubr.f32.gmra.mrb[0].mxu0 %v1368
    %v1561 = vpop.f32.mrb[0].mxu0
    %v1562 = vadd.f32 %v1403, %v1561
    %v1563 = vpop.f32.mrb[0].mxu0
    %1564 = vmatprep.mubr.f32.mxu0 0.0
    %1565 = vmatmul.mubr.f32.gmra.mrb[0].mxu0 %v1369
    %v1566 = vpop.f32.mrb[0].mxu0
    %v1567 = vadd.f32 %v1403, %v1566
    %v1568 = vpop.f32.mrb[0].mxu0
    %1569 = vmatprep.mubr.f32.mxu0 0.0
    %1570 = vmatmul.mubr.f32.gmra.mrb[0].mxu0 %v1370
    %v1571 = vpop.f32.mrb[0].mxu0
    %v1572 = vadd.f32 %v1403, %v1571
    %v1573 = vpop.f32.mrb[0].mxu0
    %1574 = vmatprep.mubr.f32.mxu0 0.0
    %1575 = vmatmul.mubr.f32.gmra.mrb[0].mxu0 %v1371
    %v1576 = vpop.f32.mrb[0].mxu0
    %v1577 = vadd.f32 %v1403, %v1576
    %v1578 = vpop.f32.mrb[0].mxu0
    %1579 = vmatprep.mubr.f32.mxu0 0.0
    %1580 = vmatmul.mubr.f32.gmra.mrb[0].mxu0 %v1372
    %v1581 = vpop.f32.mrb[0].mxu0
    %v1582 = vadd.f32 %v1403, %v1581
    %v1583 = vpop.f32.mrb[0].mxu0
    %1584 = vmatprep.mubr.f32.mxu0 0.0
    %1585 = vmatmul.mubr.f32.gmra.mrb[0].mxu0 %v1373
    %v1586 = vpop.f32.mrb[0].mxu0
    %v1587 = vadd.f32 %v1403, %v1586
    %v1588 = vpop.f32.mrb[0].mxu0
    %1589 = vmatprep.mubr.f32.mxu0 0.0
    %1590 = vmatmul.mubr.f32.gmra.mrb[0].mxu0 %v1374
    %v1591 = vpop.f32.mrb[0].mxu0
    %v1592 = vadd.f32 %v1403, %v1591
    %v1593 = vpop.f32.mrb[0].mxu0
    %1594 = vmatprep.mubr.f32.mxu0 0.0
    %1595 = vmatmul.mubr.f32.gmra.mrb[0].mxu0 %v1375
    %v1596 = vpop.f32.mrb[0].mxu0
    %v1597 = vadd.f32 %v1403, %v1596
    %v1598 = vpop.f32.mrb[0].mxu0
    %1599 = vmatprep.mubr.f32.mxu0 0.0
    %1600 = vmatmul.mubr.f32.gmra.mrb[0].mxu0 %v1376
    %v1601 = vpop.f32.mrb[0].mxu0
    %v1602 = vadd.f32 %v1403, %v1601
    %v1603 = vpop.f32.mrb[0].mxu0
    %1604 = vmatprep.mubr.f32.mxu0 0.0
    %1605 = vmatmul.mubr.f32.gmra.mrb[0].mxu0 %v1377
    %v1606 = vpop.f32.mrb[0].mxu0
    %v1607 = vadd.f32 %v1403, %v1606
    %v1608 = vpop.f32.mrb[0].mxu0
    %1609 = vmatprep.mubr.f32.mxu0 0.0
    %1610 = vmatmul.mubr.f32.gmra.mrb[0].mxu0 %v1378
    %v1611 = vpop.f32.mrb[0].mxu0
    %v1612 = vadd.f32 %v1403, %v1611
    %v1613 = vpop.f32.mrb[0].mxu0
    %1614 = vmatprep.mubr.f32.mxu0 0.0
    %1615 = vmatmul.mubr.f32.gmra.mrb[0].mxu0 %v1379
    %v1616 = vpop.f32.mrb[0].mxu0
    %v1617 = vadd.f32 %v1403, %v1616
    %v1618 = vpop.f32.mrb[0].mxu0
    %1619 = vmatprep.mubr.f32.mxu0 0.0
    %1620 = vmatmul.mubr.f32.gmra.mrb[0].mxu0 %v1380
    %v1621 = vpop.f32.mrb[0].mxu0
    %v1622 = vadd.f32 %v1403, %v1621
    %v1623 = vpop.f32.mrb[0].mxu0
    %1624 = vmatprep.mubr.f32.mxu0 0.0
    %1625 = vmatmul.mubr.f32.gmra.mrb[0].mxu0 %v1381
    %v1626 = vpop.f32.mrb[0].mxu0
    %v1627 = vadd.f32 %v1403, %v1626
    %v1628 = vpop.f32.mrb[0].mxu0
    %1629 = vdwg.mxu0
    %v1630 = vrsqrt.pop %v1472
    %v1631 = vmul.f32 %v1472, %v1630
    %vm1632 = vcmp.eq.f32.partialorder %v1472, inf
    %v1633 = vsel %vm1632, %v1472, %v1631
    %vm1634 = vcmp.eq.f32.partialorder %v1472, 0.0
    %v1635 = vand.u32 %v1472, 2147483648
    %v1636 = vsel %vm1634, %v1635, %v1633
    %v1637 = vrsqrt.pop %v1477
    %v1638 = vmul.f32 %v1477, %v1637
    %vm1639 = vcmp.eq.f32.partialorder %v1477, inf
    %v1640 = vsel %vm1639, %v1477, %v1638
    %vm1641 = vcmp.eq.f32.partialorder %v1477, 0.0
    %v1642 = vand.u32 %v1477, 2147483648
    %v1643 = vsel %vm1641, %v1642, %v1640
    %v1644 = vrsqrt.pop %v1482
    %v1645 = vmul.f32 %v1482, %v1644
    %vm1646 = vcmp.eq.f32.partialorder %v1482, inf
    %v1647 = vsel %vm1646, %v1482, %v1645
    %vm1648 = vcmp.eq.f32.partialorder %v1482, 0.0
    %v1649 = vand.u32 %v1482, 2147483648
    %v1650 = vsel %vm1648, %v1649, %v1647
    %v1651 = vrsqrt.pop %v1487
    %v1652 = vmul.f32 %v1487, %v1651
    %vm1653 = vcmp.eq.f32.partialorder %v1487, inf
    %v1654 = vsel %vm1653, %v1487, %v1652
    %vm1655 = vcmp.eq.f32.partialorder %v1487, 0.0
    %v1656 = vand.u32 %v1487, 2147483648
    %v1657 = vsel %vm1655, %v1656, %v1654
    %v1658 = vrsqrt.pop %v1492
    %v1659 = vmul.f32 %v1492, %v1658
    %vm1660 = vcmp.eq.f32.partialorder %v1492, inf
    %v1661 = vsel %vm1660, %v1492, %v1659
    %vm1662 = vcmp.eq.f32.partialorder %v1492, 0.0
    %v1663 = vand.u32 %v1492, 2147483648
    %v1664 = vsel %vm1662, %v1663, %v1661
    %v1665 = vrsqrt.pop %v1497
    %v1666 = vmul.f32 %v1497, %v1665
    %vm1667 = vcmp.eq.f32.partialorder %v1497, inf
    %v1668 = vsel %vm1667, %v1497, %v1666
    %vm1669 = vcmp.eq.f32.partialorder %v1497, 0.0
    %v1670 = vand.u32 %v1497, 2147483648
    %v1671 = vsel %vm1669, %v1670, %v1668
    %v1672 = vrsqrt.pop %v1502
    %v1673 = vmul.f32 %v1502, %v1672
    %vm1674 = vcmp.eq.f32.partialorder %v1502, inf
    %v1675 = vsel %vm1674, %v1502, %v1673
    %vm1676 = vcmp.eq.f32.partialorder %v1502, 0.0
    %v1677 = vand.u32 %v1502, 2147483648
    %v1678 = vsel %vm1676, %v1677, %v1675
    %v1679 = vrsqrt.pop %v1507
    %v1680 = vmul.f32 %v1507, %v1679
    %vm1681 = vcmp.eq.f32.partialorder %v1507, inf
    %v1682 = vsel %vm1681, %v1507, %v1680
    %vm1683 = vcmp.eq.f32.partialorder %v1507, 0.0
    %v1684 = vand.u32 %v1507, 2147483648
    %v1685 = vsel %vm1683, %v1684, %v1682
    %v1686 = vrsqrt.pop %v1512
    %v1687 = vmul.f32 %v1512, %v1686
    %vm1688 = vcmp.eq.f32.partialorder %v1512, inf
    %v1689 = vsel %vm1688, %v1512, %v1687
    %vm1690 = vcmp.eq.f32.partialorder %v1512, 0.0
    %v1691 = vand.u32 %v1512, 2147483648
    %v1692 = vsel %vm1690, %v1691, %v1689
    %v1693 = vrsqrt.pop %v1517
    %v1694 = vmul.f32 %v1517, %v1693
    %vm1695 = vcmp.eq.f32.partialorder %v1517, inf
    %v1696 = vsel %vm1695, %v1517, %v1694
    %vm1697 = vcmp.eq.f32.partialorder %v1517, 0.0
    %v1698 = vand.u32 %v1517, 2147483648
    %v1699 = vsel %vm1697, %v1698, %v1696
    %v1700 = vrsqrt.pop %v1522
    %v1701 = vmul.f32 %v1522, %v1700
    %vm1702 = vcmp.eq.f32.partialorder %v1522, inf
    %v1703 = vsel %vm1702, %v1522, %v1701
    %vm1704 = vcmp.eq.f32.partialorder %v1522, 0.0
    %v1705 = vand.u32 %v1522, 2147483648
    %v1706 = vsel %vm1704, %v1705, %v1703
    %v1707 = vrsqrt.pop %v1527
    %v1708 = vmul.f32 %v1527, %v1707
    %vm1709 = vcmp.eq.f32.partialorder %v1527, inf
    %v1710 = vsel %vm1709, %v1527, %v1708
    %vm1711 = vcmp.eq.f32.partialorder %v1527, 0.0
    %v1712 = vand.u32 %v1527, 2147483648
    %v1713 = vsel %vm1711, %v1712, %v1710
    %v1714 = vrsqrt.pop %v1532
    %v1715 = vmul.f32 %v1532, %v1714
    %vm1716 = vcmp.eq.f32.partialorder %v1532, inf
    %v1717 = vsel %vm1716, %v1532, %v1715
    %vm1718 = vcmp.eq.f32.partialorder %v1532, 0.0
    %v1719 = vand.u32 %v1532, 2147483648
    %v1720 = vsel %vm1718, %v1719, %v1717
    %v1721 = vrsqrt.pop %v1537
    %v1722 = vmul.f32 %v1537, %v1721
    %vm1723 = vcmp.eq.f32.partialorder %v1537, inf
    %v1724 = vsel %vm1723, %v1537, %v1722
    %vm1725 = vcmp.eq.f32.partialorder %v1537, 0.0
    %v1726 = vand.u32 %v1537, 2147483648
    %v1727 = vsel %vm1725, %v1726, %v1724
    %v1728 = vrsqrt.pop %v1542
    %v1729 = vmul.f32 %v1542, %v1728
    %vm1730 = vcmp.eq.f32.partialorder %v1542, inf
    %v1731 = vsel %vm1730, %v1542, %v1729
    %vm1732 = vcmp.eq.f32.partialorder %v1542, 0.0
    %v1733 = vand.u32 %v1542, 2147483648
    %v1734 = vsel %vm1732, %v1733, %v1731
    %v1735 = vrsqrt.pop %v1547
    %v1736 = vmul.f32 %v1547, %v1735
    %vm1737 = vcmp.eq.f32.partialorder %v1547, inf
    %v1738 = vsel %vm1737, %v1547, %v1736
    %vm1739 = vcmp.eq.f32.partialorder %v1547, 0.0
    %v1740 = vand.u32 %v1547, 2147483648
    %v1741 = vsel %vm1739, %v1740, %v1738
    %v1742 = vrsqrt.pop %v1552
    %v1743 = vmul.f32 %v1552, %v1742
    %vm1744 = vcmp.eq.f32.partialorder %v1552, inf
    %v1745 = vsel %vm1744, %v1552, %v1743
    %vm1746 = vcmp.eq.f32.partialorder %v1552, 0.0
    %v1747 = vand.u32 %v1552, 2147483648
    %v1748 = vsel %vm1746, %v1747, %v1745
    %v1749 = vrsqrt.pop %v1557
    %v1750 = vmul.f32 %v1557, %v1749
    %vm1751 = vcmp.eq.f32.partialorder %v1557, inf
    %v1752 = vsel %vm1751, %v1557, %v1750
    %vm1753 = vcmp.eq.f32.partialorder %v1557, 0.0
    %v1754 = vand.u32 %v1557, 2147483648
    %v1755 = vsel %vm1753, %v1754, %v1752
    %v1756 = vrsqrt.pop %v1562
    %v1757 = vmul.f32 %v1562, %v1756
    %vm1758 = vcmp.eq.f32.partialorder %v1562, inf
    %v1759 = vsel %vm1758, %v1562, %v1757
    %vm1760 = vcmp.eq.f32.partialorder %v1562, 0.0
    %v1761 = vand.u32 %v1562, 2147483648
    %v1762 = vsel %vm1760, %v1761, %v1759
    %v1763 = vrsqrt.pop %v1567
    %v1764 = vmul.f32 %v1567, %v1763
    %vm1765 = vcmp.eq.f32.partialorder %v1567, inf
    %v1766 = vsel %vm1765, %v1567, %v1764
    %vm1767 = vcmp.eq.f32.partialorder %v1567, 0.0
    %v1768 = vand.u32 %v1567, 2147483648
    %v1769 = vsel %vm1767, %v1768, %v1766
    %v1770 = vrsqrt.pop %v1572
    %v1771 = vmul.f32 %v1572, %v1770
    %vm1772 = vcmp.eq.f32.partialorder %v1572, inf
    %v1773 = vsel %vm1772, %v1572, %v1771
    %vm1774 = vcmp.eq.f32.partialorder %v1572, 0.0
    %v1775 = vand.u32 %v1572, 2147483648
    %v1776 = vsel %vm1774, %v1775, %v1773
    %v1777 = vrsqrt.pop %v1577
    %v1778 = vmul.f32 %v1577, %v1777
    %vm1779 = vcmp.eq.f32.partialorder %v1577, inf
    %v1780 = vsel %vm1779, %v1577, %v1778
    %vm1781 = vcmp.eq.f32.partialorder %v1577, 0.0
    %v1782 = vand.u32 %v1577, 2147483648
    %v1783 = vsel %vm1781, %v1782, %v1780
    %v1784 = vrsqrt.pop %v1582
    %v1785 = vmul.f32 %v1582, %v1784
    %vm1786 = vcmp.eq.f32.partialorder %v1582, inf
    %v1787 = vsel %vm1786, %v1582, %v1785
    %vm1788 = vcmp.eq.f32.partialorder %v1582, 0.0
    %v1789 = vand.u32 %v1582, 2147483648
    %v1790 = vsel %vm1788, %v1789, %v1787
    %v1791 = vrsqrt.pop %v1587
    %v1792 = vmul.f32 %v1587, %v1791
    %vm1793 = vcmp.eq.f32.partialorder %v1587, inf
    %v1794 = vsel %vm1793, %v1587, %v1792
    %vm1795 = vcmp.eq.f32.partialorder %v1587, 0.0
    %v1796 = vand.u32 %v1587, 2147483648
    %v1797 = vsel %vm1795, %v1796, %v1794
    %v1798 = vrsqrt.pop %v1592
    %v1799 = vmul.f32 %v1592, %v1798
    %vm1800 = vcmp.eq.f32.partialorder %v1592, inf
    %v1801 = vsel %vm1800, %v1592, %v1799
    %vm1802 = vcmp.eq.f32.partialorder %v1592, 0.0
    %v1803 = vand.u32 %v1592, 2147483648
    %v1804 = vsel %vm1802, %v1803, %v1801
    %v1805 = vrsqrt.pop %v1597
    %v1806 = vmul.f32 %v1597, %v1805
    %vm1807 = vcmp.eq.f32.partialorder %v1597, inf
    %v1808 = vsel %vm1807, %v1597, %v1806
    %vm1809 = vcmp.eq.f32.partialorder %v1597, 0.0
    %v1810 = vand.u32 %v1597, 2147483648
    %v1811 = vsel %vm1809, %v1810, %v1808
    %v1812 = vrsqrt.pop %v1602
    %v1813 = vmul.f32 %v1602, %v1812
    %vm1814 = vcmp.eq.f32.partialorder %v1602, inf
    %v1815 = vsel %vm1814, %v1602, %v1813
    %vm1816 = vcmp.eq.f32.partialorder %v1602, 0.0
    %v1817 = vand.u32 %v1602, 2147483648
    %v1818 = vsel %vm1816, %v1817, %v1815
    %v1819 = vrsqrt.pop %v1607
    %v1820 = vmul.f32 %v1607, %v1819
    %vm1821 = vcmp.eq.f32.partialorder %v1607, inf
    %v1822 = vsel %vm1821, %v1607, %v1820
    %vm1823 = vcmp.eq.f32.partialorder %v1607, 0.0
    %v1824 = vand.u32 %v1607, 2147483648
    %v1825 = vsel %vm1823, %v1824, %v1822
    %v1826 = vrsqrt.pop %v1612
    %v1827 = vmul.f32 %v1612, %v1826
    %vm1828 = vcmp.eq.f32.partialorder %v1612, inf
    %v1829 = vsel %vm1828, %v1612, %v1827
    %vm1830 = vcmp.eq.f32.partialorder %v1612, 0.0
    %v1831 = vand.u32 %v1612, 2147483648
    %v1832 = vsel %vm1830, %v1831, %v1829
    %v1833 = vrsqrt.pop %v1617
    %v1834 = vmul.f32 %v1617, %v1833
    %vm1835 = vcmp.eq.f32.partialorder %v1617, inf
    %v1836 = vsel %vm1835, %v1617, %v1834
    %vm1837 = vcmp.eq.f32.partialorder %v1617, 0.0
    %v1838 = vand.u32 %v1617, 2147483648
    %v1839 = vsel %vm1837, %v1838, %v1836
    %v1840 = vrsqrt.pop %v1622
    %v1841 = vmul.f32 %v1622, %v1840
    %vm1842 = vcmp.eq.f32.partialorder %v1622, inf
    %v1843 = vsel %vm1842, %v1622, %v1841
    %vm1844 = vcmp.eq.f32.partialorder %v1622, 0.0
    %v1845 = vand.u32 %v1622, 2147483648
    %v1846 = vsel %vm1844, %v1845, %v1843
    %v1847 = vrsqrt.pop %v1627
    %v1848 = vmul.f32 %v1627, %v1847
    %vm1849 = vcmp.eq.f32.partialorder %v1627, inf
    %v1850 = vsel %vm1849, %v1627, %v1848
    %vm1851 = vcmp.eq.f32.partialorder %v1627, 0.0
    %v1852 = vand.u32 %v1627, 2147483648
    %v1853 = vsel %vm1851, %v1852, %v1850
    %v1854 = vld [vmem:[#allocation16] sm:$0xff]
    %v1855 = vld [vmem:[#allocation16 + $0x8] sm:$0xff]
    %v1856 = vld [vmem:[#allocation16 + $0x10] sm:$0xff]
    %v1857 = vld [vmem:[#allocation16 + $0x18] sm:$0xff]
    %v1858 = vld [vmem:[#allocation16 + $0x20] sm:$0xff]
    %v1859 = vld [vmem:[#allocation16 + $0x28] sm:$0xff]
    %v1860 = vld [vmem:[#allocation16 + $0x30] sm:$0xff]
    %v1861 = vld [vmem:[#allocation16 + $0x38] sm:$0xff]
    %v1862 = vld [vmem:[#allocation16 + $0x40] sm:$0xff]
    %v1863 = vld [vmem:[#allocation16 + $0x48] sm:$0xff]
    %v1864 = vld [vmem:[#allocation16 + $0x50] sm:$0xff]
    %v1865 = vld [vmem:[#allocation16 + $0x58] sm:$0xff]
    %v1866 = vld [vmem:[#allocation16 + $0x60] sm:$0xff]
    %v1867 = vld [vmem:[#allocation16 + $0x68] sm:$0xff]
    %v1868 = vld [vmem:[#allocation16 + $0x70] sm:$0xff]
    %v1869 = vld [vmem:[#allocation16 + $0x78] sm:$0xff]
    %v1870 = vld [vmem:[#allocation16 + $0x80] sm:$0xff]
    %v1871 = vld [vmem:[#allocation16 + $0x88] sm:$0xff]
    %v1872 = vld [vmem:[#allocation16 + $0x90] sm:$0xff]
    %v1873 = vld [vmem:[#allocation16 + $0x98] sm:$0xff]
    %v1874 = vld [vmem:[#allocation16 + $0xa0] sm:$0xff]
    %v1875 = vld [vmem:[#allocation16 + $0xa8] sm:$0xff]
    %v1876 = vld [vmem:[#allocation16 + $0xb0] sm:$0xff]
    %v1877 = vld [vmem:[#allocation16 + $0xb8] sm:$0xff]
    %v1878 = vld [vmem:[#allocation16 + $0xc0] sm:$0xff]
    %v1879 = vld [vmem:[#allocation16 + $0xc8] sm:$0xff]
    %v1880 = vld [vmem:[#allocation16 + $0xd0] sm:$0xff]
    %v1881 = vld [vmem:[#allocation16 + $0xd8] sm:$0xff]
    %v1882 = vld [vmem:[#allocation16 + $0xe0] sm:$0xff]
    %v1883 = vld [vmem:[#allocation16 + $0xe8] sm:$0xff]
    %v1884 = vld [vmem:[#allocation16 + $0xf0] sm:$0xff]
    %v1885 = vld [vmem:[#allocation16 + $0xf8] sm:$0xff]
    %v1886 = vmul.f32 %v1636, %v1854
    %v1887 = vmul.f32 %v1643, %v1855
    %v1888 = vmul.f32 %v1650, %v1856
    %v1889 = vmul.f32 %v1657, %v1857
    %v1890 = vmul.f32 %v1664, %v1858
    %v1891 = vmul.f32 %v1671, %v1859
    %v1892 = vmul.f32 %v1678, %v1860
    %v1893 = vmul.f32 %v1685, %v1861
    %v1894 = vmul.f32 %v1692, %v1862
    %v1895 = vmul.f32 %v1699, %v1863
    %v1896 = vmul.f32 %v1706, %v1864
    %v1897 = vmul.f32 %v1713, %v1865
    %v1898 = vmul.f32 %v1720, %v1866
    %v1899 = vmul.f32 %v1727, %v1867
    %v1900 = vmul.f32 %v1734, %v1868
    %v1901 = vmul.f32 %v1741, %v1869
    %v1902 = vmul.f32 %v1748, %v1870
    %v1903 = vmul.f32 %v1755, %v1871
    %v1904 = vmul.f32 %v1762, %v1872
    %v1905 = vmul.f32 %v1769, %v1873
    %v1906 = vmul.f32 %v1776, %v1874
    %v1907 = vmul.f32 %v1783, %v1875
    %v1908 = vmul.f32 %v1790, %v1876
    %v1909 = vmul.f32 %v1797, %v1877
    %v1910 = vmul.f32 %v1804, %v1878
    %v1911 = vmul.f32 %v1811, %v1879
    %v1912 = vmul.f32 %v1818, %v1880
    %v1913 = vmul.f32 %v1825, %v1881
    %v1914 = vmul.f32 %v1832, %v1882
    %v1915 = vmul.f32 %v1839, %v1883
    %v1916 = vmul.f32 %v1846, %v1884
    %v1917 = vmul.f32 %v1853, %v1885
    %v1918 = vadd.f32 %v1192, %v1886
    %v1919 = vadd.f32 %v1197, %v1887
    %v1920 = vadd.f32 %v1202, %v1888
    %v1921 = vadd.f32 %v1207, %v1889
    %v1922 = vadd.f32 %v1212, %v1890
    %v1923 = vadd.f32 %v1217, %v1891
    %v1924 = vadd.f32 %v1222, %v1892
    %v1925 = vadd.f32 %v1227, %v1893
    %v1926 = vadd.f32 %v1232, %v1894
    %v1927 = vadd.f32 %v1237, %v1895
    %v1928 = vadd.f32 %v1242, %v1896
    %v1929 = vadd.f32 %v1247, %v1897
    %v1930 = vadd.f32 %v1252, %v1898
    %v1931 = vadd.f32 %v1257, %v1899
    %v1932 = vadd.f32 %v1262, %v1900
    %v1933 = vadd.f32 %v1267, %v1901
    %v1934 = vadd.f32 %v1272, %v1902
    %v1935 = vadd.f32 %v1277, %v1903
    %v1936 = vadd.f32 %v1282, %v1904
    %v1937 = vadd.f32 %v1287, %v1905
    %v1938 = vadd.f32 %v1292, %v1906
    %v1939 = vadd.f32 %v1297, %v1907
    %v1940 = vadd.f32 %v1302, %v1908
    %v1941 = vadd.f32 %v1307, %v1909
    %v1942 = vadd.f32 %v1312, %v1910
    %v1943 = vadd.f32 %v1317, %v1911
    %v1944 = vadd.f32 %v1322, %v1912
    %v1945 = vadd.f32 %v1327, %v1913
    %v1946 = vadd.f32 %v1332, %v1914
    %v1947 = vadd.f32 %v1337, %v1915
    %v1948 = vadd.f32 %v1342, %v1916
    %v1949 = vadd.f32 %v1347, %v1917
    %v1950 = vmax.f32 %v1918, 0.0
    %v1951 = vmax.f32 %v1919, 0.0
    %v1952 = vmax.f32 %v1920, 0.0
    %v1953 = vmax.f32 %v1921, 0.0
    %v1954 = vmax.f32 %v1922, 0.0
    %v1955 = vmax.f32 %v1923, 0.0
    %v1956 = vmax.f32 %v1924, 0.0
    %v1957 = vmax.f32 %v1925, 0.0
    %v1958 = vmax.f32 %v1926, 0.0
    %v1959 = vmax.f32 %v1927, 0.0
    %v1960 = vmax.f32 %v1928, 0.0
    %v1961 = vmax.f32 %v1929, 0.0
    %v1962 = vmax.f32 %v1930, 0.0
    %v1963 = vmax.f32 %v1931, 0.0
    %v1964 = vmax.f32 %v1932, 0.0
    %v1965 = vmax.f32 %v1933, 0.0
    %v1966 = vmax.f32 %v1934, 0.0
    %v1967 = vmax.f32 %v1935, 0.0
    %v1968 = vmax.f32 %v1936, 0.0
    %v1969 = vmax.f32 %v1937, 0.0
    %v1970 = vmax.f32 %v1938, 0.0
    %v1971 = vmax.f32 %v1939, 0.0
    %v1972 = vmax.f32 %v1940, 0.0
    %v1973 = vmax.f32 %v1941, 0.0
    %v1974 = vmax.f32 %v1942, 0.0
    %v1975 = vmax.f32 %v1943, 0.0
    %v1976 = vmax.f32 %v1944, 0.0
    %v1977 = vmax.f32 %v1945, 0.0
    %v1978 = vmax.f32 %v1946, 0.0
    %v1979 = vmax.f32 %v1947, 0.0
    %v1980 = vmax.f32 %v1948, 0.0
    %v1981 = vmax.f32 %v1949, 0.0
    %v1982 = vld [vmem:[#allocation11] sm:$0xff]
    %v1983 = vld [vmem:[#allocation11 + $0x8] sm:$0xff]
    %v1984 = vld [vmem:[#allocation11 + $0x10] sm:$0xff]
    %v1985 = vld [vmem:[#allocation11 + $0x18] sm:$0xff]
    %v1986 = vld [vmem:[#allocation11 + $0x20] sm:$0xff]
    %v1987 = vld [vmem:[#allocation11 + $0x28] sm:$0xff]
    %v1988 = vld [vmem:[#allocation11 + $0x30] sm:$0xff]
    %v1989 = vld [vmem:[#allocation11 + $0x38] sm:$0xff]
    %v1990 = vld [vmem:[#allocation11 + $0x40] sm:$0xff]
    %v1991 = vld [vmem:[#allocation11 + $0x48] sm:$0xff]
    %v1992 = vld [vmem:[#allocation11 + $0x50] sm:$0xff]
    %v1993 = vld [vmem:[#allocation11 + $0x58] sm:$0xff]
    %v1994 = vld [vmem:[#allocation11 + $0x60] sm:$0xff]
    %v1995 = vld [vmem:[#allocation11 + $0x68] sm:$0xff]
    %v1996 = vld [vmem:[#allocation11 + $0x70] sm:$0xff]
    %v1997 = vld [vmem:[#allocation11 + $0x78] sm:$0xff]
    %v1998 = vld [vmem:[%s11] sm:$0x1]
    %v2000 = vlaneseq
    %v2001 = vshrl.u32 %v2000, 7
    %v2002 = vsub.s32 0, %v2001
    %v2003 = vrot.slane %v1998, %v2002
    %2005 = vmatprep.subr.mxu0 0.0
    %2006 = vmatpush1.msra.mxu0 %v1982
    %2007 = vmatprep.subr.mxu0 0.0
    %2008 = vmatpush1.msra.mxu0 %v1983
    %2009 = vmatprep.subr.mxu0 0.0
    %2010 = vmatpush1.msra.mxu0 %v1984
    %2011 = vmatprep.subr.mxu0 0.0
    %2012 = vmatpush1.msra.mxu0 %v1985
    %2013 = vmatprep.subr.mxu0 0.0
    %2014 = vmatpush1.msra.mxu0 %v1986
    %2015 = vmatprep.subr.mxu0 0.0
    %2016 = vmatpush1.msra.mxu0 %v1987
    %2017 = vmatprep.subr.mxu0 0.0
    %2018 = vmatpush1.msra.mxu0 %v1988
    %2019 = vmatprep.subr.mxu0 0.0
    %2020 = vmatpush1.msra.mxu0 %v1989
    %2021 = vmatprep.subr.mxu0 0.0
    %2022 = vmatpush1.msra.mxu0 %v1990
    %2023 = vmatprep.subr.mxu0 0.0
    %2024 = vmatpush1.msra.mxu0 %v1991
    %2025 = vmatprep.subr.mxu0 0.0
    %2026 = vmatpush1.msra.mxu0 %v1992
    %2027 = vmatprep.subr.mxu0 0.0
    %2028 = vmatpush1.msra.mxu0 %v1993
    %2029 = vmatprep.subr.mxu0 0.0
    %2030 = vmatpush1.msra.mxu0 %v1994
    %2031 = vmatprep.subr.mxu0 0.0
    %2032 = vmatpush1.msra.mxu0 %v1995
    %2033 = vmatprep.subr.mxu0 0.0
    %2034 = vmatpush1.msra.mxu0 %v1996
    %2035 = vmatprep.subr.mxu0 0.0
    %2036 = vmatpush1.msra.mxu0 %v1997
    %2037 = vmatprep.subr.mxu0 0.0
    %2038 = vmatpush1.msra.mxu0 0.0
    %2039 = vmatprep.subr.mxu0 0.0
    %2040 = vmatpush1.msra.mxu0 0.0
    %2041 = vmatprep.subr.mxu0 0.0
    %2042 = vmatpush1.msra.mxu0 0.0
    %2043 = vmatprep.subr.mxu0 0.0
    %2044 = vmatpush1.msra.mxu0 0.0
    %2045 = vmatprep.subr.mxu0 0.0
    %2046 = vmatpush1.msra.mxu0 0.0
    %2047 = vmatprep.subr.mxu0 0.0
    %2048 = vmatpush1.msra.mxu0 0.0
    %2049 = vmatprep.subr.mxu0 0.0
    %2050 = vmatpush1.msra.mxu0 0.0
    %2051 = vmatprep.subr.mxu0 0.0
    %2052 = vmatpush1.msra.mxu0 0.0
    %2053 = vmatprep.subr.mxu0 0.0
    %2054 = vmatpush1.msra.mxu0 0.0
    %2055 = vmatprep.subr.mxu0 0.0
    %2056 = vmatpush1.msra.mxu0 0.0
    %2057 = vmatprep.subr.mxu0 0.0
    %2058 = vmatpush1.msra.mxu0 0.0
    %2059 = vmatprep.subr.mxu0 0.0
    %2060 = vmatpush1.msra.mxu0 0.0
    %2061 = vmatprep.subr.mxu0 0.0
    %2062 = vmatpush1.msra.mxu0 0.0
    %2063 = vmatprep.subr.mxu0 0.0
    %2064 = vmatpush1.msra.mxu0 0.0
    %2065 = vmatprep.subr.mxu0 0.0
    %2066 = vmatpush1.msra.mxu0 0.0
    %2067 = vmatprep.subr.mxu0 0.0
    %2068 = vmatpush1.msra.mxu0 0.0
    %2069 = vmatprep.mubr.f32.mxu0 0.0
    %2070 = vmatmul.mubr.f32.gmra.mrb[0].mxu0 %v1950
    %v2071 = vpop.f32.mrb[0].mxu0
    %v2072 = vadd.f32 %v2003, %v2071
    %v2073 = vpop.f32.mrb[0].mxu0
    %2074 = vmatprep.mubr.f32.mxu0 0.0
    %2075 = vmatmul.mubr.f32.gmra.mrb[0].mxu0 %v1951
    %v2076 = vpop.f32.mrb[0].mxu0
    %v2077 = vadd.f32 %v2003, %v2076
    %v2078 = vpop.f32.mrb[0].mxu0
    %2079 = vmatprep.mubr.f32.mxu0 0.0
    %2080 = vmatmul.mubr.f32.gmra.mrb[0].mxu0 %v1952
    %v2081 = vpop.f32.mrb[0].mxu0
    %v2082 = vadd.f32 %v2003, %v2081
    %v2083 = vpop.f32.mrb[0].mxu0
    %2084 = vmatprep.mubr.f32.mxu0 0.0
    %2085 = vmatmul.mubr.f32.gmra.mrb[0].mxu0 %v1953
    %v2086 = vpop.f32.mrb[0].mxu0
    %v2087 = vadd.f32 %v2003, %v2086
    %v2088 = vpop.f32.mrb[0].mxu0
    %2089 = vmatprep.mubr.f32.mxu0 0.0
    %2090 = vmatmul.mubr.f32.gmra.mrb[0].mxu0 %v1954
    %v2091 = vpop.f32.mrb[0].mxu0
    %v2092 = vadd.f32 %v2003, %v2091
    %v2093 = vpop.f32.mrb[0].mxu0
    %2094 = vmatprep.mubr.f32.mxu0 0.0
    %2095 = vmatmul.mubr.f32.gmra.mrb[0].mxu0 %v1955
    %v2096 = vpop.f32.mrb[0].mxu0
    %v2097 = vadd.f32 %v2003, %v2096
    %v2098 = vpop.f32.mrb[0].mxu0
    %2099 = vmatprep.mubr.f32.mxu0 0.0
    %2100 = vmatmul.mubr.f32.gmra.mrb[0].mxu0 %v1956
    %v2101 = vpop.f32.mrb[0].mxu0
    %v2102 = vadd.f32 %v2003, %v2101
    %v2103 = vpop.f32.mrb[0].mxu0
    %2104 = vmatprep.mubr.f32.mxu0 0.0
    %2105 = vmatmul.mubr.f32.gmra.mrb[0].mxu0 %v1957
    %v2106 = vpop.f32.mrb[0].mxu0
    %v2107 = vadd.f32 %v2003, %v2106
    %v2108 = vpop.f32.mrb[0].mxu0
    %2109 = vmatprep.mubr.f32.mxu0 0.0
    %2110 = vmatmul.mubr.f32.gmra.mrb[0].mxu0 %v1958
    %v2111 = vpop.f32.mrb[0].mxu0
    %v2112 = vadd.f32 %v2003, %v2111
    %v2113 = vpop.f32.mrb[0].mxu0
    %2114 = vmatprep.mubr.f32.mxu0 0.0
    %2115 = vmatmul.mubr.f32.gmra.mrb[0].mxu0 %v1959
    %v2116 = vpop.f32.mrb[0].mxu0
    %v2117 = vadd.f32 %v2003, %v2116
    %v2118 = vpop.f32.mrb[0].mxu0
    %2119 = vmatprep.mubr.f32.mxu0 0.0
    %2120 = vmatmul.mubr.f32.gmra.mrb[0].mxu0 %v1960
    %v2121 = vpop.f32.mrb[0].mxu0
    %v2122 = vadd.f32 %v2003, %v2121
    %v2123 = vpop.f32.mrb[0].mxu0
    %2124 = vmatprep.mubr.f32.mxu0 0.0
    %2125 = vmatmul.mubr.f32.gmra.mrb[0].mxu0 %v1961
    %v2126 = vpop.f32.mrb[0].mxu0
    %v2127 = vadd.f32 %v2003, %v2126
    %v2128 = vpop.f32.mrb[0].mxu0
    %2129 = vmatprep.mubr.f32.mxu0 0.0
    %2130 = vmatmul.mubr.f32.gmra.mrb[0].mxu0 %v1962
    %v2131 = vpop.f32.mrb[0].mxu0
    %v2132 = vadd.f32 %v2003, %v2131
    %v2133 = vpop.f32.mrb[0].mxu0
    %2134 = vmatprep.mubr.f32.mxu0 0.0
    %2135 = vmatmul.mubr.f32.gmra.mrb[0].mxu0 %v1963
    %v2136 = vpop.f32.mrb[0].mxu0
    %v2137 = vadd.f32 %v2003, %v2136
    %v2138 = vpop.f32.mrb[0].mxu0
    %2139 = vmatprep.mubr.f32.mxu0 0.0
    %2140 = vmatmul.mubr.f32.gmra.mrb[0].mxu0 %v1964
    %v2141 = vpop.f32.mrb[0].mxu0
    %v2142 = vadd.f32 %v2003, %v2141
    %v2143 = vpop.f32.mrb[0].mxu0
    %2144 = vmatprep.mubr.f32.mxu0 0.0
    %2145 = vmatmul.mubr.f32.gmra.mrb[0].mxu0 %v1965
    %v2146 = vpop.f32.mrb[0].mxu0
    %v2147 = vadd.f32 %v2003, %v2146
    %v2148 = vpop.f32.mrb[0].mxu0
    %2149 = vmatprep.mubr.f32.mxu0 0.0
    %2150 = vmatmul.mubr.f32.gmra.mrb[0].mxu0 %v1966
    %v2151 = vpop.f32.mrb[0].mxu0
    %v2152 = vadd.f32 %v2003, %v2151
    %v2153 = vpop.f32.mrb[0].mxu0
    %2154 = vmatprep.mubr.f32.mxu0 0.0
    %2155 = vmatmul.mubr.f32.gmra.mrb[0].mxu0 %v1967
    %v2156 = vpop.f32.mrb[0].mxu0
    %v2157 = vadd.f32 %v2003, %v2156
    %v2158 = vpop.f32.mrb[0].mxu0
    %2159 = vmatprep.mubr.f32.mxu0 0.0
    %2160 = vmatmul.mubr.f32.gmra.mrb[0].mxu0 %v1968
    %v2161 = vpop.f32.mrb[0].mxu0
    %v2162 = vadd.f32 %v2003, %v2161
    %v2163 = vpop.f32.mrb[0].mxu0
    %2164 = vmatprep.mubr.f32.mxu0 0.0
    %2165 = vmatmul.mubr.f32.gmra.mrb[0].mxu0 %v1969
    %v2166 = vpop.f32.mrb[0].mxu0
    %v2167 = vadd.f32 %v2003, %v2166
    %v2168 = vpop.f32.mrb[0].mxu0
    %2169 = vmatprep.mubr.f32.mxu0 0.0
    %2170 = vmatmul.mubr.f32.gmra.mrb[0].mxu0 %v1970
    %v2171 = vpop.f32.mrb[0].mxu0
    %v2172 = vadd.f32 %v2003, %v2171
    %v2173 = vpop.f32.mrb[0].mxu0
    %2174 = vmatprep.mubr.f32.mxu0 0.0
    %2175 = vmatmul.mubr.f32.gmra.mrb[0].mxu0 %v1971
    %v2176 = vpop.f32.mrb[0].mxu0
    %v2177 = vadd.f32 %v2003, %v2176
    %v2178 = vpop.f32.mrb[0].mxu0
    %2179 = vmatprep.mubr.f32.mxu0 0.0
    %2180 = vmatmul.mubr.f32.gmra.mrb[0].mxu0 %v1972
    %v2181 = vpop.f32.mrb[0].mxu0
    %v2182 = vadd.f32 %v2003, %v2181
    %v2183 = vpop.f32.mrb[0].mxu0
    %2184 = vmatprep.mubr.f32.mxu0 0.0
    %2185 = vmatmul.mubr.f32.gmra.mrb[0].mxu0 %v1973
    %v2186 = vpop.f32.mrb[0].mxu0
    %v2187 = vadd.f32 %v2003, %v2186
    %v2188 = vpop.f32.mrb[0].mxu0
    %2189 = vmatprep.mubr.f32.mxu0 0.0
    %2190 = vmatmul.mubr.f32.gmra.mrb[0].mxu0 %v1974
    %v2191 = vpop.f32.mrb[0].mxu0
    %v2192 = vadd.f32 %v2003, %v2191
    %v2193 = vpop.f32.mrb[0].mxu0
    %2194 = vmatprep.mubr.f32.mxu0 0.0
    %2195 = vmatmul.mubr.f32.gmra.mrb[0].mxu0 %v1975
    %v2196 = vpop.f32.mrb[0].mxu0
    %v2197 = vadd.f32 %v2003, %v2196
    %v2198 = vpop.f32.mrb[0].mxu0
    %2199 = vmatprep.mubr.f32.mxu0 0.0
    %2200 = vmatmul.mubr.f32.gmra.mrb[0].mxu0 %v1976
    %v2201 = vpop.f32.mrb[0].mxu0
    %v2202 = vadd.f32 %v2003, %v2201
    %v2203 = vpop.f32.mrb[0].mxu0
    %2204 = vmatprep.mubr.f32.mxu0 0.0
    %2205 = vmatmul.mubr.f32.gmra.mrb[0].mxu0 %v1977
    %v2206 = vpop.f32.mrb[0].mxu0
    %v2207 = vadd.f32 %v2003, %v2206
    %v2208 = vpop.f32.mrb[0].mxu0
    %2209 = vmatprep.mubr.f32.mxu0 0.0
    %2210 = vmatmul.mubr.f32.gmra.mrb[0].mxu0 %v1978
    %v2211 = vpop.f32.mrb[0].mxu0
    %v2212 = vadd.f32 %v2003, %v2211
    %v2213 = vpop.f32.mrb[0].mxu0
    %2214 = vmatprep.mubr.f32.mxu0 0.0
    %2215 = vmatmul.mubr.f32.gmra.mrb[0].mxu0 %v1979
    %v2216 = vpop.f32.mrb[0].mxu0
    %v2217 = vadd.f32 %v2003, %v2216
    %v2218 = vpop.f32.mrb[0].mxu0
    %2219 = vmatprep.mubr.f32.mxu0 0.0
    %2220 = vmatmul.mubr.f32.gmra.mrb[0].mxu0 %v1980
    %v2221 = vpop.f32.mrb[0].mxu0
    %v2222 = vadd.f32 %v2003, %v2221
    %v2223 = vpop.f32.mrb[0].mxu0
    %2224 = vmatprep.mubr.f32.mxu0 0.0
    %2225 = vmatmul.mubr.f32.gmra.mrb[0].mxu0 %v1981
    %v2226 = vpop.f32.mrb[0].mxu0
    %v2227 = vadd.f32 %v2003, %v2226
    %v2228 = vpop.f32.mrb[0].mxu0
    %2229 = vdwg.mxu0
    %v2230 = vmul.f32 %v1950, %v1950
    %v2231 = vmul.f32 %v1951, %v1951
    %v2232 = vmul.f32 %v1952, %v1952
    %v2233 = vmul.f32 %v1953, %v1953
    %v2234 = vmul.f32 %v1954, %v1954
    %v2235 = vmul.f32 %v1955, %v1955
    %v2236 = vmul.f32 %v1956, %v1956
    %v2237 = vmul.f32 %v1957, %v1957
    %v2238 = vmul.f32 %v1958, %v1958
    %v2239 = vmul.f32 %v1959, %v1959
    %v2240 = vmul.f32 %v1960, %v1960
    %v2241 = vmul.f32 %v1961, %v1961
    %v2242 = vmul.f32 %v1962, %v1962
    %v2243 = vmul.f32 %v1963, %v1963
    %v2244 = vmul.f32 %v1964, %v1964
    %v2245 = vmul.f32 %v1965, %v1965
    %v2246 = vmul.f32 %v1966, %v1966
    %v2247 = vmul.f32 %v1967, %v1967
    %v2248 = vmul.f32 %v1968, %v1968
    %v2249 = vmul.f32 %v1969, %v1969
    %v2250 = vmul.f32 %v1970, %v1970
    %v2251 = vmul.f32 %v1971, %v1971
    %v2252 = vmul.f32 %v1972, %v1972
    %v2253 = vmul.f32 %v1973, %v1973
    %v2254 = vmul.f32 %v1974, %v1974
    %v2255 = vmul.f32 %v1975, %v1975
    %v2256 = vmul.f32 %v1976, %v1976
    %v2257 = vmul.f32 %v1977, %v1977
    %v2258 = vmul.f32 %v1978, %v1978
    %v2259 = vmul.f32 %v1979, %v1979
    %v2260 = vmul.f32 %v1980, %v1980
    %v2261 = vmul.f32 %v1981, %v1981
    %v2262 = vld [vmem:[#allocation13] sm:$0xff]
    %v2263 = vld [vmem:[#allocation13 + $0x8] sm:$0xff]
    %v2264 = vld [vmem:[#allocation13 + $0x10] sm:$0xff]
    %v2265 = vld [vmem:[#allocation13 + $0x18] sm:$0xff]
    %v2266 = vld [vmem:[#allocation13 + $0x20] sm:$0xff]
    %v2267 = vld [vmem:[#allocation13 + $0x28] sm:$0xff]
    %v2268 = vld [vmem:[#allocation13 + $0x30] sm:$0xff]
    %v2269 = vld [vmem:[#allocation13 + $0x38] sm:$0xff]
    %v2270 = vld [vmem:[#allocation13 + $0x40] sm:$0xff]
    %v2271 = vld [vmem:[#allocation13 + $0x48] sm:$0xff]
    %v2272 = vld [vmem:[#allocation13 + $0x50] sm:$0xff]
    %v2273 = vld [vmem:[#allocation13 + $0x58] sm:$0xff]
    %v2274 = vld [vmem:[#allocation13 + $0x60] sm:$0xff]
    %v2275 = vld [vmem:[#allocation13 + $0x68] sm:$0xff]
    %v2276 = vld [vmem:[#allocation13 + $0x70] sm:$0xff]
    %v2277 = vld [vmem:[#allocation13 + $0x78] sm:$0xff]
    %v2278 = vld [vmem:[%s12] sm:$0x1]
    %v2280 = vlaneseq
    %v2281 = vshrl.u32 %v2280, 7
    %v2282 = vsub.s32 0, %v2281
    %v2283 = vrot.slane %v2278, %v2282
    %2285 = vmatprep.subr.mxu0 0.0
    %2286 = vmatpush1.msra.mxu0 %v2262
    %2287 = vmatprep.subr.mxu0 0.0
    %2288 = vmatpush1.msra.mxu0 %v2263
    %2289 = vmatprep.subr.mxu0 0.0
    %2290 = vmatpush1.msra.mxu0 %v2264
    %2291 = vmatprep.subr.mxu0 0.0
    %2292 = vmatpush1.msra.mxu0 %v2265
    %2293 = vmatprep.subr.mxu0 0.0
    %2294 = vmatpush1.msra.mxu0 %v2266
    %2295 = vmatprep.subr.mxu0 0.0
    %2296 = vmatpush1.msra.mxu0 %v2267
    %2297 = vmatprep.subr.mxu0 0.0
    %2298 = vmatpush1.msra.mxu0 %v2268
    %2299 = vmatprep.subr.mxu0 0.0
    %2300 = vmatpush1.msra.mxu0 %v2269
    %2301 = vmatprep.subr.mxu0 0.0
    %2302 = vmatpush1.msra.mxu0 %v2270
    %2303 = vmatprep.subr.mxu0 0.0
    %2304 = vmatpush1.msra.mxu0 %v2271
    %2305 = vmatprep.subr.mxu0 0.0
    %2306 = vmatpush1.msra.mxu0 %v2272
    %2307 = vmatprep.subr.mxu0 0.0
    %2308 = vmatpush1.msra.mxu0 %v2273
    %2309 = vmatprep.subr.mxu0 0.0
    %2310 = vmatpush1.msra.mxu0 %v2274
    %2311 = vmatprep.subr.mxu0 0.0
    %2312 = vmatpush1.msra.mxu0 %v2275
    %2313 = vmatprep.subr.mxu0 0.0
    %2314 = vmatpush1.msra.mxu0 %v2276
    %2315 = vmatprep.subr.mxu0 0.0
    %2316 = vmatpush1.msra.mxu0 %v2277
    %2317 = vmatprep.subr.mxu0 0.0
    %2318 = vmatpush1.msra.mxu0 0.0
    %2319 = vmatprep.subr.mxu0 0.0
    %2320 = vmatpush1.msra.mxu0 0.0
    %2321 = vmatprep.subr.mxu0 0.0
    %2322 = vmatpush1.msra.mxu0 0.0
    %2323 = vmatprep.subr.mxu0 0.0
    %2324 = vmatpush1.msra.mxu0 0.0
    %2325 = vmatprep.subr.mxu0 0.0
    %2326 = vmatpush1.msra.mxu0 0.0
    %2327 = vmatprep.subr.mxu0 0.0
    %2328 = vmatpush1.msra.mxu0 0.0
    %2329 = vmatprep.subr.mxu0 0.0
    %2330 = vmatpush1.msra.mxu0 0.0
    %2331 = vmatprep.subr.mxu0 0.0
    %2332 = vmatpush1.msra.mxu0 0.0
    %2333 = vmatprep.subr.mxu0 0.0
    %2334 = vmatpush1.msra.mxu0 0.0
    %2335 = vmatprep.subr.mxu0 0.0
    %2336 = vmatpush1.msra.mxu0 0.0
    %2337 = vmatprep.subr.mxu0 0.0
    %2338 = vmatpush1.msra.mxu0 0.0
    %2339 = vmatprep.subr.mxu0 0.0
    %2340 = vmatpush1.msra.mxu0 0.0
    %2341 = vmatprep.subr.mxu0 0.0
    %2342 = vmatpush1.msra.mxu0 0.0
    %2343 = vmatprep.subr.mxu0 0.0
    %2344 = vmatpush1.msra.mxu0 0.0
    %2345 = vmatprep.subr.mxu0 0.0
    %2346 = vmatpush1.msra.mxu0 0.0
    %2347 = vmatprep.subr.mxu0 0.0
    %2348 = vmatpush1.msra.mxu0 0.0
    %2349 = vmatprep.mubr.f32.mxu0 0.0
    %2350 = vmatmul.mubr.f32.gmra.mrb[0].mxu0 %v2230
    %v2351 = vpop.f32.mrb[0].mxu0
    %v2352 = vadd.f32 %v2283, %v2351
    %v2353 = vpop.f32.mrb[0].mxu0
    %2354 = vmatprep.mubr.f32.mxu0 0.0
    %2355 = vmatmul.mubr.f32.gmra.mrb[0].mxu0 %v2231
    %v2356 = vpop.f32.mrb[0].mxu0
    %v2357 = vadd.f32 %v2283, %v2356
    %v2358 = vpop.f32.mrb[0].mxu0
    %2359 = vmatprep.mubr.f32.mxu0 0.0
    %2360 = vmatmul.mubr.f32.gmra.mrb[0].mxu0 %v2232
    %v2361 = vpop.f32.mrb[0].mxu0
    %v2362 = vadd.f32 %v2283, %v2361
    %v2363 = vpop.f32.mrb[0].mxu0
    %2364 = vmatprep.mubr.f32.mxu0 0.0
    %2365 = vmatmul.mubr.f32.gmra.mrb[0].mxu0 %v2233
    %v2366 = vpop.f32.mrb[0].mxu0
    %v2367 = vadd.f32 %v2283, %v2366
    %v2368 = vpop.f32.mrb[0].mxu0
    %2369 = vmatprep.mubr.f32.mxu0 0.0
    %2370 = vmatmul.mubr.f32.gmra.mrb[0].mxu0 %v2234
    %v2371 = vpop.f32.mrb[0].mxu0
    %v2372 = vadd.f32 %v2283, %v2371
    %v2373 = vpop.f32.mrb[0].mxu0
    %2374 = vmatprep.mubr.f32.mxu0 0.0
    %2375 = vmatmul.mubr.f32.gmra.mrb[0].mxu0 %v2235
    %v2376 = vpop.f32.mrb[0].mxu0
    %v2377 = vadd.f32 %v2283, %v2376
    %v2378 = vpop.f32.mrb[0].mxu0
    %2379 = vmatprep.mubr.f32.mxu0 0.0
    %2380 = vmatmul.mubr.f32.gmra.mrb[0].mxu0 %v2236
    %v2381 = vpop.f32.mrb[0].mxu0
    %v2382 = vadd.f32 %v2283, %v2381
    %v2383 = vpop.f32.mrb[0].mxu0
    %2384 = vmatprep.mubr.f32.mxu0 0.0
    %2385 = vmatmul.mubr.f32.gmra.mrb[0].mxu0 %v2237
    %v2386 = vpop.f32.mrb[0].mxu0
    %v2387 = vadd.f32 %v2283, %v2386
    %v2388 = vpop.f32.mrb[0].mxu0
    %2389 = vmatprep.mubr.f32.mxu0 0.0
    %2390 = vmatmul.mubr.f32.gmra.mrb[0].mxu0 %v2238
    %v2391 = vpop.f32.mrb[0].mxu0
    %v2392 = vadd.f32 %v2283, %v2391
    %v2393 = vpop.f32.mrb[0].mxu0
    %2394 = vmatprep.mubr.f32.mxu0 0.0
    %2395 = vmatmul.mubr.f32.gmra.mrb[0].mxu0 %v2239
    %v2396 = vpop.f32.mrb[0].mxu0
    %v2397 = vadd.f32 %v2283, %v2396
    %v2398 = vpop.f32.mrb[0].mxu0
    %2399 = vmatprep.mubr.f32.mxu0 0.0
    %2400 = vmatmul.mubr.f32.gmra.mrb[0].mxu0 %v2240
    %v2401 = vpop.f32.mrb[0].mxu0
    %v2402 = vadd.f32 %v2283, %v2401
    %v2403 = vpop.f32.mrb[0].mxu0
    %2404 = vmatprep.mubr.f32.mxu0 0.0
    %2405 = vmatmul.mubr.f32.gmra.mrb[0].mxu0 %v2241
    %v2406 = vpop.f32.mrb[0].mxu0
    %v2407 = vadd.f32 %v2283, %v2406
    %v2408 = vpop.f32.mrb[0].mxu0
    %2409 = vmatprep.mubr.f32.mxu0 0.0
    %2410 = vmatmul.mubr.f32.gmra.mrb[0].mxu0 %v2242
    %v2411 = vpop.f32.mrb[0].mxu0
    %v2412 = vadd.f32 %v2283, %v2411
    %v2413 = vpop.f32.mrb[0].mxu0
    %2414 = vmatprep.mubr.f32.mxu0 0.0
    %2415 = vmatmul.mubr.f32.gmra.mrb[0].mxu0 %v2243
    %v2416 = vpop.f32.mrb[0].mxu0
    %v2417 = vadd.f32 %v2283, %v2416
    %v2418 = vpop.f32.mrb[0].mxu0
    %2419 = vmatprep.mubr.f32.mxu0 0.0
    %2420 = vmatmul.mubr.f32.gmra.mrb[0].mxu0 %v2244
    %v2421 = vpop.f32.mrb[0].mxu0
    %v2422 = vadd.f32 %v2283, %v2421
    %v2423 = vpop.f32.mrb[0].mxu0
    %2424 = vmatprep.mubr.f32.mxu0 0.0
    %2425 = vmatmul.mubr.f32.gmra.mrb[0].mxu0 %v2245
    %v2426 = vpop.f32.mrb[0].mxu0
    %v2427 = vadd.f32 %v2283, %v2426
    %v2428 = vpop.f32.mrb[0].mxu0
    %2429 = vmatprep.mubr.f32.mxu0 0.0
    %2430 = vmatmul.mubr.f32.gmra.mrb[0].mxu0 %v2246
    %v2431 = vpop.f32.mrb[0].mxu0
    %v2432 = vadd.f32 %v2283, %v2431
    %v2433 = vpop.f32.mrb[0].mxu0
    %2434 = vmatprep.mubr.f32.mxu0 0.0
    %2435 = vmatmul.mubr.f32.gmra.mrb[0].mxu0 %v2247
    %v2436 = vpop.f32.mrb[0].mxu0
    %v2437 = vadd.f32 %v2283, %v2436
    %v2438 = vpop.f32.mrb[0].mxu0
    %2439 = vmatprep.mubr.f32.mxu0 0.0
    %2440 = vmatmul.mubr.f32.gmra.mrb[0].mxu0 %v2248
    %v2441 = vpop.f32.mrb[0].mxu0
    %v2442 = vadd.f32 %v2283, %v2441
    %v2443 = vpop.f32.mrb[0].mxu0
    %2444 = vmatprep.mubr.f32.mxu0 0.0
    %2445 = vmatmul.mubr.f32.gmra.mrb[0].mxu0 %v2249
    %v2446 = vpop.f32.mrb[0].mxu0
    %v2447 = vadd.f32 %v2283, %v2446
    %v2448 = vpop.f32.mrb[0].mxu0
    %2449 = vmatprep.mubr.f32.mxu0 0.0
    %2450 = vmatmul.mubr.f32.gmra.mrb[0].mxu0 %v2250
    %v2451 = vpop.f32.mrb[0].mxu0
    %v2452 = vadd.f32 %v2283, %v2451
    %v2453 = vpop.f32.mrb[0].mxu0
    %2454 = vmatprep.mubr.f32.mxu0 0.0
    %2455 = vmatmul.mubr.f32.gmra.mrb[0].mxu0 %v2251
    %v2456 = vpop.f32.mrb[0].mxu0
    %v2457 = vadd.f32 %v2283, %v2456
    %v2458 = vpop.f32.mrb[0].mxu0
    %2459 = vmatprep.mubr.f32.mxu0 0.0
    %2460 = vmatmul.mubr.f32.gmra.mrb[0].mxu0 %v2252
    %v2461 = vpop.f32.mrb[0].mxu0
    %v2462 = vadd.f32 %v2283, %v2461
    %v2463 = vpop.f32.mrb[0].mxu0
    %2464 = vmatprep.mubr.f32.mxu0 0.0
    %2465 = vmatmul.mubr.f32.gmra.mrb[0].mxu0 %v2253
    %v2466 = vpop.f32.mrb[0].mxu0
    %v2467 = vadd.f32 %v2283, %v2466
    %v2468 = vpop.f32.mrb[0].mxu0
    %2469 = vmatprep.mubr.f32.mxu0 0.0
    %2470 = vmatmul.mubr.f32.gmra.mrb[0].mxu0 %v2254
    %v2471 = vpop.f32.mrb[0].mxu0
    %v2472 = vadd.f32 %v2283, %v2471
    %v2473 = vpop.f32.mrb[0].mxu0
    %2474 = vmatprep.mubr.f32.mxu0 0.0
    %2475 = vmatmul.mubr.f32.gmra.mrb[0].mxu0 %v2255
    %v2476 = vpop.f32.mrb[0].mxu0
    %v2477 = vadd.f32 %v2283, %v2476
    %v2478 = vpop.f32.mrb[0].mxu0
    %2479 = vmatprep.mubr.f32.mxu0 0.0
    %2480 = vmatmul.mubr.f32.gmra.mrb[0].mxu0 %v2256
    %v2481 = vpop.f32.mrb[0].mxu0
    %v2482 = vadd.f32 %v2283, %v2481
    %v2483 = vpop.f32.mrb[0].mxu0
    %2484 = vmatprep.mubr.f32.mxu0 0.0
    %2485 = vmatmul.mubr.f32.gmra.mrb[0].mxu0 %v2257
    %v2486 = vpop.f32.mrb[0].mxu0
    %v2487 = vadd.f32 %v2283, %v2486
    %v2488 = vpop.f32.mrb[0].mxu0
    %2489 = vmatprep.mubr.f32.mxu0 0.0
    %2490 = vmatmul.mubr.f32.gmra.mrb[0].mxu0 %v2258
    %v2491 = vpop.f32.mrb[0].mxu0
    %v2492 = vadd.f32 %v2283, %v2491
    %v2493 = vpop.f32.mrb[0].mxu0
    %2494 = vmatprep.mubr.f32.mxu0 0.0
    %2495 = vmatmul.mubr.f32.gmra.mrb[0].mxu0 %v2259
    %v2496 = vpop.f32.mrb[0].mxu0
    %v2497 = vadd.f32 %v2283, %v2496
    %v2498 = vpop.f32.mrb[0].mxu0
    %2499 = vmatprep.mubr.f32.mxu0 0.0
    %2500 = vmatmul.mubr.f32.gmra.mrb[0].mxu0 %v2260
    %v2501 = vpop.f32.mrb[0].mxu0
    %v2502 = vadd.f32 %v2283, %v2501
    %v2503 = vpop.f32.mrb[0].mxu0
    %2504 = vmatprep.mubr.f32.mxu0 0.0
    %2505 = vmatmul.mubr.f32.gmra.mrb[0].mxu0 %v2261
    %v2506 = vpop.f32.mrb[0].mxu0
    %v2507 = vadd.f32 %v2283, %v2506
    %v2508 = vpop.f32.mrb[0].mxu0
    %2509 = vdwg.mxu0
    %v2510 = vrsqrt.pop %v2352
    %v2511 = vmul.f32 %v2352, %v2510
    %vm2512 = vcmp.eq.f32.partialorder %v2352, inf
    %v2513 = vsel %vm2512, %v2352, %v2511
    %vm2514 = vcmp.eq.f32.partialorder %v2352, 0.0
    %v2515 = vand.u32 %v2352, 2147483648
    %v2516 = vsel %vm2514, %v2515, %v2513
    %v2517 = vrsqrt.pop %v2357
    %v2518 = vmul.f32 %v2357, %v2517
    %vm2519 = vcmp.eq.f32.partialorder %v2357, inf
    %v2520 = vsel %vm2519, %v2357, %v2518
    %vm2521 = vcmp.eq.f32.partialorder %v2357, 0.0
    %v2522 = vand.u32 %v2357, 2147483648
    %v2523 = vsel %vm2521, %v2522, %v2520
    %v2524 = vrsqrt.pop %v2362
    %v2525 = vmul.f32 %v2362, %v2524
    %vm2526 = vcmp.eq.f32.partialorder %v2362, inf
    %v2527 = vsel %vm2526, %v2362, %v2525
    %vm2528 = vcmp.eq.f32.partialorder %v2362, 0.0
    %v2529 = vand.u32 %v2362, 2147483648
    %v2530 = vsel %vm2528, %v2529, %v2527
    %v2531 = vrsqrt.pop %v2367
    %v2532 = vmul.f32 %v2367, %v2531
    %vm2533 = vcmp.eq.f32.partialorder %v2367, inf
    %v2534 = vsel %vm2533, %v2367, %v2532
    %vm2535 = vcmp.eq.f32.partialorder %v2367, 0.0
    %v2536 = vand.u32 %v2367, 2147483648
    %v2537 = vsel %vm2535, %v2536, %v2534
    %v2538 = vrsqrt.pop %v2372
    %v2539 = vmul.f32 %v2372, %v2538
    %vm2540 = vcmp.eq.f32.partialorder %v2372, inf
    %v2541 = vsel %vm2540, %v2372, %v2539
    %vm2542 = vcmp.eq.f32.partialorder %v2372, 0.0
    %v2543 = vand.u32 %v2372, 2147483648
    %v2544 = vsel %vm2542, %v2543, %v2541
    %v2545 = vrsqrt.pop %v2377
    %v2546 = vmul.f32 %v2377, %v2545
    %vm2547 = vcmp.eq.f32.partialorder %v2377, inf
    %v2548 = vsel %vm2547, %v2377, %v2546
    %vm2549 = vcmp.eq.f32.partialorder %v2377, 0.0
    %v2550 = vand.u32 %v2377, 2147483648
    %v2551 = vsel %vm2549, %v2550, %v2548
    %v2552 = vrsqrt.pop %v2382
    %v2553 = vmul.f32 %v2382, %v2552
    %vm2554 = vcmp.eq.f32.partialorder %v2382, inf
    %v2555 = vsel %vm2554, %v2382, %v2553
    %vm2556 = vcmp.eq.f32.partialorder %v2382, 0.0
    %v2557 = vand.u32 %v2382, 2147483648
    %v2558 = vsel %vm2556, %v2557, %v2555
    %v2559 = vrsqrt.pop %v2387
    %v2560 = vmul.f32 %v2387, %v2559
    %vm2561 = vcmp.eq.f32.partialorder %v2387, inf
    %v2562 = vsel %vm2561, %v2387, %v2560
    %vm2563 = vcmp.eq.f32.partialorder %v2387, 0.0
    %v2564 = vand.u32 %v2387, 2147483648
    %v2565 = vsel %vm2563, %v2564, %v2562
    %v2566 = vrsqrt.pop %v2392
    %v2567 = vmul.f32 %v2392, %v2566
    %vm2568 = vcmp.eq.f32.partialorder %v2392, inf
    %v2569 = vsel %vm2568, %v2392, %v2567
    %vm2570 = vcmp.eq.f32.partialorder %v2392, 0.0
    %v2571 = vand.u32 %v2392, 2147483648
    %v2572 = vsel %vm2570, %v2571, %v2569
    %v2573 = vrsqrt.pop %v2397
    %v2574 = vmul.f32 %v2397, %v2573
    %vm2575 = vcmp.eq.f32.partialorder %v2397, inf
    %v2576 = vsel %vm2575, %v2397, %v2574
    %vm2577 = vcmp.eq.f32.partialorder %v2397, 0.0
    %v2578 = vand.u32 %v2397, 2147483648
    %v2579 = vsel %vm2577, %v2578, %v2576
    %v2580 = vrsqrt.pop %v2402
    %v2581 = vmul.f32 %v2402, %v2580
    %vm2582 = vcmp.eq.f32.partialorder %v2402, inf
    %v2583 = vsel %vm2582, %v2402, %v2581
    %vm2584 = vcmp.eq.f32.partialorder %v2402, 0.0
    %v2585 = vand.u32 %v2402, 2147483648
    %v2586 = vsel %vm2584, %v2585, %v2583
    %v2587 = vrsqrt.pop %v2407
    %v2588 = vmul.f32 %v2407, %v2587
    %vm2589 = vcmp.eq.f32.partialorder %v2407, inf
    %v2590 = vsel %vm2589, %v2407, %v2588
    %vm2591 = vcmp.eq.f32.partialorder %v2407, 0.0
    %v2592 = vand.u32 %v2407, 2147483648
    %v2593 = vsel %vm2591, %v2592, %v2590
    %v2594 = vrsqrt.pop %v2412
    %v2595 = vmul.f32 %v2412, %v2594
    %vm2596 = vcmp.eq.f32.partialorder %v2412, inf
    %v2597 = vsel %vm2596, %v2412, %v2595
    %vm2598 = vcmp.eq.f32.partialorder %v2412, 0.0
    %v2599 = vand.u32 %v2412, 2147483648
    %v2600 = vsel %vm2598, %v2599, %v2597
    %v2601 = vrsqrt.pop %v2417
    %v2602 = vmul.f32 %v2417, %v2601
    %vm2603 = vcmp.eq.f32.partialorder %v2417, inf
    %v2604 = vsel %vm2603, %v2417, %v2602
    %vm2605 = vcmp.eq.f32.partialorder %v2417, 0.0
    %v2606 = vand.u32 %v2417, 2147483648
    %v2607 = vsel %vm2605, %v2606, %v2604
    %v2608 = vrsqrt.pop %v2422
    %v2609 = vmul.f32 %v2422, %v2608
    %vm2610 = vcmp.eq.f32.partialorder %v2422, inf
    %v2611 = vsel %vm2610, %v2422, %v2609
    %vm2612 = vcmp.eq.f32.partialorder %v2422, 0.0
    %v2613 = vand.u32 %v2422, 2147483648
    %v2614 = vsel %vm2612, %v2613, %v2611
    %v2615 = vrsqrt.pop %v2427
    %v2616 = vmul.f32 %v2427, %v2615
    %vm2617 = vcmp.eq.f32.partialorder %v2427, inf
    %v2618 = vsel %vm2617, %v2427, %v2616
    %vm2619 = vcmp.eq.f32.partialorder %v2427, 0.0
    %v2620 = vand.u32 %v2427, 2147483648
    %v2621 = vsel %vm2619, %v2620, %v2618
    %v2622 = vrsqrt.pop %v2432
    %v2623 = vmul.f32 %v2432, %v2622
    %vm2624 = vcmp.eq.f32.partialorder %v2432, inf
    %v2625 = vsel %vm2624, %v2432, %v2623
    %vm2626 = vcmp.eq.f32.partialorder %v2432, 0.0
    %v2627 = vand.u32 %v2432, 2147483648
    %v2628 = vsel %vm2626, %v2627, %v2625
    %v2629 = vrsqrt.pop %v2437
    %v2630 = vmul.f32 %v2437, %v2629
    %vm2631 = vcmp.eq.f32.partialorder %v2437, inf
    %v2632 = vsel %vm2631, %v2437, %v2630
    %vm2633 = vcmp.eq.f32.partialorder %v2437, 0.0
    %v2634 = vand.u32 %v2437, 2147483648
    %v2635 = vsel %vm2633, %v2634, %v2632
    %v2636 = vrsqrt.pop %v2442
    %v2637 = vmul.f32 %v2442, %v2636
    %vm2638 = vcmp.eq.f32.partialorder %v2442, inf
    %v2639 = vsel %vm2638, %v2442, %v2637
    %vm2640 = vcmp.eq.f32.partialorder %v2442, 0.0
    %v2641 = vand.u32 %v2442, 2147483648
    %v2642 = vsel %vm2640, %v2641, %v2639
    %v2643 = vrsqrt.pop %v2447
    %v2644 = vmul.f32 %v2447, %v2643
    %vm2645 = vcmp.eq.f32.partialorder %v2447, inf
    %v2646 = vsel %vm2645, %v2447, %v2644
    %vm2647 = vcmp.eq.f32.partialorder %v2447, 0.0
    %v2648 = vand.u32 %v2447, 2147483648
    %v2649 = vsel %vm2647, %v2648, %v2646
    %v2650 = vrsqrt.pop %v2452
    %v2651 = vmul.f32 %v2452, %v2650
    %vm2652 = vcmp.eq.f32.partialorder %v2452, inf
    %v2653 = vsel %vm2652, %v2452, %v2651
    %vm2654 = vcmp.eq.f32.partialorder %v2452, 0.0
    %v2655 = vand.u32 %v2452, 2147483648
    %v2656 = vsel %vm2654, %v2655, %v2653
    %v2657 = vrsqrt.pop %v2457
    %v2658 = vmul.f32 %v2457, %v2657
    %vm2659 = vcmp.eq.f32.partialorder %v2457, inf
    %v2660 = vsel %vm2659, %v2457, %v2658
    %vm2661 = vcmp.eq.f32.partialorder %v2457, 0.0
    %v2662 = vand.u32 %v2457, 2147483648
    %v2663 = vsel %vm2661, %v2662, %v2660
    %v2664 = vrsqrt.pop %v2462
    %v2665 = vmul.f32 %v2462, %v2664
    %vm2666 = vcmp.eq.f32.partialorder %v2462, inf
    %v2667 = vsel %vm2666, %v2462, %v2665
    %vm2668 = vcmp.eq.f32.partialorder %v2462, 0.0
    %v2669 = vand.u32 %v2462, 2147483648
    %v2670 = vsel %vm2668, %v2669, %v2667
    %v2671 = vrsqrt.pop %v2467
    %v2672 = vmul.f32 %v2467, %v2671
    %vm2673 = vcmp.eq.f32.partialorder %v2467, inf
    %v2674 = vsel %vm2673, %v2467, %v2672
    %vm2675 = vcmp.eq.f32.partialorder %v2467, 0.0
    %v2676 = vand.u32 %v2467, 2147483648
    %v2677 = vsel %vm2675, %v2676, %v2674
    %v2678 = vrsqrt.pop %v2472
    %v2679 = vmul.f32 %v2472, %v2678
    %vm2680 = vcmp.eq.f32.partialorder %v2472, inf
    %v2681 = vsel %vm2680, %v2472, %v2679
    %vm2682 = vcmp.eq.f32.partialorder %v2472, 0.0
    %v2683 = vand.u32 %v2472, 2147483648
    %v2684 = vsel %vm2682, %v2683, %v2681
    %v2685 = vrsqrt.pop %v2477
    %v2686 = vmul.f32 %v2477, %v2685
    %vm2687 = vcmp.eq.f32.partialorder %v2477, inf
    %v2688 = vsel %vm2687, %v2477, %v2686
    %vm2689 = vcmp.eq.f32.partialorder %v2477, 0.0
    %v2690 = vand.u32 %v2477, 2147483648
    %v2691 = vsel %vm2689, %v2690, %v2688
    %v2692 = vrsqrt.pop %v2482
    %v2693 = vmul.f32 %v2482, %v2692
    %vm2694 = vcmp.eq.f32.partialorder %v2482, inf
    %v2695 = vsel %vm2694, %v2482, %v2693
    %vm2696 = vcmp.eq.f32.partialorder %v2482, 0.0
    %v2697 = vand.u32 %v2482, 2147483648
    %v2698 = vsel %vm2696, %v2697, %v2695
    %v2699 = vrsqrt.pop %v2487
    %v2700 = vmul.f32 %v2487, %v2699
    %vm2701 = vcmp.eq.f32.partialorder %v2487, inf
    %v2702 = vsel %vm2701, %v2487, %v2700
    %vm2703 = vcmp.eq.f32.partialorder %v2487, 0.0
    %v2704 = vand.u32 %v2487, 2147483648
    %v2705 = vsel %vm2703, %v2704, %v2702
    %v2706 = vrsqrt.pop %v2492
    %v2707 = vmul.f32 %v2492, %v2706
    %vm2708 = vcmp.eq.f32.partialorder %v2492, inf
    %v2709 = vsel %vm2708, %v2492, %v2707
    %vm2710 = vcmp.eq.f32.partialorder %v2492, 0.0
    %v2711 = vand.u32 %v2492, 2147483648
    %v2712 = vsel %vm2710, %v2711, %v2709
    %v2713 = vrsqrt.pop %v2497
    %v2714 = vmul.f32 %v2497, %v2713
    %vm2715 = vcmp.eq.f32.partialorder %v2497, inf
    %v2716 = vsel %vm2715, %v2497, %v2714
    %vm2717 = vcmp.eq.f32.partialorder %v2497, 0.0
    %v2718 = vand.u32 %v2497, 2147483648
    %v2719 = vsel %vm2717, %v2718, %v2716
    %v2720 = vrsqrt.pop %v2502
    %v2721 = vmul.f32 %v2502, %v2720
    %vm2722 = vcmp.eq.f32.partialorder %v2502, inf
    %v2723 = vsel %vm2722, %v2502, %v2721
    %vm2724 = vcmp.eq.f32.partialorder %v2502, 0.0
    %v2725 = vand.u32 %v2502, 2147483648
    %v2726 = vsel %vm2724, %v2725, %v2723
    %v2727 = vrsqrt.pop %v2507
    %v2728 = vmul.f32 %v2507, %v2727
    %vm2729 = vcmp.eq.f32.partialorder %v2507, inf
    %v2730 = vsel %vm2729, %v2507, %v2728
    %vm2731 = vcmp.eq.f32.partialorder %v2507, 0.0
    %v2732 = vand.u32 %v2507, 2147483648
    %v2733 = vsel %vm2731, %v2732, %v2730
    %v2734 = vld [vmem:[#allocation17] sm:$0xff]
    %v2735 = vld [vmem:[#allocation17 + $0x8] sm:$0xff]
    %v2736 = vld [vmem:[#allocation17 + $0x10] sm:$0xff]
    %v2737 = vld [vmem:[#allocation17 + $0x18] sm:$0xff]
    %v2738 = vld [vmem:[#allocation17 + $0x20] sm:$0xff]
    %v2739 = vld [vmem:[#allocation17 + $0x28] sm:$0xff]
    %v2740 = vld [vmem:[#allocation17 + $0x30] sm:$0xff]
    %v2741 = vld [vmem:[#allocation17 + $0x38] sm:$0xff]
    %v2742 = vld [vmem:[#allocation17 + $0x40] sm:$0xff]
    %v2743 = vld [vmem:[#allocation17 + $0x48] sm:$0xff]
    %v2744 = vld [vmem:[#allocation17 + $0x50] sm:$0xff]
    %v2745 = vld [vmem:[#allocation17 + $0x58] sm:$0xff]
    %v2746 = vld [vmem:[#allocation17 + $0x60] sm:$0xff]
    %v2747 = vld [vmem:[#allocation17 + $0x68] sm:$0xff]
    %v2748 = vld [vmem:[#allocation17 + $0x70] sm:$0xff]
    %v2749 = vld [vmem:[#allocation17 + $0x78] sm:$0xff]
    %v2750 = vld [vmem:[#allocation17 + $0x80] sm:$0xff]
    %v2751 = vld [vmem:[#allocation17 + $0x88] sm:$0xff]
    %v2752 = vld [vmem:[#allocation17 + $0x90] sm:$0xff]
    %v2753 = vld [vmem:[#allocation17 + $0x98] sm:$0xff]
    %v2754 = vld [vmem:[#allocation17 + $0xa0] sm:$0xff]
    %v2755 = vld [vmem:[#allocation17 + $0xa8] sm:$0xff]
    %v2756 = vld [vmem:[#allocation17 + $0xb0] sm:$0xff]
    %v2757 = vld [vmem:[#allocation17 + $0xb8] sm:$0xff]
    %v2758 = vld [vmem:[#allocation17 + $0xc0] sm:$0xff]
    %v2759 = vld [vmem:[#allocation17 + $0xc8] sm:$0xff]
    %v2760 = vld [vmem:[#allocation17 + $0xd0] sm:$0xff]
    %v2761 = vld [vmem:[#allocation17 + $0xd8] sm:$0xff]
    %v2762 = vld [vmem:[#allocation17 + $0xe0] sm:$0xff]
    %v2763 = vld [vmem:[#allocation17 + $0xe8] sm:$0xff]
    %v2764 = vld [vmem:[#allocation17 + $0xf0] sm:$0xff]
    %v2765 = vld [vmem:[#allocation17 + $0xf8] sm:$0xff]
    %v2766 = vmul.f32 %v2516, %v2734
    %v2767 = vmul.f32 %v2523, %v2735
    %v2768 = vmul.f32 %v2530, %v2736
    %v2769 = vmul.f32 %v2537, %v2737
    %v2770 = vmul.f32 %v2544, %v2738
    %v2771 = vmul.f32 %v2551, %v2739
    %v2772 = vmul.f32 %v2558, %v2740
    %v2773 = vmul.f32 %v2565, %v2741
    %v2774 = vmul.f32 %v2572, %v2742
    %v2775 = vmul.f32 %v2579, %v2743
    %v2776 = vmul.f32 %v2586, %v2744
    %v2777 = vmul.f32 %v2593, %v2745
    %v2778 = vmul.f32 %v2600, %v2746
    %v2779 = vmul.f32 %v2607, %v2747
    %v2780 = vmul.f32 %v2614, %v2748
    %v2781 = vmul.f32 %v2621, %v2749
    %v2782 = vmul.f32 %v2628, %v2750
    %v2783 = vmul.f32 %v2635, %v2751
    %v2784 = vmul.f32 %v2642, %v2752
    %v2785 = vmul.f32 %v2649, %v2753
    %v2786 = vmul.f32 %v2656, %v2754
    %v2787 = vmul.f32 %v2663, %v2755
    %v2788 = vmul.f32 %v2670, %v2756
    %v2789 = vmul.f32 %v2677, %v2757
    %v2790 = vmul.f32 %v2684, %v2758
    %v2791 = vmul.f32 %v2691, %v2759
    %v2792 = vmul.f32 %v2698, %v2760
    %v2793 = vmul.f32 %v2705, %v2761
    %v2794 = vmul.f32 %v2712, %v2762
    %v2795 = vmul.f32 %v2719, %v2763
    %v2796 = vmul.f32 %v2726, %v2764
    %v2797 = vmul.f32 %v2733, %v2765
    %v2798 = vadd.f32 %v2072, %v2766
    %v2799 = vadd.f32 %v2077, %v2767
    %v2800 = vadd.f32 %v2082, %v2768
    %v2801 = vadd.f32 %v2087, %v2769
    %v2802 = vadd.f32 %v2092, %v2770
    %v2803 = vadd.f32 %v2097, %v2771
    %v2804 = vadd.f32 %v2102, %v2772
    %v2805 = vadd.f32 %v2107, %v2773
    %v2806 = vadd.f32 %v2112, %v2774
    %v2807 = vadd.f32 %v2117, %v2775
    %v2808 = vadd.f32 %v2122, %v2776
    %v2809 = vadd.f32 %v2127, %v2777
    %v2810 = vadd.f32 %v2132, %v2778
    %v2811 = vadd.f32 %v2137, %v2779
    %v2812 = vadd.f32 %v2142, %v2780
    %v2813 = vadd.f32 %v2147, %v2781
    %v2814 = vadd.f32 %v2152, %v2782
    %v2815 = vadd.f32 %v2157, %v2783
    %v2816 = vadd.f32 %v2162, %v2784
    %v2817 = vadd.f32 %v2167, %v2785
    %v2818 = vadd.f32 %v2172, %v2786
    %v2819 = vadd.f32 %v2177, %v2787
    %v2820 = vadd.f32 %v2182, %v2788
    %v2821 = vadd.f32 %v2187, %v2789
    %v2822 = vadd.f32 %v2192, %v2790
    %v2823 = vadd.f32 %v2197, %v2791
    %v2824 = vadd.f32 %v2202, %v2792
    %v2825 = vadd.f32 %v2207, %v2793
    %v2826 = vadd.f32 %v2212, %v2794
    %v2827 = vadd.f32 %v2217, %v2795
    %v2828 = vadd.f32 %v2222, %v2796
    %v2829 = vadd.f32 %v2227, %v2797
    %2830 = vst [vmem:[#allocation19] sm:$0xff] %v2798
    %2831 = vst [vmem:[#allocation19 + $0x8] sm:$0xff] %v2799
    %2832 = vst [vmem:[#allocation19 + $0x10] sm:$0xff] %v2800
    %2833 = vst [vmem:[#allocation19 + $0x18] sm:$0xff] %v2801
    %2834 = vst [vmem:[#allocation19 + $0x20] sm:$0xff] %v2802
    %2835 = vst [vmem:[#allocation19 + $0x28] sm:$0xff] %v2803
    %2836 = vst [vmem:[#allocation19 + $0x30] sm:$0xff] %v2804
    %2837 = vst [vmem:[#allocation19 + $0x38] sm:$0xff] %v2805
    %2838 = vst [vmem:[#allocation19 + $0x40] sm:$0xff] %v2806
    %2839 = vst [vmem:[#allocation19 + $0x48] sm:$0xff] %v2807
    %2840 = vst [vmem:[#allocation19 + $0x50] sm:$0xff] %v2808
    %2841 = vst [vmem:[#allocation19 + $0x58] sm:$0xff] %v2809
    %2842 = vst [vmem:[#allocation19 + $0x60] sm:$0xff] %v2810
    %2843 = vst [vmem:[#allocation19 + $0x68] sm:$0xff] %v2811
    %2844 = vst [vmem:[#allocation19 + $0x70] sm:$0xff] %v2812
    %2845 = vst [vmem:[#allocation19 + $0x78] sm:$0xff] %v2813
    %2846 = vst [vmem:[#allocation19 + $0x80] sm:$0xff] %v2814
    %2847 = vst [vmem:[#allocation19 + $0x88] sm:$0xff] %v2815
    %2848 = vst [vmem:[#allocation19 + $0x90] sm:$0xff] %v2816
    %2849 = vst [vmem:[#allocation19 + $0x98] sm:$0xff] %v2817
    %2850 = vst [vmem:[#allocation19 + $0xa0] sm:$0xff] %v2818
    %2851 = vst [vmem:[#allocation19 + $0xa8] sm:$0xff] %v2819
    %2852 = vst [vmem:[#allocation19 + $0xb0] sm:$0xff] %v2820
    %2853 = vst [vmem:[#allocation19 + $0xb8] sm:$0xff] %v2821
    %2854 = vst [vmem:[#allocation19 + $0xc0] sm:$0xff] %v2822
    %2855 = vst [vmem:[#allocation19 + $0xc8] sm:$0xff] %v2823
    %2856 = vst [vmem:[#allocation19 + $0xd0] sm:$0xff] %v2824
    %2857 = vst [vmem:[#allocation19 + $0xd8] sm:$0xff] %v2825
    %2858 = vst [vmem:[#allocation19 + $0xe0] sm:$0xff] %v2826
    %2859 = vst [vmem:[#allocation19 + $0xe8] sm:$0xff] %v2827
    %2860 = vst [vmem:[#allocation19 + $0xf0] sm:$0xff] %v2828
    %2861 = vst [vmem:[#allocation19 + $0xf8] sm:$0xff] %v2829
    // Predicated region
    $region106: #{tpu_custom_call.1} parent=1 // pred_check
      _
    $region107: #{tpu_custom_call.1} parent=1 // pred_check_branch
      %2863 = sbr.rel (0) target = $region109
    $region108: #{tpu_custom_call.1} parent=1 // pred_region
      %s2865 = ssub.s32 4096, 4096
      %2866 = vsyncadd [#allocation4], %s2865
      %s2867 = sshll.u32 [#allocation19], 4
      %s2868 = int_to_ptr.vmem [resolvable:$true] %s2867
      %2873 = dma.vmem_to_hbm [thread:$0]  %s2868, 4096, %s16, [#allocation4], 128, 128, 8
    $region109: #{tpu_custom_call.1} parent=1 // pred_fallthru
      _
    // Predicated region
    $region110: #{tpu_custom_call.1} parent=1 // pred_check
      _
    $region111: #{tpu_custom_call.1} parent=1 // pred_check_branch
      %2875 = sbr.rel (0) target = $region113
    $region112: #{tpu_custom_call.1} parent=1 // pred_region
      %2876 = dma.done [#allocation4], 4096
    $region113: #{tpu_custom_call.1} parent=1 // pred_fallthru
      _
    %2877 = vsyncpa [#allocation3], 1
    %2878 = vsyncpa [#allocation6], 1
    %2879 = vsyncpa [#allocation9], 1
    %2880 = vsyncpa [#allocation12], 1
    %2881 = vsyncpa [#allocation15], 1
    %2882 = vsyncpa [#allocation18], 1
    %2883 = vsyncpa [#allocation4], 1

</llo_original>
